<compile_context>
chip_gen: v5e
topology: v5e:2x2
jax: 0.10.0
libtpu: 0.0.40
codegen_flags: <defaults>
</compile_context>

<pallas_src>
import functools

import numpy as np

import jax
import jax.numpy as jnp
from jax import lax
from jax.experimental import pallas as pl
from jax.experimental.pallas import tpu as pltpu


# ---------------------------------------------------------------------------
# Fused Pallas kernel: whole LeNet forward for G images per grid step.
#
# Per-image activation layouts:
#   conv1 out  a1 : (28, 168)  row = i,      lane = 6*j  + c    (c in 0..5)
#   pool1 out  p1 : (14, 162)  row = pi,     lane = 12*pj + c
#   conv2 out  a2 : (10, 160)  row = qi,     lane = 16*qj + co  (co in 0..15)
#   pool2 out  p2 : (9, 144)   row = 2*ri,   lane = 32*rj + co
#   fc outputs    : (G, 128) stacked, padded to an (8, 128) output tile
# ---------------------------------------------------------------------------
def _lenet_kernel(x_ref, sel_ref, w1_ref, b1_ref, w2_ref, b2_ref,
                  wf1_ref, bf1_ref, wf2_ref, bf2_ref, wf3_ref, bf3_ref,
                  out_ref, *, G):
    f32 = jnp.float32
    sel = sel_ref[...]                                   # (14, 27) 0/1 matrix

    y_rows = []
    for g in range(G):                                   # unrolled, independent
        x = x_ref[g]                                     # (32, 32) image plane

        # conv1 (1->6, 5x5) + bias + ReLU: 5 banded matmuls over kernel rows
        acc1 = jnp.zeros((28, 168), f32)
        for di in range(5):
            acc1 = acc1 + jnp.dot(x[di:di + 28, :], w1_ref[di],
                                  preferred_element_type=f32)
        a1 = jnp.maximum(acc1 + b1_ref[...], 0.0)        # (28, 168)

        # 2x2 max pool #1: row max, lane max, keep even rows via host matrix
        t = jnp.maximum(a1[0:27, :], a1[1:28, :])        # rows:  max(i, i+1)
        t = jnp.maximum(t[:, 0:162], t[:, 6:168])        # lanes: max(j, j+1)
        p1 = jnp.dot(sel, t, preferred_element_type=f32)  # (14, 162)

        # conv2 (6->16, 5x5) + bias + ReLU: 5 banded matmuls
        acc2 = jnp.zeros((10, 160), f32)
        for di in range(5):
            acc2 = acc2 + jnp.dot(p1[di:di + 10, :], w2_ref[di],
                                  preferred_element_type=f32)
        a2 = jnp.maximum(acc2 + b2_ref[...], 0.0)        # (10, 160)

        # 2x2 max pool #2 (valid features at rows {0,2,4,6,8}, lane 32*rj+co)
        u = jnp.maximum(a2[0:9, :], a2[1:10, :])
        p2 = jnp.maximum(u[:, 0:144], u[:, 16:160])      # (9, 144)

        # fc1 + ReLU (per image, one matmul per feature-map row)
        yg = bf1_ref[...]                                # (1, 128)
        for ri in range(5):
            yg = yg + jnp.dot(p2[2 * ri:2 * ri + 1, :], wf1_ref[ri],
                              preferred_element_type=f32)
        y_rows.append(jnp.maximum(yg, 0.0))              # (1, 128)

    # Stack the G fc1 outputs into an (8, 128) tile (rows >= G stay zero).
    row_id = lax.broadcasted_iota(jnp.int32, (8, 128), 0)
    y = jnp.zeros((8, 128), f32)
    for g in range(G):
        y = jnp.where(row_id == g, jnp.broadcast_to(y_rows[g], (8, 128)), y)

    # fc2 + ReLU, fc3 — batched over the stacked rows (dense M=8 matmuls).
    y = jnp.maximum(jnp.dot(y, wf2_ref[...], preferred_element_type=f32)
                    + bf2_ref[...], 0.0)
    y = jnp.dot(y, wf3_ref[...], preferred_element_type=f32) + bf3_ref[...]

    # Dense (8, 128) output tile; row g holds image g's logits in cols 0..9.
    out_ref[...] = y.astype(out_ref.dtype)


# ---------------------------------------------------------------------------
# Wrapper
# ---------------------------------------------------------------------------
def net_forward(x_nchw, kp, images_per_step=None):
    """Replicates Net.forward.  x_nchw: (B, 1, 32, 32) float32 -> (B, 10).

    images_per_step: images processed per grid step (<= 8).  Default packs the
    whole (small) batch into one step, which is optimal for single-TC chips
    (v5e/v6e); on v7x pass a smaller value to keep >=2 grid steps so the batch
    axis shards across both TensorCores.
    """
    B = x_nchw.shape[0]
    assert x_nchw.shape[1:] == (1, 32, 32)
    G = images_per_step if images_per_step is not None else min(B, 8)
    assert 1 <= G <= 8
    steps = -(-B // G)
    Bp = steps * G

    x = x_nchw.reshape(B, 32, 32).astype(jnp.float32)
    if Bp != B:
        x = jnp.concatenate(
            [x, jnp.zeros((Bp - B, 32, 32), jnp.float32)], axis=0)

    kernel = functools.partial(_lenet_kernel, G=G)

    out = pl.pallas_call(
        kernel,
        out_shape=jax.ShapeDtypeStruct((steps * 8, 128), jnp.float32),
        grid_spec=pltpu.PrefetchScalarGridSpec(
            num_scalar_prefetch=0,
            grid=(steps,),
            in_specs=[
                pl.BlockSpec((G, 32, 32), lambda s: (s, 0, 0)),     # images
                pl.BlockSpec((14, 27), lambda s: (0, 0)),           # pool1 sel
                pl.BlockSpec((5, 32, 168), lambda s: (0, 0, 0)),    # conv1 banded
                pl.BlockSpec((1, 168), lambda s: (0, 0)),           # conv1 bias
                pl.BlockSpec((5, 162, 160), lambda s: (0, 0, 0)),   # conv2 banded
                pl.BlockSpec((1, 160), lambda s: (0, 0)),           # conv2 bias
                pl.BlockSpec((5, 144, 128), lambda s: (0, 0, 0)),   # fc1 (per row)
                pl.BlockSpec((1, 128), lambda s: (0, 0)),           # fc1 bias
                pl.BlockSpec((128, 128), lambda s: (0, 0)),         # fc2
                pl.BlockSpec((1, 128), lambda s: (0, 0)),           # fc2 bias
                pl.BlockSpec((128, 128), lambda s: (0, 0)),         # fc3
                pl.BlockSpec((1, 128), lambda s: (0, 0)),           # fc3 bias
            ],
            out_specs=pl.BlockSpec((8, 128), lambda s: (s, 0)),
        ),
        compiler_params=pltpu.CompilerParams(
            dimension_semantics=("parallel",)),
    )(x, kp["sel"], kp["w1b"], kp["b1"], kp["w2b"], kp["b2"],
      kp["wf1"], kp["bf1"], kp["wf2"], kp["bf2"], kp["wf3"], kp["bf3"])

    logits = out.reshape(steps, 8, 128)[:, :G, :10].reshape(Bp, 10)
    return logits[:B]


# ---------------------------------------------------------------------------
# One-time host-side weight re-layout (outside jit): PyTorch layout -> banded,
# lane-padded matrices consumed by the fused kernel.
# ---------------------------------------------------------------------------
def prepare_kernel_params(p):
    c1w = np.asarray(p["conv1_w"], np.float32)   # (6, 1, 5, 5)
    c1b = np.asarray(p["conv1_b"], np.float32)
    c2w = np.asarray(p["conv2_w"], np.float32)   # (16, 6, 5, 5)
    c2b = np.asarray(p["conv2_b"], np.float32)
    f1w = np.asarray(p["fc1_w"], np.float32)     # (120, 400)
    f1b = np.asarray(p["fc1_b"], np.float32)
    f2w = np.asarray(p["fc2_w"], np.float32)     # (84, 120)
    f2b = np.asarray(p["fc2_b"], np.float32)
    f3w = np.asarray(p["fc3_w"], np.float32)     # (10, 84)
    f3b = np.asarray(p["fc3_b"], np.float32)

    # conv1 banded matrices: w1b[di, j+dj, 6*j + c] = conv1_w[c, 0, di, dj]
    w1b = np.zeros((5, 32, 168), np.float32)
    for di in range(5):
        for dj in range(5):
            for j in range(28):
                w1b[di, j + dj, 6 * j:6 * j + 6] = c1w[:, 0, di, dj]
    b1 = np.tile(c1b, 28).reshape(1, 168)

    # conv2 banded matrices on the pooled map (input lane = 12*pj + cin):
    # w2b[di, 12*(qj+dj)+cin, 16*qj+co] = conv2_w[co, cin, di, dj]
    w2b = np.zeros((5, 162, 160), np.float32)
    for di in range(5):
        for dj in range(5):
            for qj in range(10):
                r0 = 12 * (qj + dj)
                w2b[di, r0:r0 + 6, 16 * qj:16 * qj + 16] = c2w[:, :, di, dj].T
    b2 = np.tile(c2b, 10).reshape(1, 160)

    # fc1, one matrix per feature-map row ri (input lane = 32*rj + co),
    # output padded 120 -> 128.  PyTorch flatten order is (C=16, H=5, W=5).
    f1w_r = f1w.reshape(120, 16, 5, 5)           # [n, co, ri, rj]
    wf1 = np.zeros((5, 144, 128), np.float32)
    for ri in range(5):
        for rj in range(5):
            wf1[ri, 32 * rj:32 * rj + 16, :120] = f1w_r[:, :, ri, rj].T
    bf1 = np.zeros((1, 128), np.float32)
    bf1[0, :120] = f1b

    wf2 = np.zeros((128, 128), np.float32)
    wf2[:120, :84] = f2w.T
    bf2 = np.zeros((1, 128), np.float32)
    bf2[0, :84] = f2b

    wf3 = np.zeros((128, 128), np.float32)
    wf3[:84, :10] = f3w.T
    bf3 = np.zeros((1, 128), np.float32)
    bf3[0, :10] = f3b

    # even-row selection for pool #1: sel[pi, 2*pi] = 1
    sel = np.zeros((14, 27), np.float32)
    sel[np.arange(14), 2 * np.arange(14)] = 1.0

    raw = dict(sel=sel, w1b=w1b, b1=b1, w2b=w2b, b2=b2,
               wf1=wf1, bf1=bf1, wf2=wf2, bf2=bf2, wf3=wf3, bf3=bf3)
    return {k: jnp.asarray(v) for k, v in raw.items()}


# ---------------------------------------------------------------------------
# Deterministic synthetic parameters (PyTorch-default-like uniform init) and a
# plain-JAX reference used to validate the fused kernel.
# ---------------------------------------------------------------------------
def init_params(key):
    ks = jax.random.split(key, 10)

    def u(k, shape, fan_in):
        bound = 1.0 / (fan_in ** 0.5)
        return jax.random.uniform(k, shape, jnp.float32, -bound, bound)

    return dict(
        conv1_w=u(ks[0], (6, 1, 5, 5), 1 * 5 * 5),
        conv1_b=u(ks[1], (6,), 1 * 5 * 5),
        conv2_w=u(ks[2], (16, 6, 5, 5), 6 * 5 * 5),
        conv2_b=u(ks[3], (16,), 6 * 5 * 5),
        fc1_w=u(ks[4], (120, 400), 400),
        fc1_b=u(ks[5], (120,), 400),
        fc2_w=u(ks[6], (84, 120), 120),
        fc2_b=u(ks[7], (84,), 120),
        fc3_w=u(ks[8], (10, 84), 84),
        fc3_b=u(ks[9], (10,), 84),
    )


def reference_forward(x_nchw, p):
    dn = ("NCHW", "OIHW", "NCHW")
    hp = lax.Precision.HIGHEST
    y = lax.conv_general_dilated(x_nchw, p["conv1_w"], (1, 1), "VALID",
                                 dimension_numbers=dn, precision=hp)
    y = jnp.maximum(y + p["conv1_b"].reshape(1, 6, 1, 1), 0.0)
    y = lax.reduce_window(y, -jnp.inf, lax.max, (1, 1, 2, 2), (1, 1, 2, 2), "VALID")
    y = lax.conv_general_dilated(y, p["conv2_w"], (1, 1), "VALID",
                                 dimension_numbers=dn, precision=hp)
    y = jnp.maximum(y + p["conv2_b"].reshape(1, 16, 1, 1), 0.0)
    y = lax.reduce_window(y, -jnp.inf, lax.max, (1, 1, 2, 2), (1, 1, 2, 2), "VALID")
    y = y.reshape(y.shape[0], -1)
    y = jnp.maximum(jnp.dot(y, p["fc1_w"].T, precision=hp) + p["fc1_b"], 0.0)
    y = jnp.maximum(jnp.dot(y, p["fc2_w"].T, precision=hp) + p["fc2_b"], 0.0)
    return jnp.dot(y, p["fc3_w"].T, precision=hp) + p["fc3_b"]


if __name__ == "__main__":
    key = jax.random.PRNGKey(0)
    pkey, xkey = jax.random.split(key)
    params = init_params(pkey)
    kparams = prepare_kernel_params(params)   # one-time weight re-layout

    # Net's forward implies 32x32 single-channel input (16*5*5 flatten). batch=2.
    x = jax.random.normal(xkey, (2, 1, 32, 32), jnp.float32)

    out = jax.block_until_ready(jax.jit(net_forward)(x, kparams))
    assert out.shape == (2, 10) and out.dtype == jnp.float32

    ref = jax.block_until_ready(jax.jit(reference_forward)(x, params))
    np.testing.assert_allclose(np.asarray(out), np.asarray(ref),
                               rtol=1e-2, atol=2e-3)

    print("KERNEL_OK")
</pallas_src>

<mosaic_0001>
module attributes {stable_mosaic.version = 11 : i64} {
  func.func @_lenet_kernel(%arg0: i32, %arg1: memref<2x32x32xf32, #tpu.memory_space<vmem>>, %arg2: memref<14x27xf32, #tpu.memory_space<vmem>>, %arg3: memref<5x32x168xf32, #tpu.memory_space<vmem>>, %arg4: memref<1x168xf32, #tpu.memory_space<vmem>>, %arg5: memref<5x162x160xf32, #tpu.memory_space<vmem>>, %arg6: memref<1x160xf32, #tpu.memory_space<vmem>>, %arg7: memref<5x144x128xf32, #tpu.memory_space<vmem>>, %arg8: memref<1x128xf32, #tpu.memory_space<vmem>>, %arg9: memref<128x128xf32, #tpu.memory_space<vmem>>, %arg10: memref<1x128xf32, #tpu.memory_space<vmem>>, %arg11: memref<128x128xf32, #tpu.memory_space<vmem>>, %arg12: memref<1x128xf32, #tpu.memory_space<vmem>>, %arg13: memref<8x128xf32, #tpu.memory_space<vmem>>) attributes {dimension_semantics = [#tpu.dimension_semantics<parallel>], iteration_bounds = array<i64: 1>, scalar_prefetch = 0 : i64, scratch_operands = 0 : i64, tpu.core_type = #tpu.core_type<tc>, window_params = [{transform_indices = @transform_0, window_bounds = array<i64: 2, 32, 32>}, {pipeline_mode = #tpu.pipeline_mode<synchronous>, transform_indices = @transform_1, window_bounds = array<i64: 14, 27>}, {pipeline_mode = #tpu.pipeline_mode<synchronous>, transform_indices = @transform_2, window_bounds = array<i64: 5, 32, 168>}, {pipeline_mode = #tpu.pipeline_mode<synchronous>, transform_indices = @transform_3, window_bounds = array<i64: 1, 168>}, {pipeline_mode = #tpu.pipeline_mode<synchronous>, transform_indices = @transform_4, window_bounds = array<i64: 5, 162, 160>}, {pipeline_mode = #tpu.pipeline_mode<synchronous>, transform_indices = @transform_5, window_bounds = array<i64: 1, 160>}, {pipeline_mode = #tpu.pipeline_mode<synchronous>, transform_indices = @transform_6, window_bounds = array<i64: 5, 144, 128>}, {pipeline_mode = #tpu.pipeline_mode<synchronous>, transform_indices = @transform_7, window_bounds = array<i64: 1, 128>}, {pipeline_mode = #tpu.pipeline_mode<synchronous>, transform_indices = @transform_8, window_bounds = array<i64: 128, 128>}, {pipeline_mode = #tpu.pipeline_mode<synchronous>, transform_indices = @transform_9, window_bounds = array<i64: 1, 128>}, {pipeline_mode = #tpu.pipeline_mode<synchronous>, transform_indices = @transform_10, window_bounds = array<i64: 128, 128>}, {pipeline_mode = #tpu.pipeline_mode<synchronous>, transform_indices = @transform_11, window_bounds = array<i64: 1, 128>}, {transform_indices = @transform_12, window_bounds = array<i64: 8, 128>}]} {
    %c0 = arith.constant 0 : index
    %c0_0 = arith.constant 0 : index
    %0 = vector.load %arg2[%c0, %c0_0] : memref<14x27xf32, #tpu.memory_space<vmem>>, vector<14x27xf32>
    %c0_1 = arith.constant 0 : index
    %c0_2 = arith.constant 0 : index
    %c0_3 = arith.constant 0 : index
    %1 = vector.load %arg1[%c0_1, %c0_2, %c0_3] : memref<2x32x32xf32, #tpu.memory_space<vmem>>, vector<1x32x32xf32>
    %2 = vector.shape_cast %1 : vector<1x32x32xf32> to vector<32x32xf32>
    %cst = arith.constant 0.000000e+00 : f32
    %3 = vector.broadcast %cst : f32 to vector<28x168xf32>
    %4 = vector.extract_strided_slice %2 {offsets = [0, 0], sizes = [28, 32], strides = [1, 1]} : vector<32x32xf32> to vector<28x32xf32>
    %c0_4 = arith.constant 0 : index
    %c0_5 = arith.constant 0 : index
    %c0_6 = arith.constant 0 : index
    %5 = vector.load %arg3[%c0_4, %c0_5, %c0_6] : memref<5x32x168xf32, #tpu.memory_space<vmem>>, vector<1x32x168xf32>
    %6 = vector.shape_cast %5 : vector<1x32x168xf32> to vector<32x168xf32>
    %cst_7 = arith.constant dense<0.000000e+00> : vector<28x168xf32>
    %7 = tpu.matmul %4, %6, %cst_7 {dimension_numbers = #tpu.dot_dimension_numbers<[1], [0], [0], [1], [0, 0, 1, 1], [], []>} : vector<28x32xf32>, vector<32x168xf32>, vector<28x168xf32> -> vector<28x168xf32>
    %8 = arith.addf %3, %7 : vector<28x168xf32>
    %9 = vector.extract_strided_slice %2 {offsets = [1, 0], sizes = [28, 32], strides = [1, 1]} : vector<32x32xf32> to vector<28x32xf32>
    %c1 = arith.constant 1 : index
    %c0_8 = arith.constant 0 : index
    %c0_9 = arith.constant 0 : index
    %10 = vector.load %arg3[%c1, %c0_8, %c0_9] : memref<5x32x168xf32, #tpu.memory_space<vmem>>, vector<1x32x168xf32>
    %11 = vector.shape_cast %10 : vector<1x32x168xf32> to vector<32x168xf32>
    %cst_10 = arith.constant dense<0.000000e+00> : vector<28x168xf32>
    %12 = tpu.matmul %9, %11, %cst_10 {dimension_numbers = #tpu.dot_dimension_numbers<[1], [0], [0], [1], [0, 0, 1, 1], [], []>} : vector<28x32xf32>, vector<32x168xf32>, vector<28x168xf32> -> vector<28x168xf32>
    %13 = arith.addf %8, %12 : vector<28x168xf32>
    %14 = vector.extract_strided_slice %2 {offsets = [2, 0], sizes = [28, 32], strides = [1, 1]} : vector<32x32xf32> to vector<28x32xf32>
    %c2 = arith.constant 2 : index
    %c0_11 = arith.constant 0 : index
    %c0_12 = arith.constant 0 : index
    %15 = vector.load %arg3[%c2, %c0_11, %c0_12] : memref<5x32x168xf32, #tpu.memory_space<vmem>>, vector<1x32x168xf32>
    %16 = vector.shape_cast %15 : vector<1x32x168xf32> to vector<32x168xf32>
    %cst_13 = arith.constant dense<0.000000e+00> : vector<28x168xf32>
    %17 = tpu.matmul %14, %16, %cst_13 {dimension_numbers = #tpu.dot_dimension_numbers<[1], [0], [0], [1], [0, 0, 1, 1], [], []>} : vector<28x32xf32>, vector<32x168xf32>, vector<28x168xf32> -> vector<28x168xf32>
    %18 = arith.addf %13, %17 : vector<28x168xf32>
    %19 = vector.extract_strided_slice %2 {offsets = [3, 0], sizes = [28, 32], strides = [1, 1]} : vector<32x32xf32> to vector<28x32xf32>
    %c3 = arith.constant 3 : index
    %c0_14 = arith.constant 0 : index
    %c0_15 = arith.constant 0 : index
    %20 = vector.load %arg3[%c3, %c0_14, %c0_15] : memref<5x32x168xf32, #tpu.memory_space<vmem>>, vector<1x32x168xf32>
    %21 = vector.shape_cast %20 : vector<1x32x168xf32> to vector<32x168xf32>
    %cst_16 = arith.constant dense<0.000000e+00> : vector<28x168xf32>
    %22 = tpu.matmul %19, %21, %cst_16 {dimension_numbers = #tpu.dot_dimension_numbers<[1], [0], [0], [1], [0, 0, 1, 1], [], []>} : vector<28x32xf32>, vector<32x168xf32>, vector<28x168xf32> -> vector<28x168xf32>
    %23 = arith.addf %18, %22 : vector<28x168xf32>
    %24 = vector.extract_strided_slice %2 {offsets = [4, 0], sizes = [28, 32], strides = [1, 1]} : vector<32x32xf32> to vector<28x32xf32>
    %c4 = arith.constant 4 : index
    %c0_17 = arith.constant 0 : index
    %c0_18 = arith.constant 0 : index
    %25 = vector.load %arg3[%c4, %c0_17, %c0_18] : memref<5x32x168xf32, #tpu.memory_space<vmem>>, vector<1x32x168xf32>
    %26 = vector.shape_cast %25 : vector<1x32x168xf32> to vector<32x168xf32>
    %cst_19 = arith.constant dense<0.000000e+00> : vector<28x168xf32>
    %27 = tpu.matmul %24, %26, %cst_19 {dimension_numbers = #tpu.dot_dimension_numbers<[1], [0], [0], [1], [0, 0, 1, 1], [], []>} : vector<28x32xf32>, vector<32x168xf32>, vector<28x168xf32> -> vector<28x168xf32>
    %28 = arith.addf %23, %27 : vector<28x168xf32>
    %c0_20 = arith.constant 0 : index
    %c0_21 = arith.constant 0 : index
    %29 = vector.load %arg4[%c0_20, %c0_21] : memref<1x168xf32, #tpu.memory_space<vmem>>, vector<1x168xf32>
    %30 = vector.broadcast %29 : vector<1x168xf32> to vector<28x168xf32>
    %31 = arith.addf %28, %30 : vector<28x168xf32>
    %cst_22 = arith.constant 0.000000e+00 : f32
    %32 = vector.broadcast %cst_22 : f32 to vector<28x168xf32>
    %33 = arith.maximumf %31, %32 : vector<28x168xf32>
    %34 = vector.extract_strided_slice %33 {offsets = [0, 0], sizes = [27, 168], strides = [1, 1]} : vector<28x168xf32> to vector<27x168xf32>
    %35 = vector.extract_strided_slice %33 {offsets = [1, 0], sizes = [27, 168], strides = [1, 1]} : vector<28x168xf32> to vector<27x168xf32>
    %36 = arith.maximumf %34, %35 : vector<27x168xf32>
    %37 = vector.extract_strided_slice %36 {offsets = [0, 0], sizes = [27, 162], strides = [1, 1]} : vector<27x168xf32> to vector<27x162xf32>
    %38 = vector.extract_strided_slice %36 {offsets = [0, 6], sizes = [27, 162], strides = [1, 1]} : vector<27x168xf32> to vector<27x162xf32>
    %39 = arith.maximumf %37, %38 : vector<27x162xf32>
    %cst_23 = arith.constant dense<0.000000e+00> : vector<14x162xf32>
    %40 = tpu.matmul %0, %39, %cst_23 {dimension_numbers = #tpu.dot_dimension_numbers<[1], [0], [0], [1], [0, 0, 1, 1], [], []>} : vector<14x27xf32>, vector<27x162xf32>, vector<14x162xf32> -> vector<14x162xf32>
    %cst_24 = arith.constant 0.000000e+00 : f32
    %41 = vector.broadcast %cst_24 : f32 to vector<10x160xf32>
    %42 = vector.extract_strided_slice %40 {offsets = [0, 0], sizes = [10, 162], strides = [1, 1]} : vector<14x162xf32> to vector<10x162xf32>
    %c0_25 = arith.constant 0 : index
    %c0_26 = arith.constant 0 : index
    %c0_27 = arith.constant 0 : index
    %43 = vector.load %arg5[%c0_25, %c0_26, %c0_27] : memref<5x162x160xf32, #tpu.memory_space<vmem>>, vector<1x162x160xf32>
    %44 = vector.shape_cast %43 : vector<1x162x160xf32> to vector<162x160xf32>
    %cst_28 = arith.constant dense<0.000000e+00> : vector<10x160xf32>
    %45 = tpu.matmul %42, %44, %cst_28 {dimension_numbers = #tpu.dot_dimension_numbers<[1], [0], [0], [1], [0, 0, 1, 1], [], []>} : vector<10x162xf32>, vector<162x160xf32>, vector<10x160xf32> -> vector<10x160xf32>
    %46 = arith.addf %41, %45 : vector<10x160xf32>
    %47 = vector.extract_strided_slice %40 {offsets = [1, 0], sizes = [10, 162], strides = [1, 1]} : vector<14x162xf32> to vector<10x162xf32>
    %c1_29 = arith.constant 1 : index
    %c0_30 = arith.constant 0 : index
    %c0_31 = arith.constant 0 : index
    %48 = vector.load %arg5[%c1_29, %c0_30, %c0_31] : memref<5x162x160xf32, #tpu.memory_space<vmem>>, vector<1x162x160xf32>
    %49 = vector.shape_cast %48 : vector<1x162x160xf32> to vector<162x160xf32>
    %cst_32 = arith.constant dense<0.000000e+00> : vector<10x160xf32>
    %50 = tpu.matmul %47, %49, %cst_32 {dimension_numbers = #tpu.dot_dimension_numbers<[1], [0], [0], [1], [0, 0, 1, 1], [], []>} : vector<10x162xf32>, vector<162x160xf32>, vector<10x160xf32> -> vector<10x160xf32>
    %51 = arith.addf %46, %50 : vector<10x160xf32>
    %52 = vector.extract_strided_slice %40 {offsets = [2, 0], sizes = [10, 162], strides = [1, 1]} : vector<14x162xf32> to vector<10x162xf32>
    %c2_33 = arith.constant 2 : index
    %c0_34 = arith.constant 0 : index
    %c0_35 = arith.constant 0 : index
    %53 = vector.load %arg5[%c2_33, %c0_34, %c0_35] : memref<5x162x160xf32, #tpu.memory_space<vmem>>, vector<1x162x160xf32>
    %54 = vector.shape_cast %53 : vector<1x162x160xf32> to vector<162x160xf32>
    %cst_36 = arith.constant dense<0.000000e+00> : vector<10x160xf32>
    %55 = tpu.matmul %52, %54, %cst_36 {dimension_numbers = #tpu.dot_dimension_numbers<[1], [0], [0], [1], [0, 0, 1, 1], [], []>} : vector<10x162xf32>, vector<162x160xf32>, vector<10x160xf32> -> vector<10x160xf32>
    %56 = arith.addf %51, %55 : vector<10x160xf32>
    %57 = vector.extract_strided_slice %40 {offsets = [3, 0], sizes = [10, 162], strides = [1, 1]} : vector<14x162xf32> to vector<10x162xf32>
    %c3_37 = arith.constant 3 : index
    %c0_38 = arith.constant 0 : index
    %c0_39 = arith.constant 0 : index
    %58 = vector.load %arg5[%c3_37, %c0_38, %c0_39] : memref<5x162x160xf32, #tpu.memory_space<vmem>>, vector<1x162x160xf32>
    %59 = vector.shape_cast %58 : vector<1x162x160xf32> to vector<162x160xf32>
    %cst_40 = arith.constant dense<0.000000e+00> : vector<10x160xf32>
    %60 = tpu.matmul %57, %59, %cst_40 {dimension_numbers = #tpu.dot_dimension_numbers<[1], [0], [0], [1], [0, 0, 1, 1], [], []>} : vector<10x162xf32>, vector<162x160xf32>, vector<10x160xf32> -> vector<10x160xf32>
    %61 = arith.addf %56, %60 : vector<10x160xf32>
    %62 = vector.extract_strided_slice %40 {offsets = [4, 0], sizes = [10, 162], strides = [1, 1]} : vector<14x162xf32> to vector<10x162xf32>
    %c4_41 = arith.constant 4 : index
    %c0_42 = arith.constant 0 : index
    %c0_43 = arith.constant 0 : index
    %63 = vector.load %arg5[%c4_41, %c0_42, %c0_43] : memref<5x162x160xf32, #tpu.memory_space<vmem>>, vector<1x162x160xf32>
    %64 = vector.shape_cast %63 : vector<1x162x160xf32> to vector<162x160xf32>
    %cst_44 = arith.constant dense<0.000000e+00> : vector<10x160xf32>
    %65 = tpu.matmul %62, %64, %cst_44 {dimension_numbers = #tpu.dot_dimension_numbers<[1], [0], [0], [1], [0, 0, 1, 1], [], []>} : vector<10x162xf32>, vector<162x160xf32>, vector<10x160xf32> -> vector<10x160xf32>
    %66 = arith.addf %61, %65 : vector<10x160xf32>
    %c0_45 = arith.constant 0 : index
    %c0_46 = arith.constant 0 : index
    %67 = vector.load %arg6[%c0_45, %c0_46] : memref<1x160xf32, #tpu.memory_space<vmem>>, vector<1x160xf32>
    %68 = vector.broadcast %67 : vector<1x160xf32> to vector<10x160xf32>
    %69 = arith.addf %66, %68 : vector<10x160xf32>
    %cst_47 = arith.constant 0.000000e+00 : f32
    %70 = vector.broadcast %cst_47 : f32 to vector<10x160xf32>
    %71 = arith.maximumf %69, %70 : vector<10x160xf32>
    %72 = vector.extract_strided_slice %71 {offsets = [0, 0], sizes = [9, 160], strides = [1, 1]} : vector<10x160xf32> to vector<9x160xf32>
    %73 = vector.extract_strided_slice %71 {offsets = [1, 0], sizes = [9, 160], strides = [1, 1]} : vector<10x160xf32> to vector<9x160xf32>
    %74 = arith.maximumf %72, %73 : vector<9x160xf32>
    %75 = vector.extract_strided_slice %74 {offsets = [0, 0], sizes = [9, 144], strides = [1, 1]} : vector<9x160xf32> to vector<9x144xf32>
    %76 = vector.extract_strided_slice %74 {offsets = [0, 16], sizes = [9, 144], strides = [1, 1]} : vector<9x160xf32> to vector<9x144xf32>
    %77 = arith.maximumf %75, %76 : vector<9x144xf32>
    %c0_48 = arith.constant 0 : index
    %c0_49 = arith.constant 0 : index
    %78 = vector.load %arg8[%c0_48, %c0_49] : memref<1x128xf32, #tpu.memory_space<vmem>>, vector<1x128xf32>
    %79 = vector.extract_strided_slice %77 {offsets = [0, 0], sizes = [1, 144], strides = [1, 1]} : vector<9x144xf32> to vector<1x144xf32>
    %c0_50 = arith.constant 0 : index
    %c0_51 = arith.constant 0 : index
    %c0_52 = arith.constant 0 : index
    %80 = vector.load %arg7[%c0_50, %c0_51, %c0_52] : memref<5x144x128xf32, #tpu.memory_space<vmem>>, vector<1x144x128xf32>
    %81 = vector.shape_cast %80 : vector<1x144x128xf32> to vector<144x128xf32>
    %cst_53 = arith.constant dense<0.000000e+00> : vector<1x128xf32>
    %82 = tpu.matmul %79, %81, %cst_53 {dimension_numbers = #tpu.dot_dimension_numbers<[1], [0], [0], [1], [0, 0, 1, 1], [], []>} : vector<1x144xf32>, vector<144x128xf32>, vector<1x128xf32> -> vector<1x128xf32>
    %83 = arith.addf %78, %82 : vector<1x128xf32>
    %84 = vector.extract_strided_slice %77 {offsets = [2, 0], sizes = [1, 144], strides = [1, 1]} : vector<9x144xf32> to vector<1x144xf32>
    %c1_54 = arith.constant 1 : index
    %c0_55 = arith.constant 0 : index
    %c0_56 = arith.constant 0 : index
    %85 = vector.load %arg7[%c1_54, %c0_55, %c0_56] : memref<5x144x128xf32, #tpu.memory_space<vmem>>, vector<1x144x128xf32>
    %86 = vector.shape_cast %85 : vector<1x144x128xf32> to vector<144x128xf32>
    %cst_57 = arith.constant dense<0.000000e+00> : vector<1x128xf32>
    %87 = tpu.matmul %84, %86, %cst_57 {dimension_numbers = #tpu.dot_dimension_numbers<[1], [0], [0], [1], [0, 0, 1, 1], [], []>} : vector<1x144xf32>, vector<144x128xf32>, vector<1x128xf32> -> vector<1x128xf32>
    %88 = arith.addf %83, %87 : vector<1x128xf32>
    %89 = vector.extract_strided_slice %77 {offsets = [4, 0], sizes = [1, 144], strides = [1, 1]} : vector<9x144xf32> to vector<1x144xf32>
    %c2_58 = arith.constant 2 : index
    %c0_59 = arith.constant 0 : index
    %c0_60 = arith.constant 0 : index
    %90 = vector.load %arg7[%c2_58, %c0_59, %c0_60] : memref<5x144x128xf32, #tpu.memory_space<vmem>>, vector<1x144x128xf32>
    %91 = vector.shape_cast %90 : vector<1x144x128xf32> to vector<144x128xf32>
    %cst_61 = arith.constant dense<0.000000e+00> : vector<1x128xf32>
    %92 = tpu.matmul %89, %91, %cst_61 {dimension_numbers = #tpu.dot_dimension_numbers<[1], [0], [0], [1], [0, 0, 1, 1], [], []>} : vector<1x144xf32>, vector<144x128xf32>, vector<1x128xf32> -> vector<1x128xf32>
    %93 = arith.addf %88, %92 : vector<1x128xf32>
    %94 = vector.extract_strided_slice %77 {offsets = [6, 0], sizes = [1, 144], strides = [1, 1]} : vector<9x144xf32> to vector<1x144xf32>
    %c3_62 = arith.constant 3 : index
    %c0_63 = arith.constant 0 : index
    %c0_64 = arith.constant 0 : index
    %95 = vector.load %arg7[%c3_62, %c0_63, %c0_64] : memref<5x144x128xf32, #tpu.memory_space<vmem>>, vector<1x144x128xf32>
    %96 = vector.shape_cast %95 : vector<1x144x128xf32> to vector<144x128xf32>
    %cst_65 = arith.constant dense<0.000000e+00> : vector<1x128xf32>
    %97 = tpu.matmul %94, %96, %cst_65 {dimension_numbers = #tpu.dot_dimension_numbers<[1], [0], [0], [1], [0, 0, 1, 1], [], []>} : vector<1x144xf32>, vector<144x128xf32>, vector<1x128xf32> -> vector<1x128xf32>
    %98 = arith.addf %93, %97 : vector<1x128xf32>
    %99 = vector.extract_strided_slice %77 {offsets = [8, 0], sizes = [1, 144], strides = [1, 1]} : vector<9x144xf32> to vector<1x144xf32>
    %c4_66 = arith.constant 4 : index
    %c0_67 = arith.constant 0 : index
    %c0_68 = arith.constant 0 : index
    %100 = vector.load %arg7[%c4_66, %c0_67, %c0_68] : memref<5x144x128xf32, #tpu.memory_space<vmem>>, vector<1x144x128xf32>
    %101 = vector.shape_cast %100 : vector<1x144x128xf32> to vector<144x128xf32>
    %cst_69 = arith.constant dense<0.000000e+00> : vector<1x128xf32>
    %102 = tpu.matmul %99, %101, %cst_69 {dimension_numbers = #tpu.dot_dimension_numbers<[1], [0], [0], [1], [0, 0, 1, 1], [], []>} : vector<1x144xf32>, vector<144x128xf32>, vector<1x128xf32> -> vector<1x128xf32>
    %103 = arith.addf %98, %102 : vector<1x128xf32>
    %cst_70 = arith.constant 0.000000e+00 : f32
    %104 = vector.broadcast %cst_70 : f32 to vector<1x128xf32>
    %105 = arith.maximumf %103, %104 : vector<1x128xf32>
    %c1_71 = arith.constant 1 : index
    %c0_72 = arith.constant 0 : index
    %c0_73 = arith.constant 0 : index
    %106 = vector.load %arg1[%c1_71, %c0_72, %c0_73] : memref<2x32x32xf32, #tpu.memory_space<vmem>>, vector<1x32x32xf32>
    %107 = vector.shape_cast %106 : vector<1x32x32xf32> to vector<32x32xf32>
    %cst_74 = arith.constant 0.000000e+00 : f32
    %108 = vector.broadcast %cst_74 : f32 to vector<28x168xf32>
    %109 = vector.extract_strided_slice %107 {offsets = [0, 0], sizes = [28, 32], strides = [1, 1]} : vector<32x32xf32> to vector<28x32xf32>
    %c0_75 = arith.constant 0 : index
    %c0_76 = arith.constant 0 : index
    %c0_77 = arith.constant 0 : index
    %110 = vector.load %arg3[%c0_75, %c0_76, %c0_77] : memref<5x32x168xf32, #tpu.memory_space<vmem>>, vector<1x32x168xf32>
    %111 = vector.shape_cast %110 : vector<1x32x168xf32> to vector<32x168xf32>
    %cst_78 = arith.constant dense<0.000000e+00> : vector<28x168xf32>
    %112 = tpu.matmul %109, %111, %cst_78 {dimension_numbers = #tpu.dot_dimension_numbers<[1], [0], [0], [1], [0, 0, 1, 1], [], []>} : vector<28x32xf32>, vector<32x168xf32>, vector<28x168xf32> -> vector<28x168xf32>
    %113 = arith.addf %108, %112 : vector<28x168xf32>
    %114 = vector.extract_strided_slice %107 {offsets = [1, 0], sizes = [28, 32], strides = [1, 1]} : vector<32x32xf32> to vector<28x32xf32>
    %c1_79 = arith.constant 1 : index
    %c0_80 = arith.constant 0 : index
    %c0_81 = arith.constant 0 : index
    %115 = vector.load %arg3[%c1_79, %c0_80, %c0_81] : memref<5x32x168xf32, #tpu.memory_space<vmem>>, vector<1x32x168xf32>
    %116 = vector.shape_cast %115 : vector<1x32x168xf32> to vector<32x168xf32>
    %cst_82 = arith.constant dense<0.000000e+00> : vector<28x168xf32>
    %117 = tpu.matmul %114, %116, %cst_82 {dimension_numbers = #tpu.dot_dimension_numbers<[1], [0], [0], [1], [0, 0, 1, 1], [], []>} : vector<28x32xf32>, vector<32x168xf32>, vector<28x168xf32> -> vector<28x168xf32>
    %118 = arith.addf %113, %117 : vector<28x168xf32>
    %119 = vector.extract_strided_slice %107 {offsets = [2, 0], sizes = [28, 32], strides = [1, 1]} : vector<32x32xf32> to vector<28x32xf32>
    %c2_83 = arith.constant 2 : index
    %c0_84 = arith.constant 0 : index
    %c0_85 = arith.constant 0 : index
    %120 = vector.load %arg3[%c2_83, %c0_84, %c0_85] : memref<5x32x168xf32, #tpu.memory_space<vmem>>, vector<1x32x168xf32>
    %121 = vector.shape_cast %120 : vector<1x32x168xf32> to vector<32x168xf32>
    %cst_86 = arith.constant dense<0.000000e+00> : vector<28x168xf32>
    %122 = tpu.matmul %119, %121, %cst_86 {dimension_numbers = #tpu.dot_dimension_numbers<[1], [0], [0], [1], [0, 0, 1, 1], [], []>} : vector<28x32xf32>, vector<32x168xf32>, vector<28x168xf32> -> vector<28x168xf32>
    %123 = arith.addf %118, %122 : vector<28x168xf32>
    %124 = vector.extract_strided_slice %107 {offsets = [3, 0], sizes = [28, 32], strides = [1, 1]} : vector<32x32xf32> to vector<28x32xf32>
    %c3_87 = arith.constant 3 : index
    %c0_88 = arith.constant 0 : index
    %c0_89 = arith.constant 0 : index
    %125 = vector.load %arg3[%c3_87, %c0_88, %c0_89] : memref<5x32x168xf32, #tpu.memory_space<vmem>>, vector<1x32x168xf32>
    %126 = vector.shape_cast %125 : vector<1x32x168xf32> to vector<32x168xf32>
    %cst_90 = arith.constant dense<0.000000e+00> : vector<28x168xf32>
    %127 = tpu.matmul %124, %126, %cst_90 {dimension_numbers = #tpu.dot_dimension_numbers<[1], [0], [0], [1], [0, 0, 1, 1], [], []>} : vector<28x32xf32>, vector<32x168xf32>, vector<28x168xf32> -> vector<28x168xf32>
    %128 = arith.addf %123, %127 : vector<28x168xf32>
    %129 = vector.extract_strided_slice %107 {offsets = [4, 0], sizes = [28, 32], strides = [1, 1]} : vector<32x32xf32> to vector<28x32xf32>
    %c4_91 = arith.constant 4 : index
    %c0_92 = arith.constant 0 : index
    %c0_93 = arith.constant 0 : index
    %130 = vector.load %arg3[%c4_91, %c0_92, %c0_93] : memref<5x32x168xf32, #tpu.memory_space<vmem>>, vector<1x32x168xf32>
    %131 = vector.shape_cast %130 : vector<1x32x168xf32> to vector<32x168xf32>
    %cst_94 = arith.constant dense<0.000000e+00> : vector<28x168xf32>
    %132 = tpu.matmul %129, %131, %cst_94 {dimension_numbers = #tpu.dot_dimension_numbers<[1], [0], [0], [1], [0, 0, 1, 1], [], []>} : vector<28x32xf32>, vector<32x168xf32>, vector<28x168xf32> -> vector<28x168xf32>
    %133 = arith.addf %128, %132 : vector<28x168xf32>
    %c0_95 = arith.constant 0 : index
    %c0_96 = arith.constant 0 : index
    %134 = vector.load %arg4[%c0_95, %c0_96] : memref<1x168xf32, #tpu.memory_space<vmem>>, vector<1x168xf32>
    %135 = vector.broadcast %134 : vector<1x168xf32> to vector<28x168xf32>
    %136 = arith.addf %133, %135 : vector<28x168xf32>
    %cst_97 = arith.constant 0.000000e+00 : f32
    %137 = vector.broadcast %cst_97 : f32 to vector<28x168xf32>
    %138 = arith.maximumf %136, %137 : vector<28x168xf32>
    %139 = vector.extract_strided_slice %138 {offsets = [0, 0], sizes = [27, 168], strides = [1, 1]} : vector<28x168xf32> to vector<27x168xf32>
    %140 = vector.extract_strided_slice %138 {offsets = [1, 0], sizes = [27, 168], strides = [1, 1]} : vector<28x168xf32> to vector<27x168xf32>
    %141 = arith.maximumf %139, %140 : vector<27x168xf32>
    %142 = vector.extract_strided_slice %141 {offsets = [0, 0], sizes = [27, 162], strides = [1, 1]} : vector<27x168xf32> to vector<27x162xf32>
    %143 = vector.extract_strided_slice %141 {offsets = [0, 6], sizes = [27, 162], strides = [1, 1]} : vector<27x168xf32> to vector<27x162xf32>
    %144 = arith.maximumf %142, %143 : vector<27x162xf32>
    %cst_98 = arith.constant dense<0.000000e+00> : vector<14x162xf32>
    %145 = tpu.matmul %0, %144, %cst_98 {dimension_numbers = #tpu.dot_dimension_numbers<[1], [0], [0], [1], [0, 0, 1, 1], [], []>} : vector<14x27xf32>, vector<27x162xf32>, vector<14x162xf32> -> vector<14x162xf32>
    %cst_99 = arith.constant 0.000000e+00 : f32
    %146 = vector.broadcast %cst_99 : f32 to vector<10x160xf32>
    %147 = vector.extract_strided_slice %145 {offsets = [0, 0], sizes = [10, 162], strides = [1, 1]} : vector<14x162xf32> to vector<10x162xf32>
    %c0_100 = arith.constant 0 : index
    %c0_101 = arith.constant 0 : index
    %c0_102 = arith.constant 0 : index
    %148 = vector.load %arg5[%c0_100, %c0_101, %c0_102] : memref<5x162x160xf32, #tpu.memory_space<vmem>>, vector<1x162x160xf32>
    %149 = vector.shape_cast %148 : vector<1x162x160xf32> to vector<162x160xf32>
    %cst_103 = arith.constant dense<0.000000e+00> : vector<10x160xf32>
    %150 = tpu.matmul %147, %149, %cst_103 {dimension_numbers = #tpu.dot_dimension_numbers<[1], [0], [0], [1], [0, 0, 1, 1], [], []>} : vector<10x162xf32>, vector<162x160xf32>, vector<10x160xf32> -> vector<10x160xf32>
    %151 = arith.addf %146, %150 : vector<10x160xf32>
    %152 = vector.extract_strided_slice %145 {offsets = [1, 0], sizes = [10, 162], strides = [1, 1]} : vector<14x162xf32> to vector<10x162xf32>
    %c1_104 = arith.constant 1 : index
    %c0_105 = arith.constant 0 : index
    %c0_106 = arith.constant 0 : index
    %153 = vector.load %arg5[%c1_104, %c0_105, %c0_106] : memref<5x162x160xf32, #tpu.memory_space<vmem>>, vector<1x162x160xf32>
    %154 = vector.shape_cast %153 : vector<1x162x160xf32> to vector<162x160xf32>
    %cst_107 = arith.constant dense<0.000000e+00> : vector<10x160xf32>
    %155 = tpu.matmul %152, %154, %cst_107 {dimension_numbers = #tpu.dot_dimension_numbers<[1], [0], [0], [1], [0, 0, 1, 1], [], []>} : vector<10x162xf32>, vector<162x160xf32>, vector<10x160xf32> -> vector<10x160xf32>
    %156 = arith.addf %151, %155 : vector<10x160xf32>
    %157 = vector.extract_strided_slice %145 {offsets = [2, 0], sizes = [10, 162], strides = [1, 1]} : vector<14x162xf32> to vector<10x162xf32>
    %c2_108 = arith.constant 2 : index
    %c0_109 = arith.constant 0 : index
    %c0_110 = arith.constant 0 : index
    %158 = vector.load %arg5[%c2_108, %c0_109, %c0_110] : memref<5x162x160xf32, #tpu.memory_space<vmem>>, vector<1x162x160xf32>
    %159 = vector.shape_cast %158 : vector<1x162x160xf32> to vector<162x160xf32>
    %cst_111 = arith.constant dense<0.000000e+00> : vector<10x160xf32>
    %160 = tpu.matmul %157, %159, %cst_111 {dimension_numbers = #tpu.dot_dimension_numbers<[1], [0], [0], [1], [0, 0, 1, 1], [], []>} : vector<10x162xf32>, vector<162x160xf32>, vector<10x160xf32> -> vector<10x160xf32>
    %161 = arith.addf %156, %160 : vector<10x160xf32>
    %162 = vector.extract_strided_slice %145 {offsets = [3, 0], sizes = [10, 162], strides = [1, 1]} : vector<14x162xf32> to vector<10x162xf32>
    %c3_112 = arith.constant 3 : index
    %c0_113 = arith.constant 0 : index
    %c0_114 = arith.constant 0 : index
    %163 = vector.load %arg5[%c3_112, %c0_113, %c0_114] : memref<5x162x160xf32, #tpu.memory_space<vmem>>, vector<1x162x160xf32>
    %164 = vector.shape_cast %163 : vector<1x162x160xf32> to vector<162x160xf32>
    %cst_115 = arith.constant dense<0.000000e+00> : vector<10x160xf32>
    %165 = tpu.matmul %162, %164, %cst_115 {dimension_numbers = #tpu.dot_dimension_numbers<[1], [0], [0], [1], [0, 0, 1, 1], [], []>} : vector<10x162xf32>, vector<162x160xf32>, vector<10x160xf32> -> vector<10x160xf32>
    %166 = arith.addf %161, %165 : vector<10x160xf32>
    %167 = vector.extract_strided_slice %145 {offsets = [4, 0], sizes = [10, 162], strides = [1, 1]} : vector<14x162xf32> to vector<10x162xf32>
    %c4_116 = arith.constant 4 : index
    %c0_117 = arith.constant 0 : index
    %c0_118 = arith.constant 0 : index
    %168 = vector.load %arg5[%c4_116, %c0_117, %c0_118] : memref<5x162x160xf32, #tpu.memory_space<vmem>>, vector<1x162x160xf32>
    %169 = vector.shape_cast %168 : vector<1x162x160xf32> to vector<162x160xf32>
    %cst_119 = arith.constant dense<0.000000e+00> : vector<10x160xf32>
    %170 = tpu.matmul %167, %169, %cst_119 {dimension_numbers = #tpu.dot_dimension_numbers<[1], [0], [0], [1], [0, 0, 1, 1], [], []>} : vector<10x162xf32>, vector<162x160xf32>, vector<10x160xf32> -> vector<10x160xf32>
    %171 = arith.addf %166, %170 : vector<10x160xf32>
    %c0_120 = arith.constant 0 : index
    %c0_121 = arith.constant 0 : index
    %172 = vector.load %arg6[%c0_120, %c0_121] : memref<1x160xf32, #tpu.memory_space<vmem>>, vector<1x160xf32>
    %173 = vector.broadcast %172 : vector<1x160xf32> to vector<10x160xf32>
    %174 = arith.addf %171, %173 : vector<10x160xf32>
    %cst_122 = arith.constant 0.000000e+00 : f32
    %175 = vector.broadcast %cst_122 : f32 to vector<10x160xf32>
    %176 = arith.maximumf %174, %175 : vector<10x160xf32>
    %177 = vector.extract_strided_slice %176 {offsets = [0, 0], sizes = [9, 160], strides = [1, 1]} : vector<10x160xf32> to vector<9x160xf32>
    %178 = vector.extract_strided_slice %176 {offsets = [1, 0], sizes = [9, 160], strides = [1, 1]} : vector<10x160xf32> to vector<9x160xf32>
    %179 = arith.maximumf %177, %178 : vector<9x160xf32>
    %180 = vector.extract_strided_slice %179 {offsets = [0, 0], sizes = [9, 144], strides = [1, 1]} : vector<9x160xf32> to vector<9x144xf32>
    %181 = vector.extract_strided_slice %179 {offsets = [0, 16], sizes = [9, 144], strides = [1, 1]} : vector<9x160xf32> to vector<9x144xf32>
    %182 = arith.maximumf %180, %181 : vector<9x144xf32>
    %c0_123 = arith.constant 0 : index
    %c0_124 = arith.constant 0 : index
    %183 = vector.load %arg8[%c0_123, %c0_124] : memref<1x128xf32, #tpu.memory_space<vmem>>, vector<1x128xf32>
    %184 = vector.extract_strided_slice %182 {offsets = [0, 0], sizes = [1, 144], strides = [1, 1]} : vector<9x144xf32> to vector<1x144xf32>
    %c0_125 = arith.constant 0 : index
    %c0_126 = arith.constant 0 : index
    %c0_127 = arith.constant 0 : index
    %185 = vector.load %arg7[%c0_125, %c0_126, %c0_127] : memref<5x144x128xf32, #tpu.memory_space<vmem>>, vector<1x144x128xf32>
    %186 = vector.shape_cast %185 : vector<1x144x128xf32> to vector<144x128xf32>
    %cst_128 = arith.constant dense<0.000000e+00> : vector<1x128xf32>
    %187 = tpu.matmul %184, %186, %cst_128 {dimension_numbers = #tpu.dot_dimension_numbers<[1], [0], [0], [1], [0, 0, 1, 1], [], []>} : vector<1x144xf32>, vector<144x128xf32>, vector<1x128xf32> -> vector<1x128xf32>
    %188 = arith.addf %183, %187 : vector<1x128xf32>
    %189 = vector.extract_strided_slice %182 {offsets = [2, 0], sizes = [1, 144], strides = [1, 1]} : vector<9x144xf32> to vector<1x144xf32>
    %c1_129 = arith.constant 1 : index
    %c0_130 = arith.constant 0 : index
    %c0_131 = arith.constant 0 : index
    %190 = vector.load %arg7[%c1_129, %c0_130, %c0_131] : memref<5x144x128xf32, #tpu.memory_space<vmem>>, vector<1x144x128xf32>
    %191 = vector.shape_cast %190 : vector<1x144x128xf32> to vector<144x128xf32>
    %cst_132 = arith.constant dense<0.000000e+00> : vector<1x128xf32>
    %192 = tpu.matmul %189, %191, %cst_132 {dimension_numbers = #tpu.dot_dimension_numbers<[1], [0], [0], [1], [0, 0, 1, 1], [], []>} : vector<1x144xf32>, vector<144x128xf32>, vector<1x128xf32> -> vector<1x128xf32>
    %193 = arith.addf %188, %192 : vector<1x128xf32>
    %194 = vector.extract_strided_slice %182 {offsets = [4, 0], sizes = [1, 144], strides = [1, 1]} : vector<9x144xf32> to vector<1x144xf32>
    %c2_133 = arith.constant 2 : index
    %c0_134 = arith.constant 0 : index
    %c0_135 = arith.constant 0 : index
    %195 = vector.load %arg7[%c2_133, %c0_134, %c0_135] : memref<5x144x128xf32, #tpu.memory_space<vmem>>, vector<1x144x128xf32>
    %196 = vector.shape_cast %195 : vector<1x144x128xf32> to vector<144x128xf32>
    %cst_136 = arith.constant dense<0.000000e+00> : vector<1x128xf32>
    %197 = tpu.matmul %194, %196, %cst_136 {dimension_numbers = #tpu.dot_dimension_numbers<[1], [0], [0], [1], [0, 0, 1, 1], [], []>} : vector<1x144xf32>, vector<144x128xf32>, vector<1x128xf32> -> vector<1x128xf32>
    %198 = arith.addf %193, %197 : vector<1x128xf32>
    %199 = vector.extract_strided_slice %182 {offsets = [6, 0], sizes = [1, 144], strides = [1, 1]} : vector<9x144xf32> to vector<1x144xf32>
    %c3_137 = arith.constant 3 : index
    %c0_138 = arith.constant 0 : index
    %c0_139 = arith.constant 0 : index
    %200 = vector.load %arg7[%c3_137, %c0_138, %c0_139] : memref<5x144x128xf32, #tpu.memory_space<vmem>>, vector<1x144x128xf32>
    %201 = vector.shape_cast %200 : vector<1x144x128xf32> to vector<144x128xf32>
    %cst_140 = arith.constant dense<0.000000e+00> : vector<1x128xf32>
    %202 = tpu.matmul %199, %201, %cst_140 {dimension_numbers = #tpu.dot_dimension_numbers<[1], [0], [0], [1], [0, 0, 1, 1], [], []>} : vector<1x144xf32>, vector<144x128xf32>, vector<1x128xf32> -> vector<1x128xf32>
    %203 = arith.addf %198, %202 : vector<1x128xf32>
    %204 = vector.extract_strided_slice %182 {offsets = [8, 0], sizes = [1, 144], strides = [1, 1]} : vector<9x144xf32> to vector<1x144xf32>
    %c4_141 = arith.constant 4 : index
    %c0_142 = arith.constant 0 : index
    %c0_143 = arith.constant 0 : index
    %205 = vector.load %arg7[%c4_141, %c0_142, %c0_143] : memref<5x144x128xf32, #tpu.memory_space<vmem>>, vector<1x144x128xf32>
    %206 = vector.shape_cast %205 : vector<1x144x128xf32> to vector<144x128xf32>
    %cst_144 = arith.constant dense<0.000000e+00> : vector<1x128xf32>
    %207 = tpu.matmul %204, %206, %cst_144 {dimension_numbers = #tpu.dot_dimension_numbers<[1], [0], [0], [1], [0, 0, 1, 1], [], []>} : vector<1x144xf32>, vector<144x128xf32>, vector<1x128xf32> -> vector<1x128xf32>
    %208 = arith.addf %203, %207 : vector<1x128xf32>
    %cst_145 = arith.constant 0.000000e+00 : f32
    %209 = vector.broadcast %cst_145 : f32 to vector<1x128xf32>
    %210 = arith.maximumf %208, %209 : vector<1x128xf32>
    %211 = tpu.iota {dimensions = array<i32: 0>} : vector<8x128xi32>
    %cst_146 = arith.constant 0.000000e+00 : f32
    %212 = vector.broadcast %cst_146 : f32 to vector<8x128xf32>
    %c0_i32 = arith.constant 0 : i32
    %213 = vector.broadcast %c0_i32 : i32 to vector<8x128xi32>
    %214 = arith.cmpi eq, %211, %213 : vector<8x128xi32>
    %215 = vector.shape_cast %105 : vector<1x128xf32> to vector<1x128xf32>
    %216 = vector.broadcast %215 : vector<1x128xf32> to vector<8x128xf32>
    %217 = arith.select %214, %216, %212 : vector<8x128xi1>, vector<8x128xf32>
    %c1_i32 = arith.constant 1 : i32
    %218 = vector.broadcast %c1_i32 : i32 to vector<8x128xi32>
    %219 = arith.cmpi eq, %211, %218 : vector<8x128xi32>
    %220 = vector.shape_cast %210 : vector<1x128xf32> to vector<1x128xf32>
    %221 = vector.broadcast %220 : vector<1x128xf32> to vector<8x128xf32>
    %222 = arith.select %219, %221, %217 : vector<8x128xi1>, vector<8x128xf32>
    %c0_147 = arith.constant 0 : index
    %c0_148 = arith.constant 0 : index
    %223 = vector.load %arg9[%c0_147, %c0_148] : memref<128x128xf32, #tpu.memory_space<vmem>>, vector<128x128xf32>
    %cst_149 = arith.constant dense<0.000000e+00> : vector<8x128xf32>
    %224 = tpu.matmul %222, %223, %cst_149 {dimension_numbers = #tpu.dot_dimension_numbers<[1], [0], [0], [1], [0, 0, 1, 1], [], []>} : vector<8x128xf32>, vector<128x128xf32>, vector<8x128xf32> -> vector<8x128xf32>
    %c0_150 = arith.constant 0 : index
    %c0_151 = arith.constant 0 : index
    %225 = vector.load %arg10[%c0_150, %c0_151] : memref<1x128xf32, #tpu.memory_space<vmem>>, vector<1x128xf32>
    %226 = vector.broadcast %225 : vector<1x128xf32> to vector<8x128xf32>
    %227 = arith.addf %224, %226 : vector<8x128xf32>
    %cst_152 = arith.constant 0.000000e+00 : f32
    %228 = vector.broadcast %cst_152 : f32 to vector<8x128xf32>
    %229 = arith.maximumf %227, %228 : vector<8x128xf32>
    %c0_153 = arith.constant 0 : index
    %c0_154 = arith.constant 0 : index
    %230 = vector.load %arg11[%c0_153, %c0_154] : memref<128x128xf32, #tpu.memory_space<vmem>>, vector<128x128xf32>
    %cst_155 = arith.constant dense<0.000000e+00> : vector<8x128xf32>
    %231 = tpu.matmul %229, %230, %cst_155 {dimension_numbers = #tpu.dot_dimension_numbers<[1], [0], [0], [1], [0, 0, 1, 1], [], []>} : vector<8x128xf32>, vector<128x128xf32>, vector<8x128xf32> -> vector<8x128xf32>
    %c0_156 = arith.constant 0 : index
    %c0_157 = arith.constant 0 : index
    %232 = vector.load %arg12[%c0_156, %c0_157] : memref<1x128xf32, #tpu.memory_space<vmem>>, vector<1x128xf32>
    %233 = vector.broadcast %232 : vector<1x128xf32> to vector<8x128xf32>
    %234 = arith.addf %231, %233 : vector<8x128xf32>
    %c0_158 = arith.constant 0 : index
    %c0_159 = arith.constant 0 : index
    %235 = vector.load %arg13[%c0_158, %c0_159] : memref<8x128xf32, #tpu.memory_space<vmem>>, vector<8x128xf32>
    tpu.vector_store %arg13[%c0_158, %c0_159], %234 {strides = array<i32>} : memref<8x128xf32, #tpu.memory_space<vmem>>, vector<8x128xf32>,
    return
  }
  func.func @transform_0(%arg0: i32) -> (i32, i32, i32) {
    %c0_i32 = arith.constant 0 : i32
    %c0_i32_0 = arith.constant 0 : i32
    %c0_i32_1 = arith.constant 0 : i32
    return %arg0, %c0_i32, %c0_i32_0 : i32, i32, i32
  }
  func.func @transform_1(%arg0: i32) -> (i32, i32) {
    %c0_i32 = arith.constant 0 : i32
    %c0_i32_0 = arith.constant 0 : i32
    %c0_i32_1 = arith.constant 0 : i32
    return %c0_i32, %c0_i32_0 : i32, i32
  }
  func.func @transform_2(%arg0: i32) -> (i32, i32, i32) {
    %c0_i32 = arith.constant 0 : i32
    %c0_i32_0 = arith.constant 0 : i32
    %c0_i32_1 = arith.constant 0 : i32
    %c0_i32_2 = arith.constant 0 : i32
    return %c0_i32, %c0_i32_0, %c0_i32_1 : i32, i32, i32
  }
  func.func @transform_3(%arg0: i32) -> (i32, i32) {
    %c0_i32 = arith.constant 0 : i32
    %c0_i32_0 = arith.constant 0 : i32
    %c0_i32_1 = arith.constant 0 : i32
    return %c0_i32, %c0_i32_0 : i32, i32
  }
  func.func @transform_4(%arg0: i32) -> (i32, i32, i32) {
    %c0_i32 = arith.constant 0 : i32
    %c0_i32_0 = arith.constant 0 : i32
    %c0_i32_1 = arith.constant 0 : i32
    %c0_i32_2 = arith.constant 0 : i32
    return %c0_i32, %c0_i32_0, %c0_i32_1 : i32, i32, i32
  }
  func.func @transform_5(%arg0: i32) -> (i32, i32) {
    %c0_i32 = arith.constant 0 : i32
    %c0_i32_0 = arith.constant 0 : i32
    %c0_i32_1 = arith.constant 0 : i32
    return %c0_i32, %c0_i32_0 : i32, i32
  }
  func.func @transform_6(%arg0: i32) -> (i32, i32, i32) {
    %c0_i32 = arith.constant 0 : i32
    %c0_i32_0 = arith.constant 0 : i32
    %c0_i32_1 = arith.constant 0 : i32
    %c0_i32_2 = arith.constant 0 : i32
    return %c0_i32, %c0_i32_0, %c0_i32_1 : i32, i32, i32
  }
  func.func @transform_7(%arg0: i32) -> (i32, i32) {
    %c0_i32 = arith.constant 0 : i32
    %c0_i32_0 = arith.constant 0 : i32
    %c0_i32_1 = arith.constant 0 : i32
    return %c0_i32, %c0_i32_0 : i32, i32
  }
  func.func @transform_8(%arg0: i32) -> (i32, i32) {
    %c0_i32 = arith.constant 0 : i32
    %c0_i32_0 = arith.constant 0 : i32
    %c0_i32_1 = arith.constant 0 : i32
    return %c0_i32, %c0_i32_0 : i32, i32
  }
  func.func @transform_9(%arg0: i32) -> (i32, i32) {
    %c0_i32 = arith.constant 0 : i32
    %c0_i32_0 = arith.constant 0 : i32
    %c0_i32_1 = arith.constant 0 : i32
    return %c0_i32, %c0_i32_0 : i32, i32
  }
  func.func @transform_10(%arg0: i32) -> (i32, i32) {
    %c0_i32 = arith.constant 0 : i32
    %c0_i32_0 = arith.constant 0 : i32
    %c0_i32_1 = arith.constant 0 : i32
    return %c0_i32, %c0_i32_0 : i32, i32
  }
  func.func @transform_11(%arg0: i32) -> (i32, i32) {
    %c0_i32 = arith.constant 0 : i32
    %c0_i32_0 = arith.constant 0 : i32
    %c0_i32_1 = arith.constant 0 : i32
    return %c0_i32, %c0_i32_0 : i32, i32
  }
  func.func @transform_12(%arg0: i32) -> (i32, i32) {
    %c0_i32 = arith.constant 0 : i32
    %c0_i32_0 = arith.constant 0 : i32
    return %arg0, %c0_i32 : i32, i32
  }
}

</mosaic_0001>

<llo_original>
// kernel: net_forward.1
$region0: #{net_forward.1}
  #allocation0 [shape = 'u32[]', space=smem, size = 0x4, offset = 0x4, fixed_abs, tag = 'smem constant byte address 0x4 - core index']
  #allocation1 [shape = 'u32[72,128]{1,0:T(1,128)}', space=vmem, size = 0x9000, scoped, tag = 'internal scratch']
  %s0 = inlined_call_operand.vmem [shape: f32[2,32,32], index: 0, kind: input, shape index: {}]
  %s1 = inlined_call_operand.vmem [shape: f32[14,27], index: 1, kind: input, shape index: {}]
  %s2 = inlined_call_operand.vmem [shape: f32[5,32,168], index: 2, kind: input, shape index: {}]
  %s3 = inlined_call_operand.vmem [shape: f32[1,168], index: 3, kind: input, shape index: {}]
  %s4 = inlined_call_operand.vmem [shape: f32[5,162,160], index: 4, kind: input, shape index: {}]
  %s5 = inlined_call_operand.vmem [shape: f32[1,160], index: 5, kind: input, shape index: {}]
  %s6 = inlined_call_operand.vmem [shape: f32[5,144,128], index: 6, kind: input, shape index: {}]
  %s7 = inlined_call_operand.vmem [shape: f32[1,128], index: 7, kind: input, shape index: {}]
  %s8 = inlined_call_operand.vmem [shape: f32[128,128], index: 8, kind: input, shape index: {}]
  %s9 = inlined_call_operand.vmem [shape: f32[1,128], index: 9, kind: input, shape index: {}]
  %s10 = inlined_call_operand.vmem [shape: f32[128,128], index: 10, kind: input, shape index: {}]
  %s11 = inlined_call_operand.vmem [shape: f32[1,128], index: 11, kind: input, shape index: {}]
  %s12 = inlined_call_operand.vmem [shape: f32[8,128], index: 12, kind: output, shape index: {}]
  %s13 = sld [smem:[#allocation0]]
  $region58: #{net_forward.1} parent=0
    _
  %s15 = ssub.s32 1, %s13
  %s16 = scalar_select 0, %s15, %s13
  // Predicated region
  $region2: #{net_forward.1} parent=0 // pred_check
    _
  $region3: #{net_forward.1} parent=0 // pred_check_branch
    %18 = sbr.rel (0) target = $region5
  $region4: #{net_forward.1} parent=0 // pred_region
    _
  $region5: #{net_forward.1} parent=0 // pred_fallthru
    _
  // Predicated region
  $region6: #{net_forward.1} parent=0 // pred_check
    _
  $region7: #{net_forward.1} parent=0 // pred_check_branch
    %20 = sbr.rel (0) target = $region9
  $region8: #{net_forward.1} parent=0 // pred_region
    _
  $region9: #{net_forward.1} parent=0 // pred_fallthru
    _
  // Predicated region
  $region10: #{net_forward.1} parent=0 // pred_check
    _
  $region11: #{net_forward.1} parent=0 // pred_check_branch
    %22 = sbr.rel (0) target = $region13
  $region12: #{net_forward.1} parent=0 // pred_region
    _
  $region13: #{net_forward.1} parent=0 // pred_fallthru
    _
  // Predicated region
  $region14: #{net_forward.1} parent=0 // pred_check
    _
  $region15: #{net_forward.1} parent=0 // pred_check_branch
    %24 = sbr.rel (0) target = $region17
  $region16: #{net_forward.1} parent=0 // pred_region
    _
  $region17: #{net_forward.1} parent=0 // pred_fallthru
    _
  // Predicated region
  $region18: #{net_forward.1} parent=0 // pred_check
    _
  $region19: #{net_forward.1} parent=0 // pred_check_branch
    %26 = sbr.rel (0) target = $region21
  $region20: #{net_forward.1} parent=0 // pred_region
    _
  $region21: #{net_forward.1} parent=0 // pred_fallthru
    _
  // Predicated region
  $region22: #{net_forward.1} parent=0 // pred_check
    _
  $region23: #{net_forward.1} parent=0 // pred_check_branch
    %28 = sbr.rel (0) target = $region25
  $region24: #{net_forward.1} parent=0 // pred_region
    _
  $region25: #{net_forward.1} parent=0 // pred_fallthru
    _
  // Predicated region
  $region26: #{net_forward.1} parent=0 // pred_check
    _
  $region27: #{net_forward.1} parent=0 // pred_check_branch
    %30 = sbr.rel (0) target = $region29
  $region28: #{net_forward.1} parent=0 // pred_region
    _
  $region29: #{net_forward.1} parent=0 // pred_fallthru
    _
  // Predicated region
  $region30: #{net_forward.1} parent=0 // pred_check
    _
  $region31: #{net_forward.1} parent=0 // pred_check_branch
    %32 = sbr.rel (0) target = $region33
  $region32: #{net_forward.1} parent=0 // pred_region
    _
  $region33: #{net_forward.1} parent=0 // pred_fallthru
    _
  // Predicated region
  $region34: #{net_forward.1} parent=0 // pred_check
    _
  $region35: #{net_forward.1} parent=0 // pred_check_branch
    %34 = sbr.rel (0) target = $region37
  $region36: #{net_forward.1} parent=0 // pred_region
    _
  $region37: #{net_forward.1} parent=0 // pred_fallthru
    _
  // Predicated region
  $region38: #{net_forward.1} parent=0 // pred_check
    _
  $region39: #{net_forward.1} parent=0 // pred_check_branch
    %36 = sbr.rel (0) target = $region41
  $region40: #{net_forward.1} parent=0 // pred_region
    _
  $region41: #{net_forward.1} parent=0 // pred_fallthru
    _
  // Predicated region
  $region42: #{net_forward.1} parent=0 // pred_check
    _
  $region43: #{net_forward.1} parent=0 // pred_check_branch
    %38 = sbr.rel (0) target = $region45
  $region44: #{net_forward.1} parent=0 // pred_region
    _
  $region45: #{net_forward.1} parent=0 // pred_fallthru
    _
  // Predicated region
  $region46: #{net_forward.1} parent=0 // pred_check
    _
  $region47: #{net_forward.1} parent=0 // pred_check_branch
    %40 = sbr.rel (0) target = $region49
  $region48: #{net_forward.1} parent=0 // pred_region
    _
  $region49: #{net_forward.1} parent=0 // pred_fallthru
    _
  %v41 = vld [vmem:[%s1] sm:$0xff]
  %v42 = vld [vmem:[%s1 + $0x8] sm:$0x3f]
  %v43 = vld [vmem:[%s0] sm:$0xff]
  %v44 = vld [vmem:[%s0 + $0x8] sm:$0xff]
  %v45 = vld [vmem:[%s0 + $0x10] sm:$0xff]
  %v46 = vld [vmem:[%s0 + $0x18] sm:$0xff]
  %v47 = vld [vmem:[%s2] sm:$0xff]
  %v48 = vld [vmem:[%s2 + $0x8] sm:$0xff]
  %v49 = vld [vmem:[%s2 + $0x10] sm:$0xff]
  %v50 = vld [vmem:[%s2 + $0x18] sm:$0xff]
  %v51 = vld [vmem:[%s2 + $0x20] sm:$0xff]
  %v52 = vld [vmem:[%s2 + $0x28] sm:$0xff]
  %v53 = vld [vmem:[%s2 + $0x30] sm:$0xff]
  %v54 = vld [vmem:[%s2 + $0x38] sm:$0xff]
  %s55 = scalar_lea.vmem %s2, 64
  %v56 = vld [vmem:[%s55] sm:$0xff]
  %v57 = vld [vmem:[%s55 + $0x8] sm:$0xff]
  %v58 = vld [vmem:[%s55 + $0x10] sm:$0xff]
  %v59 = vld [vmem:[%s55 + $0x18] sm:$0xff]
  %v60 = vld [vmem:[%s55 + $0x20] sm:$0xff]
  %v61 = vld [vmem:[%s55 + $0x28] sm:$0xff]
  %v62 = vld [vmem:[%s55 + $0x30] sm:$0xff]
  %v63 = vld [vmem:[%s55 + $0x38] sm:$0xff]
  %vm68 = vcmask 1046528
  %v69 = vrot.slane %v43, 1
  %v70 = vrot.slane %v44, 1
  %v71 = vsel %vm68, %v69, %v70
  %v72 = vrot.slane %v45, 1
  %v73 = vsel %vm68, %v70, %v72
  %v74 = vrot.slane %v46, 1
  %v75 = vsel %vm68, %v72, %v74
  %vm76 = vcmask 261120
  %v77 = vsel %vm76, %v71, 0
  %v79 = vsel %vm76, %v73, 0
  %v81 = vsel %vm76, %v75, 0
  %v83 = vsel %vm76, %v74, 0
  %85 = vmatpush.msra.mxu0 0.0
  %86 = vmatpush.msra.mxu0 0.0
  %87 = vmatpush.msra.mxu0 0.0
  %88 = vmatpush.msra.mxu0 0.0
  %89 = vmatpush.msra.mxu0 0.0
  %90 = vmatpush.msra.mxu0 0.0
  %91 = vmatpush.msra.mxu0 0.0
  %92 = vmatpush.msra.mxu0 0.0
  %93 = vmatpush.msra.mxu0 0.0
  %94 = vmatpush.msra.mxu0 0.0
  %95 = vmatpush.msra.mxu0 0.0
  %96 = vmatpush.msra.mxu0 0.0
  %97 = vmatpush.msra.mxu0 %v62
  %98 = vmatpush.msra.mxu0 %v60
  %99 = vmatpush.msra.mxu0 %v58
  %100 = vmatpush.msra.mxu0 %v56
  %101 = vmatmul.f32.gmra.mxu0 %v77
  %v102 = vpop.f32.mrf.mxu0
  %v103 = vadd.f32 0.0, %v102
  %104 = vmatmul.f32.gmra.mxu0 %v79
  %v105 = vpop.f32.mrf.mxu0
  %v106 = vadd.f32 0.0, %v105
  %107 = vmatmul.f32.gmra.mxu0 %v81
  %v108 = vpop.f32.mrf.mxu0
  %v109 = vadd.f32 0.0, %v108
  %110 = vmatmul.f32.gmra.mxu0 %v83
  %v111 = vpop.f32.mrf.mxu0
  %v112 = vadd.f32 0.0, %v111
  %113 = vdwg.mxu0
  %114 = vmatpush.msra.mxu0 0.0
  %115 = vmatpush.msra.mxu0 0.0
  %116 = vmatpush.msra.mxu0 0.0
  %117 = vmatpush.msra.mxu0 0.0
  %118 = vmatpush.msra.mxu0 0.0
  %119 = vmatpush.msra.mxu0 0.0
  %120 = vmatpush.msra.mxu0 0.0
  %121 = vmatpush.msra.mxu0 0.0
  %122 = vmatpush.msra.mxu0 0.0
  %123 = vmatpush.msra.mxu0 0.0
  %124 = vmatpush.msra.mxu0 0.0
  %125 = vmatpush.msra.mxu0 0.0
  %126 = vmatpush.msra.mxu0 %v63
  %127 = vmatpush.msra.mxu0 %v61
  %128 = vmatpush.msra.mxu0 %v59
  %129 = vmatpush.msra.mxu0 %v57
  %130 = vmatmul.f32.gmra.mxu0 %v77
  %v131 = vpop.f32.mrf.mxu0
  %v132 = vadd.f32 0.0, %v131
  %133 = vmatmul.f32.gmra.mxu0 %v79
  %v134 = vpop.f32.mrf.mxu0
  %v135 = vadd.f32 0.0, %v134
  %136 = vmatmul.f32.gmra.mxu0 %v81
  %v137 = vpop.f32.mrf.mxu0
  %v138 = vadd.f32 0.0, %v137
  %139 = vmatmul.f32.gmra.mxu0 %v83
  %v140 = vpop.f32.mrf.mxu0
  %v141 = vadd.f32 0.0, %v140
  %142 = vdwg.mxu0
  %v143 = vsel %vm76, %v43, 0
  %v145 = vsel %vm76, %v44, 0
  %v147 = vsel %vm76, %v45, 0
  %v149 = vsel %vm76, %v46, 0
  %151 = vmatpush.msra.mxu0 0.0
  %152 = vmatpush.msra.mxu0 0.0
  %153 = vmatpush.msra.mxu0 0.0
  %154 = vmatpush.msra.mxu0 0.0
  %155 = vmatpush.msra.mxu0 0.0
  %156 = vmatpush.msra.mxu0 0.0
  %157 = vmatpush.msra.mxu0 0.0
  %158 = vmatpush.msra.mxu0 0.0
  %159 = vmatpush.msra.mxu0 0.0
  %160 = vmatpush.msra.mxu0 0.0
  %161 = vmatpush.msra.mxu0 0.0
  %162 = vmatpush.msra.mxu0 0.0
  %163 = vmatpush.msra.mxu0 %v53
  %164 = vmatpush.msra.mxu0 %v51
  %165 = vmatpush.msra.mxu0 %v49
  %166 = vmatpush.msra.mxu0 %v47
  %167 = vmatmul.f32.gmra.mxu0 %v143
  %v168 = vpop.f32.mrf.mxu0
  %v169 = vadd.f32 %v103, %v168
  %170 = vmatmul.f32.gmra.mxu0 %v145
  %v171 = vpop.f32.mrf.mxu0
  %v172 = vadd.f32 %v106, %v171
  %173 = vmatmul.f32.gmra.mxu0 %v147
  %v174 = vpop.f32.mrf.mxu0
  %v175 = vadd.f32 %v109, %v174
  %176 = vmatmul.f32.gmra.mxu0 %v149
  %v177 = vpop.f32.mrf.mxu0
  %v178 = vadd.f32 %v112, %v177
  %179 = vdwg.mxu0
  %180 = vmatpush.msra.mxu0 0.0
  %181 = vmatpush.msra.mxu0 0.0
  %182 = vmatpush.msra.mxu0 0.0
  %183 = vmatpush.msra.mxu0 0.0
  %184 = vmatpush.msra.mxu0 0.0
  %185 = vmatpush.msra.mxu0 0.0
  %186 = vmatpush.msra.mxu0 0.0
  %187 = vmatpush.msra.mxu0 0.0
  %188 = vmatpush.msra.mxu0 0.0
  %189 = vmatpush.msra.mxu0 0.0
  %190 = vmatpush.msra.mxu0 0.0
  %191 = vmatpush.msra.mxu0 0.0
  %192 = vmatpush.msra.mxu0 %v54
  %193 = vmatpush.msra.mxu0 %v52
  %194 = vmatpush.msra.mxu0 %v50
  %195 = vmatpush.msra.mxu0 %v48
  %196 = vmatmul.f32.gmra.mxu0 %v143
  %v197 = vpop.f32.mrf.mxu0
  %v198 = vadd.f32 %v132, %v197
  %199 = vmatmul.f32.gmra.mxu0 %v145
  %v200 = vpop.f32.mrf.mxu0
  %v201 = vadd.f32 %v135, %v200
  %202 = vmatmul.f32.gmra.mxu0 %v147
  %v203 = vpop.f32.mrf.mxu0
  %v204 = vadd.f32 %v138, %v203
  %205 = vmatmul.f32.gmra.mxu0 %v149
  %v206 = vpop.f32.mrf.mxu0
  %v207 = vadd.f32 %v141, %v206
  %208 = vdwg.mxu0
  %s209 = scalar_lea.vmem %s2, 128
  %v210 = vld [vmem:[%s209] sm:$0xff]
  %v211 = vld [vmem:[%s209 + $0x8] sm:$0xff]
  %v212 = vld [vmem:[%s209 + $0x10] sm:$0xff]
  %v213 = vld [vmem:[%s209 + $0x18] sm:$0xff]
  %v214 = vld [vmem:[%s209 + $0x20] sm:$0xff]
  %v215 = vld [vmem:[%s209 + $0x28] sm:$0xff]
  %v216 = vld [vmem:[%s209 + $0x30] sm:$0xff]
  %v217 = vld [vmem:[%s209 + $0x38] sm:$0xff]
  %vm218 = vcmask 1045504
  %v219 = vrot.slane %v43, 2
  %v220 = vrot.slane %v44, 2
  %v221 = vsel %vm218, %v219, %v220
  %v222 = vrot.slane %v45, 2
  %v223 = vsel %vm218, %v220, %v222
  %v224 = vrot.slane %v46, 2
  %v225 = vsel %vm218, %v222, %v224
  %v226 = vsel %vm76, %v221, 0
  %v228 = vsel %vm76, %v223, 0
  %v230 = vsel %vm76, %v225, 0
  %v232 = vsel %vm76, %v224, 0
  %234 = vmatpush.msra.mxu0 0.0
  %235 = vmatpush.msra.mxu0 0.0
  %236 = vmatpush.msra.mxu0 0.0
  %237 = vmatpush.msra.mxu0 0.0
  %238 = vmatpush.msra.mxu0 0.0
  %239 = vmatpush.msra.mxu0 0.0
  %240 = vmatpush.msra.mxu0 0.0
  %241 = vmatpush.msra.mxu0 0.0
  %242 = vmatpush.msra.mxu0 0.0
  %243 = vmatpush.msra.mxu0 0.0
  %244 = vmatpush.msra.mxu0 0.0
  %245 = vmatpush.msra.mxu0 0.0
  %246 = vmatpush.msra.mxu0 %v216
  %247 = vmatpush.msra.mxu0 %v214
  %248 = vmatpush.msra.mxu0 %v212
  %249 = vmatpush.msra.mxu0 %v210
  %250 = vmatmul.f32.gmra.mxu0 %v226
  %v251 = vpop.f32.mrf.mxu0
  %v252 = vadd.f32 0.0, %v251
  %253 = vmatmul.f32.gmra.mxu0 %v228
  %v254 = vpop.f32.mrf.mxu0
  %v255 = vadd.f32 0.0, %v254
  %256 = vmatmul.f32.gmra.mxu0 %v230
  %v257 = vpop.f32.mrf.mxu0
  %v258 = vadd.f32 0.0, %v257
  %259 = vmatmul.f32.gmra.mxu0 %v232
  %v260 = vpop.f32.mrf.mxu0
  %v261 = vadd.f32 0.0, %v260
  %262 = vdwg.mxu0
  %263 = vmatpush.msra.mxu0 0.0
  %264 = vmatpush.msra.mxu0 0.0
  %265 = vmatpush.msra.mxu0 0.0
  %266 = vmatpush.msra.mxu0 0.0
  %267 = vmatpush.msra.mxu0 0.0
  %268 = vmatpush.msra.mxu0 0.0
  %269 = vmatpush.msra.mxu0 0.0
  %270 = vmatpush.msra.mxu0 0.0
  %271 = vmatpush.msra.mxu0 0.0
  %272 = vmatpush.msra.mxu0 0.0
  %273 = vmatpush.msra.mxu0 0.0
  %274 = vmatpush.msra.mxu0 0.0
  %275 = vmatpush.msra.mxu0 %v217
  %276 = vmatpush.msra.mxu0 %v215
  %277 = vmatpush.msra.mxu0 %v213
  %278 = vmatpush.msra.mxu0 %v211
  %279 = vmatmul.f32.gmra.mxu0 %v226
  %v280 = vpop.f32.mrf.mxu0
  %v281 = vadd.f32 0.0, %v280
  %282 = vmatmul.f32.gmra.mxu0 %v228
  %v283 = vpop.f32.mrf.mxu0
  %v284 = vadd.f32 0.0, %v283
  %285 = vmatmul.f32.gmra.mxu0 %v230
  %v286 = vpop.f32.mrf.mxu0
  %v287 = vadd.f32 0.0, %v286
  %288 = vmatmul.f32.gmra.mxu0 %v232
  %v289 = vpop.f32.mrf.mxu0
  %v290 = vadd.f32 0.0, %v289
  %291 = vdwg.mxu0
  %v292 = vadd.f32 %v169, %v252
  %v293 = vadd.f32 %v198, %v281
  %v294 = vadd.f32 %v172, %v255
  %v295 = vadd.f32 %v201, %v284
  %v296 = vadd.f32 %v175, %v258
  %v297 = vadd.f32 %v204, %v287
  %v298 = vadd.f32 %v178, %v261
  %v299 = vadd.f32 %v207, %v290
  %s300 = scalar_lea.vmem %s2, 192
  %v301 = vld [vmem:[%s300] sm:$0xff]
  %v302 = vld [vmem:[%s300 + $0x8] sm:$0xff]
  %v303 = vld [vmem:[%s300 + $0x10] sm:$0xff]
  %v304 = vld [vmem:[%s300 + $0x18] sm:$0xff]
  %v305 = vld [vmem:[%s300 + $0x20] sm:$0xff]
  %v306 = vld [vmem:[%s300 + $0x28] sm:$0xff]
  %v307 = vld [vmem:[%s300 + $0x30] sm:$0xff]
  %v308 = vld [vmem:[%s300 + $0x38] sm:$0xff]
  %vm309 = vcmask 1044480
  %v310 = vrot.slane %v43, 3
  %v311 = vrot.slane %v44, 3
  %v312 = vsel %vm309, %v310, %v311
  %v313 = vrot.slane %v45, 3
  %v314 = vsel %vm309, %v311, %v313
  %v315 = vrot.slane %v46, 3
  %v316 = vsel %vm309, %v313, %v315
  %v317 = vsel %vm76, %v312, 0
  %v319 = vsel %vm76, %v314, 0
  %v321 = vsel %vm76, %v316, 0
  %v323 = vsel %vm76, %v315, 0
  %325 = vmatpush.msra.mxu0 0.0
  %326 = vmatpush.msra.mxu0 0.0
  %327 = vmatpush.msra.mxu0 0.0
  %328 = vmatpush.msra.mxu0 0.0
  %329 = vmatpush.msra.mxu0 0.0
  %330 = vmatpush.msra.mxu0 0.0
  %331 = vmatpush.msra.mxu0 0.0
  %332 = vmatpush.msra.mxu0 0.0
  %333 = vmatpush.msra.mxu0 0.0
  %334 = vmatpush.msra.mxu0 0.0
  %335 = vmatpush.msra.mxu0 0.0
  %336 = vmatpush.msra.mxu0 0.0
  %337 = vmatpush.msra.mxu0 %v307
  %338 = vmatpush.msra.mxu0 %v305
  %339 = vmatpush.msra.mxu0 %v303
  %340 = vmatpush.msra.mxu0 %v301
  %341 = vmatmul.f32.gmra.mxu0 %v317
  %v342 = vpop.f32.mrf.mxu0
  %v343 = vadd.f32 0.0, %v342
  %344 = vmatmul.f32.gmra.mxu0 %v319
  %v345 = vpop.f32.mrf.mxu0
  %v346 = vadd.f32 0.0, %v345
  %347 = vmatmul.f32.gmra.mxu0 %v321
  %v348 = vpop.f32.mrf.mxu0
  %v349 = vadd.f32 0.0, %v348
  %350 = vmatmul.f32.gmra.mxu0 %v323
  %v351 = vpop.f32.mrf.mxu0
  %v352 = vadd.f32 0.0, %v351
  %353 = vdwg.mxu0
  %354 = vmatpush.msra.mxu0 0.0
  %355 = vmatpush.msra.mxu0 0.0
  %356 = vmatpush.msra.mxu0 0.0
  %357 = vmatpush.msra.mxu0 0.0
  %358 = vmatpush.msra.mxu0 0.0
  %359 = vmatpush.msra.mxu0 0.0
  %360 = vmatpush.msra.mxu0 0.0
  %361 = vmatpush.msra.mxu0 0.0
  %362 = vmatpush.msra.mxu0 0.0
  %363 = vmatpush.msra.mxu0 0.0
  %364 = vmatpush.msra.mxu0 0.0
  %365 = vmatpush.msra.mxu0 0.0
  %366 = vmatpush.msra.mxu0 %v308
  %367 = vmatpush.msra.mxu0 %v306
  %368 = vmatpush.msra.mxu0 %v304
  %369 = vmatpush.msra.mxu0 %v302
  %370 = vmatmul.f32.gmra.mxu0 %v317
  %v371 = vpop.f32.mrf.mxu0
  %v372 = vadd.f32 0.0, %v371
  %373 = vmatmul.f32.gmra.mxu0 %v319
  %v374 = vpop.f32.mrf.mxu0
  %v375 = vadd.f32 0.0, %v374
  %376 = vmatmul.f32.gmra.mxu0 %v321
  %v377 = vpop.f32.mrf.mxu0
  %v378 = vadd.f32 0.0, %v377
  %379 = vmatmul.f32.gmra.mxu0 %v323
  %v380 = vpop.f32.mrf.mxu0
  %v381 = vadd.f32 0.0, %v380
  %382 = vdwg.mxu0
  %v383 = vadd.f32 %v292, %v343
  %v384 = vadd.f32 %v293, %v372
  %v385 = vadd.f32 %v294, %v346
  %v386 = vadd.f32 %v295, %v375
  %v387 = vadd.f32 %v296, %v349
  %v388 = vadd.f32 %v297, %v378
  %v389 = vadd.f32 %v298, %v352
  %v390 = vadd.f32 %v299, %v381
  %s391 = scalar_lea.vmem %s2, 256
  %v392 = vld [vmem:[%s391] sm:$0xff]
  %v393 = vld [vmem:[%s391 + $0x8] sm:$0xff]
  %v394 = vld [vmem:[%s391 + $0x10] sm:$0xff]
  %v395 = vld [vmem:[%s391 + $0x18] sm:$0xff]
  %v396 = vld [vmem:[%s391 + $0x20] sm:$0xff]
  %v397 = vld [vmem:[%s391 + $0x28] sm:$0xff]
  %v398 = vld [vmem:[%s391 + $0x30] sm:$0xff]
  %v399 = vld [vmem:[%s391 + $0x38] sm:$0xff]
  %vm400 = vcmask 1043456
  %v401 = vrot.slane %v43, 4
  %v402 = vrot.slane %v44, 4
  %v403 = vsel %vm400, %v401, %v402
  %v404 = vrot.slane %v45, 4
  %v405 = vsel %vm400, %v402, %v404
  %v406 = vrot.slane %v46, 4
  %v407 = vsel %vm400, %v404, %v406
  %v408 = vsel %vm76, %v403, 0
  %v410 = vsel %vm76, %v405, 0
  %v412 = vsel %vm76, %v407, 0
  %v414 = vsel %vm76, %v406, 0
  %416 = vmatpush.msra.mxu0 0.0
  %417 = vmatpush.msra.mxu0 0.0
  %418 = vmatpush.msra.mxu0 0.0
  %419 = vmatpush.msra.mxu0 0.0
  %420 = vmatpush.msra.mxu0 0.0
  %421 = vmatpush.msra.mxu0 0.0
  %422 = vmatpush.msra.mxu0 0.0
  %423 = vmatpush.msra.mxu0 0.0
  %424 = vmatpush.msra.mxu0 0.0
  %425 = vmatpush.msra.mxu0 0.0
  %426 = vmatpush.msra.mxu0 0.0
  %427 = vmatpush.msra.mxu0 0.0
  %428 = vmatpush.msra.mxu0 %v398
  %429 = vmatpush.msra.mxu0 %v396
  %430 = vmatpush.msra.mxu0 %v394
  %431 = vmatpush.msra.mxu0 %v392
  %432 = vmatmul.f32.gmra.mxu0 %v408
  %v433 = vpop.f32.mrf.mxu0
  %v434 = vadd.f32 0.0, %v433
  %435 = vmatmul.f32.gmra.mxu0 %v410
  %v436 = vpop.f32.mrf.mxu0
  %v437 = vadd.f32 0.0, %v436
  %438 = vmatmul.f32.gmra.mxu0 %v412
  %v439 = vpop.f32.mrf.mxu0
  %v440 = vadd.f32 0.0, %v439
  %441 = vmatmul.f32.gmra.mxu0 %v414
  %v442 = vpop.f32.mrf.mxu0
  %v443 = vadd.f32 0.0, %v442
  %444 = vdwg.mxu0
  %445 = vmatpush.msra.mxu0 0.0
  %446 = vmatpush.msra.mxu0 0.0
  %447 = vmatpush.msra.mxu0 0.0
  %448 = vmatpush.msra.mxu0 0.0
  %449 = vmatpush.msra.mxu0 0.0
  %450 = vmatpush.msra.mxu0 0.0
  %451 = vmatpush.msra.mxu0 0.0
  %452 = vmatpush.msra.mxu0 0.0
  %453 = vmatpush.msra.mxu0 0.0
  %454 = vmatpush.msra.mxu0 0.0
  %455 = vmatpush.msra.mxu0 0.0
  %456 = vmatpush.msra.mxu0 0.0
  %457 = vmatpush.msra.mxu0 %v399
  %458 = vmatpush.msra.mxu0 %v397
  %459 = vmatpush.msra.mxu0 %v395
  %460 = vmatpush.msra.mxu0 %v393
  %461 = vmatmul.f32.gmra.mxu0 %v408
  %v462 = vpop.f32.mrf.mxu0
  %v463 = vadd.f32 0.0, %v462
  %464 = vmatmul.f32.gmra.mxu0 %v410
  %v465 = vpop.f32.mrf.mxu0
  %v466 = vadd.f32 0.0, %v465
  %467 = vmatmul.f32.gmra.mxu0 %v412
  %v468 = vpop.f32.mrf.mxu0
  %v469 = vadd.f32 0.0, %v468
  %470 = vmatmul.f32.gmra.mxu0 %v414
  %v471 = vpop.f32.mrf.mxu0
  %v472 = vadd.f32 0.0, %v471
  %473 = vdwg.mxu0
  %v474 = vadd.f32 %v383, %v434
  %v475 = vadd.f32 %v384, %v463
  %v476 = vadd.f32 %v385, %v437
  %v477 = vadd.f32 %v386, %v466
  %v478 = vadd.f32 %v387, %v440
  %v479 = vadd.f32 %v388, %v469
  %v480 = vadd.f32 %v389, %v443
  %v481 = vadd.f32 %v390, %v472
  %v482 = vld [vmem:[%s3] sm:$0x3]
  %v484 = vperm.slane %v482, 0
  %v485 = vperm.slane %v482, 1
  %v488 = vadd.f32 %v474, %v484
  %v489 = vadd.f32 %v475, %v485
  %v490 = vadd.f32 %v476, %v484
  %v491 = vadd.f32 %v477, %v485
  %v492 = vadd.f32 %v478, %v484
  %v493 = vadd.f32 %v479, %v485
  %v494 = vadd.f32 %v480, %v484
  %v495 = vadd.f32 %v481, %v485
  %v496 = vmax.f32 %v488, 0.0
  %v497 = vmax.f32 %v489, 0.0
  %v498 = vmax.f32 %v490, 0.0
  %v499 = vmax.f32 %v491, 0.0
  %v500 = vmax.f32 %v492, 0.0
  %v501 = vmax.f32 %v493, 0.0
  %v502 = vmax.f32 %v494, 0.0
  %v503 = vmax.f32 %v495, 0.0
  %v512 = vrot.slane %v496, 1
  %v513 = vrot.slane %v498, 1
  %v514 = vsel %vm68, %v512, %v513
  %v515 = vrot.slane %v497, 1
  %v516 = vrot.slane %v499, 1
  %v517 = vsel %vm68, %v515, %v516
  %v518 = vrot.slane %v500, 1
  %v519 = vsel %vm68, %v513, %v518
  %v520 = vrot.slane %v501, 1
  %v521 = vsel %vm68, %v516, %v520
  %v522 = vrot.slane %v502, 1
  %v523 = vsel %vm68, %v518, %v522
  %v524 = vrot.slane %v503, 1
  %v525 = vsel %vm68, %v520, %v524
  %v534 = vmax.f32 %v496, %v514
  %v535 = vmax.f32 %v497, %v517
  %v536 = vmax.f32 %v498, %v519
  %v537 = vmax.f32 %v499, %v521
  %v538 = vmax.f32 %v500, %v523
  %v539 = vmax.f32 %v501, %v525
  %v540 = vmax.f32 %v502, %v522
  %v541 = vmax.f32 %v503, %v524
  %550 = vrot.lane.b32.xlu0 %v534, 122
  %v551 = vpop.permute.xlu0 %550
  %552 = vrot.lane.b32.xlu0 %v535, 122
  %v553 = vpop.permute.xlu0 %552
  %554 = vrot.lane.b32.xlu0 %v536, 122
  %v555 = vpop.permute.xlu0 %554
  %556 = vrot.lane.b32.xlu0 %v537, 122
  %v557 = vpop.permute.xlu0 %556
  %558 = vrot.lane.b32.xlu0 %v538, 122
  %v559 = vpop.permute.xlu0 %558
  %560 = vrot.lane.b32.xlu0 %v539, 122
  %v561 = vpop.permute.xlu0 %560
  %562 = vrot.lane.b32.xlu0 %v540, 122
  %v563 = vpop.permute.xlu0 %562
  %564 = vrot.lane.b32.xlu0 %v541, 122
  %v565 = vpop.permute.xlu0 %564
  %vm566 = vcmask 998400
  %v567 = vsel %vm566, %v551, %v553
  %v568 = vsel %vm566, %v555, %v557
  %v569 = vsel %vm566, %v559, %v561
  %v570 = vsel %vm566, %v563, %v565
  %v579 = vmax.f32 %v534, %v567
  %v580 = vmax.f32 %v535, %v553
  %v581 = vmax.f32 %v536, %v568
  %v582 = vmax.f32 %v537, %v557
  %v583 = vmax.f32 %v538, %v569
  %v584 = vmax.f32 %v539, %v561
  %v585 = vmax.f32 %v540, %v570
  %v586 = vmax.f32 %v541, %v565
  %vm587 = vcmask 220160
  %v589 = vsel %vm587, %v41, 0
  %v592 = vsel %vm587, %v42, 0
  %vm594 = vcmask 1042432
  %v596 = vsel %vm594, %v585, 0
  %v599 = vsel %vm594, %v586, 0
  %601 = vmatpush.msra.mxu0 0.0
  %602 = vmatpush.msra.mxu0 0.0
  %603 = vmatpush.msra.mxu0 0.0
  %604 = vmatpush.msra.mxu0 0.0
  %605 = vmatpush.msra.mxu0 0.0
  %606 = vmatpush.msra.mxu0 0.0
  %607 = vmatpush.msra.mxu0 0.0
  %608 = vmatpush.msra.mxu0 0.0
  %609 = vmatpush.msra.mxu0 0.0
  %610 = vmatpush.msra.mxu0 0.0
  %611 = vmatpush.msra.mxu0 0.0
  %612 = vmatpush.msra.mxu0 0.0
  %613 = vmatpush.msra.mxu0 %v596
  %614 = vmatpush.msra.mxu0 %v583
  %615 = vmatpush.msra.mxu0 %v581
  %616 = vmatpush.msra.mxu0 %v579
  %617 = vmatmul.f32.gmra.mxu0 %v589
  %v618 = vpop.f32.mrf.mxu0
  %v619 = vadd.f32 0.0, %v618
  %620 = vmatmul.f32.gmra.mxu0 %v592
  %v621 = vpop.f32.mrf.mxu0
  %v622 = vadd.f32 0.0, %v621
  %623 = vdwg.mxu0
  %624 = vmatpush.msra.mxu0 0.0
  %625 = vmatpush.msra.mxu0 0.0
  %626 = vmatpush.msra.mxu0 0.0
  %627 = vmatpush.msra.mxu0 0.0
  %628 = vmatpush.msra.mxu0 0.0
  %629 = vmatpush.msra.mxu0 0.0
  %630 = vmatpush.msra.mxu0 0.0
  %631 = vmatpush.msra.mxu0 0.0
  %632 = vmatpush.msra.mxu0 0.0
  %633 = vmatpush.msra.mxu0 0.0
  %634 = vmatpush.msra.mxu0 0.0
  %635 = vmatpush.msra.mxu0 0.0
  %636 = vmatpush.msra.mxu0 %v599
  %637 = vmatpush.msra.mxu0 %v584
  %638 = vmatpush.msra.mxu0 %v582
  %639 = vmatpush.msra.mxu0 %v580
  %640 = vmatmul.f32.gmra.mxu0 %v589
  %v641 = vpop.f32.mrf.mxu0
  %v642 = vadd.f32 0.0, %v641
  %643 = vmatmul.f32.gmra.mxu0 %v592
  %v644 = vpop.f32.mrf.mxu0
  %v645 = vadd.f32 0.0, %v644
  %646 = vdwg.mxu0
  %v647 = vld [vmem:[%s4] sm:$0xff]
  %v648 = vld [vmem:[%s4 + $0x8] sm:$0xff]
  %v649 = vld [vmem:[%s4 + $0x10] sm:$0xff]
  %v650 = vld [vmem:[%s4 + $0x18] sm:$0xff]
  %v651 = vld [vmem:[%s4 + $0x20] sm:$0xff]
  %v652 = vld [vmem:[%s4 + $0x28] sm:$0xff]
  %v653 = vld [vmem:[%s4 + $0x30] sm:$0xff]
  %v654 = vld [vmem:[%s4 + $0x38] sm:$0xff]
  %v655 = vld [vmem:[%s4 + $0x40] sm:$0xff]
  %v656 = vld [vmem:[%s4 + $0x48] sm:$0xff]
  %v657 = vld [vmem:[%s4 + $0x50] sm:$0xff]
  %v658 = vld [vmem:[%s4 + $0x58] sm:$0xff]
  %v659 = vld [vmem:[%s4 + $0x60] sm:$0xff]
  %v660 = vld [vmem:[%s4 + $0x68] sm:$0xff]
  %v661 = vld [vmem:[%s4 + $0x70] sm:$0xff]
  %v662 = vld [vmem:[%s4 + $0x78] sm:$0xff]
  %v663 = vld [vmem:[%s4 + $0x80] sm:$0xff]
  %v664 = vld [vmem:[%s4 + $0x88] sm:$0xff]
  %v665 = vld [vmem:[%s4 + $0x90] sm:$0xff]
  %v666 = vld [vmem:[%s4 + $0x98] sm:$0xff]
  %v667 = vld [vmem:[%s4 + $0xa0] sm:$0xff]
  %v668 = vld [vmem:[%s4 + $0xa8] sm:$0xff]
  %v669 = vld [vmem:[%s4 + $0xb0] sm:$0xff]
  %v670 = vld [vmem:[%s4 + $0xb8] sm:$0xff]
  %v671 = vld [vmem:[%s4 + $0xc0] sm:$0xff]
  %v672 = vld [vmem:[%s4 + $0xc8] sm:$0xff]
  %v673 = vld [vmem:[%s4 + $0xd0] sm:$0xff]
  %v674 = vld [vmem:[%s4 + $0xd8] sm:$0xff]
  %v675 = vld [vmem:[%s4 + $0xe0] sm:$0xff]
  %v676 = vld [vmem:[%s4 + $0xe8] sm:$0xff]
  %v677 = vld [vmem:[%s4 + $0xf0] sm:$0xff]
  %v678 = vld [vmem:[%s4 + $0xf8] sm:$0xff]
  %v679 = vld [vmem:[%s4 + $0x100] sm:$0xff]
  %v680 = vld [vmem:[%s4 + $0x108] sm:$0xff]
  %v681 = vld [vmem:[%s4 + $0x110] sm:$0xff]
  %v682 = vld [vmem:[%s4 + $0x118] sm:$0xff]
  %v683 = vld [vmem:[%s4 + $0x120] sm:$0xff]
  %v684 = vld [vmem:[%s4 + $0x128] sm:$0xff]
  %v685 = vld [vmem:[%s4 + $0x130] sm:$0xff]
  %v686 = vld [vmem:[%s4 + $0x138] sm:$0xff]
  %v687 = vld [vmem:[%s4 + $0x140] sm:$0x3]
  %v688 = vld [vmem:[%s4 + $0x148] sm:$0x3]
  %s689 = scalar_lea.vmem %s4, 336
  %v690 = vld [vmem:[%s689] sm:$0xff]
  %v691 = vld [vmem:[%s689 + $0x8] sm:$0xff]
  %v692 = vld [vmem:[%s689 + $0x10] sm:$0xff]
  %v693 = vld [vmem:[%s689 + $0x18] sm:$0xff]
  %v694 = vld [vmem:[%s689 + $0x20] sm:$0xff]
  %v695 = vld [vmem:[%s689 + $0x28] sm:$0xff]
  %v696 = vld [vmem:[%s689 + $0x30] sm:$0xff]
  %v697 = vld [vmem:[%s689 + $0x38] sm:$0xff]
  %v698 = vld [vmem:[%s689 + $0x40] sm:$0xff]
  %v699 = vld [vmem:[%s689 + $0x48] sm:$0xff]
  %v700 = vld [vmem:[%s689 + $0x50] sm:$0xff]
  %v701 = vld [vmem:[%s689 + $0x58] sm:$0xff]
  %v702 = vld [vmem:[%s689 + $0x60] sm:$0xff]
  %v703 = vld [vmem:[%s689 + $0x68] sm:$0xff]
  %v704 = vld [vmem:[%s689 + $0x70] sm:$0xff]
  %v705 = vld [vmem:[%s689 + $0x78] sm:$0xff]
  %v706 = vld [vmem:[%s689 + $0x80] sm:$0xff]
  %v707 = vld [vmem:[%s689 + $0x88] sm:$0xff]
  %v708 = vld [vmem:[%s689 + $0x90] sm:$0xff]
  %v709 = vld [vmem:[%s689 + $0x98] sm:$0xff]
  %v710 = vld [vmem:[%s689 + $0xa0] sm:$0xff]
  %v711 = vld [vmem:[%s689 + $0xa8] sm:$0xff]
  %v712 = vld [vmem:[%s689 + $0xb0] sm:$0xff]
  %v713 = vld [vmem:[%s689 + $0xb8] sm:$0xff]
  %v714 = vld [vmem:[%s689 + $0xc0] sm:$0xff]
  %v715 = vld [vmem:[%s689 + $0xc8] sm:$0xff]
  %v716 = vld [vmem:[%s689 + $0xd0] sm:$0xff]
  %v717 = vld [vmem:[%s689 + $0xd8] sm:$0xff]
  %v718 = vld [vmem:[%s689 + $0xe0] sm:$0xff]
  %v719 = vld [vmem:[%s689 + $0xe8] sm:$0xff]
  %v720 = vld [vmem:[%s689 + $0xf0] sm:$0xff]
  %v721 = vld [vmem:[%s689 + $0xf8] sm:$0xff]
  %v722 = vld [vmem:[%s689 + $0x100] sm:$0xff]
  %v723 = vld [vmem:[%s689 + $0x108] sm:$0xff]
  %v724 = vld [vmem:[%s689 + $0x110] sm:$0xff]
  %v725 = vld [vmem:[%s689 + $0x118] sm:$0xff]
  %v726 = vld [vmem:[%s689 + $0x120] sm:$0xff]
  %v727 = vld [vmem:[%s689 + $0x128] sm:$0xff]
  %v728 = vld [vmem:[%s689 + $0x130] sm:$0xff]
  %v729 = vld [vmem:[%s689 + $0x138] sm:$0xff]
  %v730 = vld [vmem:[%s689 + $0x140] sm:$0x3]
  %v731 = vld [vmem:[%s689 + $0x148] sm:$0x3]
  %v736 = vrot.slane %v619, 1
  %v737 = vrot.slane %v622, 1
  %v738 = vsel %vm68, %v736, %v737
  %v739 = vrot.slane %v642, 1
  %v740 = vrot.slane %v645, 1
  %v741 = vsel %vm68, %v739, %v740
  %vm744 = vcmask 277504
  %v745 = vsel %vm744, %v741, 0
  %v747 = vsel %vm744, %v740, 0
  %vm749 = vcmask 1041408
  %v751 = vsel %vm749, %v730, 0
  %v754 = vsel %vm749, %v731, 0
  %756 = vmatpush.msra.mxu0 %v720
  %757 = vmatpush.msra.mxu0 %v718
  %758 = vmatpush.msra.mxu0 %v716
  %759 = vmatpush.msra.mxu0 %v714
  %760 = vmatpush.msra.mxu0 %v712
  %761 = vmatpush.msra.mxu0 %v710
  %762 = vmatpush.msra.mxu0 %v708
  %763 = vmatpush.msra.mxu0 %v706
  %764 = vmatpush.msra.mxu0 %v704
  %765 = vmatpush.msra.mxu0 %v702
  %766 = vmatpush.msra.mxu0 %v700
  %767 = vmatpush.msra.mxu0 %v698
  %768 = vmatpush.msra.mxu0 %v696
  %769 = vmatpush.msra.mxu0 %v694
  %770 = vmatpush.msra.mxu0 %v692
  %771 = vmatpush.msra.mxu0 %v690
  %772 = vmatmul.f32.gmra.mxu0 %v738
  %v773 = vpop.f32.mrf.mxu0
  %v774 = vadd.f32 0.0, %v773
  %775 = vmatmul.f32.gmra.mxu0 %v737
  %v776 = vpop.f32.mrf.mxu0
  %v777 = vadd.f32 0.0, %v776
  %778 = vdwg.mxu0
  %779 = vmatpush.msra.mxu0 0.0
  %780 = vmatpush.msra.mxu0 0.0
  %781 = vmatpush.msra.mxu0 0.0
  %782 = vmatpush.msra.mxu0 0.0
  %783 = vmatpush.msra.mxu0 0.0
  %784 = vmatpush.msra.mxu0 0.0
  %785 = vmatpush.msra.mxu0 0.0
  %786 = vmatpush.msra.mxu0 0.0
  %787 = vmatpush.msra.mxu0 0.0
  %788 = vmatpush.msra.mxu0 0.0
  %789 = vmatpush.msra.mxu0 0.0
  %790 = vmatpush.msra.mxu0 %v751
  %791 = vmatpush.msra.mxu0 %v728
  %792 = vmatpush.msra.mxu0 %v726
  %793 = vmatpush.msra.mxu0 %v724
  %794 = vmatpush.msra.mxu0 %v722
  %795 = vmatmul.f32.gmra.mxu0 %v745
  %v796 = vpop.f32.mrf.mxu0
  %v797 = vadd.f32 %v774, %v796
  %798 = vmatmul.f32.gmra.mxu0 %v747
  %v799 = vpop.f32.mrf.mxu0
  %v800 = vadd.f32 %v777, %v799
  %801 = vdwg.mxu0
  %802 = vmatpush.msra.mxu0 %v721
  %803 = vmatpush.msra.mxu0 %v719
  %804 = vmatpush.msra.mxu0 %v717
  %805 = vmatpush.msra.mxu0 %v715
  %806 = vmatpush.msra.mxu0 %v713
  %807 = vmatpush.msra.mxu0 %v711
  %808 = vmatpush.msra.mxu0 %v709
  %809 = vmatpush.msra.mxu0 %v707
  %810 = vmatpush.msra.mxu0 %v705
  %811 = vmatpush.msra.mxu0 %v703
  %812 = vmatpush.msra.mxu0 %v701
  %813 = vmatpush.msra.mxu0 %v699
  %814 = vmatpush.msra.mxu0 %v697
  %815 = vmatpush.msra.mxu0 %v695
  %816 = vmatpush.msra.mxu0 %v693
  %817 = vmatpush.msra.mxu0 %v691
  %818 = vmatmul.f32.gmra.mxu0 %v738
  %v819 = vpop.f32.mrf.mxu0
  %v820 = vadd.f32 0.0, %v819
  %821 = vmatmul.f32.gmra.mxu0 %v737
  %v822 = vpop.f32.mrf.mxu0
  %v823 = vadd.f32 0.0, %v822
  %824 = vdwg.mxu0
  %825 = vmatpush.msra.mxu0 0.0
  %826 = vmatpush.msra.mxu0 0.0
  %827 = vmatpush.msra.mxu0 0.0
  %828 = vmatpush.msra.mxu0 0.0
  %829 = vmatpush.msra.mxu0 0.0
  %830 = vmatpush.msra.mxu0 0.0
  %831 = vmatpush.msra.mxu0 0.0
  %832 = vmatpush.msra.mxu0 0.0
  %833 = vmatpush.msra.mxu0 0.0
  %834 = vmatpush.msra.mxu0 0.0
  %835 = vmatpush.msra.mxu0 0.0
  %836 = vmatpush.msra.mxu0 %v754
  %837 = vmatpush.msra.mxu0 %v729
  %838 = vmatpush.msra.mxu0 %v727
  %839 = vmatpush.msra.mxu0 %v725
  %840 = vmatpush.msra.mxu0 %v723
  %841 = vmatmul.f32.gmra.mxu0 %v745
  %v842 = vpop.f32.mrf.mxu0
  %v843 = vadd.f32 %v820, %v842
  %844 = vmatmul.f32.gmra.mxu0 %v747
  %v845 = vpop.f32.mrf.mxu0
  %v846 = vadd.f32 %v823, %v845
  %847 = vdwg.mxu0
  %v848 = vsel %vm744, %v642, 0
  %v850 = vsel %vm744, %v645, 0
  %v853 = vsel %vm749, %v687, 0
  %v856 = vsel %vm749, %v688, 0
  %858 = vmatpush.msra.mxu0 %v677
  %859 = vmatpush.msra.mxu0 %v675
  %860 = vmatpush.msra.mxu0 %v673
  %861 = vmatpush.msra.mxu0 %v671
  %862 = vmatpush.msra.mxu0 %v669
  %863 = vmatpush.msra.mxu0 %v667
  %864 = vmatpush.msra.mxu0 %v665
  %865 = vmatpush.msra.mxu0 %v663
  %866 = vmatpush.msra.mxu0 %v661
  %867 = vmatpush.msra.mxu0 %v659
  %868 = vmatpush.msra.mxu0 %v657
  %869 = vmatpush.msra.mxu0 %v655
  %870 = vmatpush.msra.mxu0 %v653
  %871 = vmatpush.msra.mxu0 %v651
  %872 = vmatpush.msra.mxu0 %v649
  %873 = vmatpush.msra.mxu0 %v647
  %874 = vmatmul.f32.gmra.mxu0 %v619
  %v875 = vpop.f32.mrf.mxu0
  %v876 = vadd.f32 %v797, %v875
  %877 = vmatmul.f32.gmra.mxu0 %v622
  %v878 = vpop.f32.mrf.mxu0
  %v879 = vadd.f32 %v800, %v878
  %880 = vdwg.mxu0
  %881 = vmatpush.msra.mxu0 0.0
  %882 = vmatpush.msra.mxu0 0.0
  %883 = vmatpush.msra.mxu0 0.0
  %884 = vmatpush.msra.mxu0 0.0
  %885 = vmatpush.msra.mxu0 0.0
  %886 = vmatpush.msra.mxu0 0.0
  %887 = vmatpush.msra.mxu0 0.0
  %888 = vmatpush.msra.mxu0 0.0
  %889 = vmatpush.msra.mxu0 0.0
  %890 = vmatpush.msra.mxu0 0.0
  %891 = vmatpush.msra.mxu0 0.0
  %892 = vmatpush.msra.mxu0 %v853
  %893 = vmatpush.msra.mxu0 %v685
  %894 = vmatpush.msra.mxu0 %v683
  %895 = vmatpush.msra.mxu0 %v681
  %896 = vmatpush.msra.mxu0 %v679
  %897 = vmatmul.f32.gmra.mxu0 %v848
  %v898 = vpop.f32.mrf.mxu0
  %v899 = vadd.f32 %v876, %v898
  %900 = vmatmul.f32.gmra.mxu0 %v850
  %v901 = vpop.f32.mrf.mxu0
  %v902 = vadd.f32 %v879, %v901
  %903 = vdwg.mxu0
  %904 = vmatpush.msra.mxu0 %v678
  %905 = vmatpush.msra.mxu0 %v676
  %906 = vmatpush.msra.mxu0 %v674
  %907 = vmatpush.msra.mxu0 %v672
  %908 = vmatpush.msra.mxu0 %v670
  %909 = vmatpush.msra.mxu0 %v668
  %910 = vmatpush.msra.mxu0 %v666
  %911 = vmatpush.msra.mxu0 %v664
  %912 = vmatpush.msra.mxu0 %v662
  %913 = vmatpush.msra.mxu0 %v660
  %914 = vmatpush.msra.mxu0 %v658
  %915 = vmatpush.msra.mxu0 %v656
  %916 = vmatpush.msra.mxu0 %v654
  %917 = vmatpush.msra.mxu0 %v652
  %918 = vmatpush.msra.mxu0 %v650
  %919 = vmatpush.msra.mxu0 %v648
  %920 = vmatmul.f32.gmra.mxu0 %v619
  %v921 = vpop.f32.mrf.mxu0
  %v922 = vadd.f32 %v843, %v921
  %923 = vmatmul.f32.gmra.mxu0 %v622
  %v924 = vpop.f32.mrf.mxu0
  %v925 = vadd.f32 %v846, %v924
  %926 = vdwg.mxu0
  %927 = vmatpush.msra.mxu0 0.0
  %928 = vmatpush.msra.mxu0 0.0
  %929 = vmatpush.msra.mxu0 0.0
  %930 = vmatpush.msra.mxu0 0.0
  %931 = vmatpush.msra.mxu0 0.0
  %932 = vmatpush.msra.mxu0 0.0
  %933 = vmatpush.msra.mxu0 0.0
  %934 = vmatpush.msra.mxu0 0.0
  %935 = vmatpush.msra.mxu0 0.0
  %936 = vmatpush.msra.mxu0 0.0
  %937 = vmatpush.msra.mxu0 0.0
  %938 = vmatpush.msra.mxu0 %v856
  %939 = vmatpush.msra.mxu0 %v686
  %940 = vmatpush.msra.mxu0 %v684
  %941 = vmatpush.msra.mxu0 %v682
  %942 = vmatpush.msra.mxu0 %v680
  %943 = vmatmul.f32.gmra.mxu0 %v848
  %v944 = vpop.f32.mrf.mxu0
  %v945 = vadd.f32 %v922, %v944
  %946 = vmatmul.f32.gmra.mxu0 %v850
  %v947 = vpop.f32.mrf.mxu0
  %v948 = vadd.f32 %v925, %v947
  %949 = vdwg.mxu0
  %s950 = scalar_lea.vmem %s4, 672
  %v951 = vld [vmem:[%s950] sm:$0xff]
  %v952 = vld [vmem:[%s950 + $0x8] sm:$0xff]
  %v953 = vld [vmem:[%s950 + $0x10] sm:$0xff]
  %v954 = vld [vmem:[%s950 + $0x18] sm:$0xff]
  %v955 = vld [vmem:[%s950 + $0x20] sm:$0xff]
  %v956 = vld [vmem:[%s950 + $0x28] sm:$0xff]
  %v957 = vld [vmem:[%s950 + $0x30] sm:$0xff]
  %v958 = vld [vmem:[%s950 + $0x38] sm:$0xff]
  %v959 = vld [vmem:[%s950 + $0x40] sm:$0xff]
  %v960 = vld [vmem:[%s950 + $0x48] sm:$0xff]
  %v961 = vld [vmem:[%s950 + $0x50] sm:$0xff]
  %v962 = vld [vmem:[%s950 + $0x58] sm:$0xff]
  %v963 = vld [vmem:[%s950 + $0x60] sm:$0xff]
  %v964 = vld [vmem:[%s950 + $0x68] sm:$0xff]
  %v965 = vld [vmem:[%s950 + $0x70] sm:$0xff]
  %v966 = vld [vmem:[%s950 + $0x78] sm:$0xff]
  %v967 = vld [vmem:[%s950 + $0x80] sm:$0xff]
  %v968 = vld [vmem:[%s950 + $0x88] sm:$0xff]
  %v969 = vld [vmem:[%s950 + $0x90] sm:$0xff]
  %v970 = vld [vmem:[%s950 + $0x98] sm:$0xff]
  %v971 = vld [vmem:[%s950 + $0xa0] sm:$0xff]
  %v972 = vld [vmem:[%s950 + $0xa8] sm:$0xff]
  %v973 = vld [vmem:[%s950 + $0xb0] sm:$0xff]
  %v974 = vld [vmem:[%s950 + $0xb8] sm:$0xff]
  %v975 = vld [vmem:[%s950 + $0xc0] sm:$0xff]
  %v976 = vld [vmem:[%s950 + $0xc8] sm:$0xff]
  %v977 = vld [vmem:[%s950 + $0xd0] sm:$0xff]
  %v978 = vld [vmem:[%s950 + $0xd8] sm:$0xff]
  %v979 = vld [vmem:[%s950 + $0xe0] sm:$0xff]
  %v980 = vld [vmem:[%s950 + $0xe8] sm:$0xff]
  %v981 = vld [vmem:[%s950 + $0xf0] sm:$0xff]
  %v982 = vld [vmem:[%s950 + $0xf8] sm:$0xff]
  %v983 = vld [vmem:[%s950 + $0x100] sm:$0xff]
  %v984 = vld [vmem:[%s950 + $0x108] sm:$0xff]
  %v985 = vld [vmem:[%s950 + $0x110] sm:$0xff]
  %v986 = vld [vmem:[%s950 + $0x118] sm:$0xff]
  %v987 = vld [vmem:[%s950 + $0x120] sm:$0xff]
  %v988 = vld [vmem:[%s950 + $0x128] sm:$0xff]
  %v989 = vld [vmem:[%s950 + $0x130] sm:$0xff]
  %v990 = vld [vmem:[%s950 + $0x138] sm:$0xff]
  %v991 = vld [vmem:[%s950 + $0x140] sm:$0x3]
  %v992 = vld [vmem:[%s950 + $0x148] sm:$0x3]
  %v993 = vrot.slane %v619, 2
  %v994 = vrot.slane %v622, 2
  %v995 = vsel %vm218, %v993, %v994
  %v996 = vrot.slane %v642, 2
  %v997 = vrot.slane %v645, 2
  %v998 = vsel %vm218, %v996, %v997
  %v1001 = vsel %vm744, %v998, 0
  %v1003 = vsel %vm744, %v997, 0
  %v1006 = vsel %vm749, %v991, 0
  %v1009 = vsel %vm749, %v992, 0
  %1011 = vmatpush.msra.mxu0 %v981
  %1012 = vmatpush.msra.mxu0 %v979
  %1013 = vmatpush.msra.mxu0 %v977
  %1014 = vmatpush.msra.mxu0 %v975
  %1015 = vmatpush.msra.mxu0 %v973
  %1016 = vmatpush.msra.mxu0 %v971
  %1017 = vmatpush.msra.mxu0 %v969
  %1018 = vmatpush.msra.mxu0 %v967
  %1019 = vmatpush.msra.mxu0 %v965
  %1020 = vmatpush.msra.mxu0 %v963
  %1021 = vmatpush.msra.mxu0 %v961
  %1022 = vmatpush.msra.mxu0 %v959
  %1023 = vmatpush.msra.mxu0 %v957
  %1024 = vmatpush.msra.mxu0 %v955
  %1025 = vmatpush.msra.mxu0 %v953
  %1026 = vmatpush.msra.mxu0 %v951
  %1027 = vmatmul.f32.gmra.mxu0 %v995
  %v1028 = vpop.f32.mrf.mxu0
  %v1029 = vadd.f32 0.0, %v1028
  %1030 = vmatmul.f32.gmra.mxu0 %v994
  %v1031 = vpop.f32.mrf.mxu0
  %v1032 = vadd.f32 0.0, %v1031
  %1033 = vdwg.mxu0
  %1034 = vmatpush.msra.mxu0 0.0
  %1035 = vmatpush.msra.mxu0 0.0
  %1036 = vmatpush.msra.mxu0 0.0
  %1037 = vmatpush.msra.mxu0 0.0
  %1038 = vmatpush.msra.mxu0 0.0
  %1039 = vmatpush.msra.mxu0 0.0
  %1040 = vmatpush.msra.mxu0 0.0
  %1041 = vmatpush.msra.mxu0 0.0
  %1042 = vmatpush.msra.mxu0 0.0
  %1043 = vmatpush.msra.mxu0 0.0
  %1044 = vmatpush.msra.mxu0 0.0
  %1045 = vmatpush.msra.mxu0 %v1006
  %1046 = vmatpush.msra.mxu0 %v989
  %1047 = vmatpush.msra.mxu0 %v987
  %1048 = vmatpush.msra.mxu0 %v985
  %1049 = vmatpush.msra.mxu0 %v983
  %1050 = vmatmul.f32.gmra.mxu0 %v1001
  %v1051 = vpop.f32.mrf.mxu0
  %v1052 = vadd.f32 %v1029, %v1051
  %1053 = vmatmul.f32.gmra.mxu0 %v1003
  %v1054 = vpop.f32.mrf.mxu0
  %v1055 = vadd.f32 %v1032, %v1054
  %1056 = vdwg.mxu0
  %1057 = vmatpush.msra.mxu0 %v982
  %1058 = vmatpush.msra.mxu0 %v980
  %1059 = vmatpush.msra.mxu0 %v978
  %1060 = vmatpush.msra.mxu0 %v976
  %1061 = vmatpush.msra.mxu0 %v974
  %1062 = vmatpush.msra.mxu0 %v972
  %1063 = vmatpush.msra.mxu0 %v970
  %1064 = vmatpush.msra.mxu0 %v968
  %1065 = vmatpush.msra.mxu0 %v966
  %1066 = vmatpush.msra.mxu0 %v964
  %1067 = vmatpush.msra.mxu0 %v962
  %1068 = vmatpush.msra.mxu0 %v960
  %1069 = vmatpush.msra.mxu0 %v958
  %1070 = vmatpush.msra.mxu0 %v956
  %1071 = vmatpush.msra.mxu0 %v954
  %1072 = vmatpush.msra.mxu0 %v952
  %1073 = vmatmul.f32.gmra.mxu0 %v995
  %v1074 = vpop.f32.mrf.mxu0
  %v1075 = vadd.f32 0.0, %v1074
  %1076 = vmatmul.f32.gmra.mxu0 %v994
  %v1077 = vpop.f32.mrf.mxu0
  %v1078 = vadd.f32 0.0, %v1077
  %1079 = vdwg.mxu0
  %1080 = vmatpush.msra.mxu0 0.0
  %1081 = vmatpush.msra.mxu0 0.0
  %1082 = vmatpush.msra.mxu0 0.0
  %1083 = vmatpush.msra.mxu0 0.0
  %1084 = vmatpush.msra.mxu0 0.0
  %1085 = vmatpush.msra.mxu0 0.0
  %1086 = vmatpush.msra.mxu0 0.0
  %1087 = vmatpush.msra.mxu0 0.0
  %1088 = vmatpush.msra.mxu0 0.0
  %1089 = vmatpush.msra.mxu0 0.0
  %1090 = vmatpush.msra.mxu0 0.0
  %1091 = vmatpush.msra.mxu0 %v1009
  %1092 = vmatpush.msra.mxu0 %v990
  %1093 = vmatpush.msra.mxu0 %v988
  %1094 = vmatpush.msra.mxu0 %v986
  %1095 = vmatpush.msra.mxu0 %v984
  %1096 = vmatmul.f32.gmra.mxu0 %v1001
  %v1097 = vpop.f32.mrf.mxu0
  %v1098 = vadd.f32 %v1075, %v1097
  %1099 = vmatmul.f32.gmra.mxu0 %v1003
  %v1100 = vpop.f32.mrf.mxu0
  %v1101 = vadd.f32 %v1078, %v1100
  %1102 = vdwg.mxu0
  %v1103 = vadd.f32 %v899, %v1052
  %v1104 = vadd.f32 %v945, %v1098
  %v1105 = vadd.f32 %v902, %v1055
  %v1106 = vadd.f32 %v948, %v1101
  %s1107 = scalar_lea.vmem %s4, 1008
  %v1108 = vld [vmem:[%s1107] sm:$0xff]
  %v1109 = vld [vmem:[%s1107 + $0x8] sm:$0xff]
  %v1110 = vld [vmem:[%s1107 + $0x10] sm:$0xff]
  %v1111 = vld [vmem:[%s1107 + $0x18] sm:$0xff]
  %v1112 = vld [vmem:[%s1107 + $0x20] sm:$0xff]
  %v1113 = vld [vmem:[%s1107 + $0x28] sm:$0xff]
  %v1114 = vld [vmem:[%s1107 + $0x30] sm:$0xff]
  %v1115 = vld [vmem:[%s1107 + $0x38] sm:$0xff]
  %v1116 = vld [vmem:[%s1107 + $0x40] sm:$0xff]
  %v1117 = vld [vmem:[%s1107 + $0x48] sm:$0xff]
  %v1118 = vld [vmem:[%s1107 + $0x50] sm:$0xff]
  %v1119 = vld [vmem:[%s1107 + $0x58] sm:$0xff]
  %v1120 = vld [vmem:[%s1107 + $0x60] sm:$0xff]
  %v1121 = vld [vmem:[%s1107 + $0x68] sm:$0xff]
  %v1122 = vld [vmem:[%s1107 + $0x70] sm:$0xff]
  %v1123 = vld [vmem:[%s1107 + $0x78] sm:$0xff]
  %v1124 = vld [vmem:[%s1107 + $0x80] sm:$0xff]
  %v1125 = vld [vmem:[%s1107 + $0x88] sm:$0xff]
  %v1126 = vld [vmem:[%s1107 + $0x90] sm:$0xff]
  %v1127 = vld [vmem:[%s1107 + $0x98] sm:$0xff]
  %v1128 = vld [vmem:[%s1107 + $0xa0] sm:$0xff]
  %v1129 = vld [vmem:[%s1107 + $0xa8] sm:$0xff]
  %v1130 = vld [vmem:[%s1107 + $0xb0] sm:$0xff]
  %v1131 = vld [vmem:[%s1107 + $0xb8] sm:$0xff]
  %v1132 = vld [vmem:[%s1107 + $0xc0] sm:$0xff]
  %v1133 = vld [vmem:[%s1107 + $0xc8] sm:$0xff]
  %v1134 = vld [vmem:[%s1107 + $0xd0] sm:$0xff]
  %v1135 = vld [vmem:[%s1107 + $0xd8] sm:$0xff]
  %v1136 = vld [vmem:[%s1107 + $0xe0] sm:$0xff]
  %v1137 = vld [vmem:[%s1107 + $0xe8] sm:$0xff]
  %v1138 = vld [vmem:[%s1107 + $0xf0] sm:$0xff]
  %v1139 = vld [vmem:[%s1107 + $0xf8] sm:$0xff]
  %v1140 = vld [vmem:[%s1107 + $0x100] sm:$0xff]
  %v1141 = vld [vmem:[%s1107 + $0x108] sm:$0xff]
  %v1142 = vld [vmem:[%s1107 + $0x110] sm:$0xff]
  %v1143 = vld [vmem:[%s1107 + $0x118] sm:$0xff]
  %v1144 = vld [vmem:[%s1107 + $0x120] sm:$0xff]
  %v1145 = vld [vmem:[%s1107 + $0x128] sm:$0xff]
  %v1146 = vld [vmem:[%s1107 + $0x130] sm:$0xff]
  %v1147 = vld [vmem:[%s1107 + $0x138] sm:$0xff]
  %v1148 = vld [vmem:[%s1107 + $0x140] sm:$0x3]
  %v1149 = vld [vmem:[%s1107 + $0x148] sm:$0x3]
  %v1150 = vrot.slane %v619, 3
  %v1151 = vrot.slane %v622, 3
  %v1152 = vsel %vm309, %v1150, %v1151
  %v1153 = vrot.slane %v642, 3
  %v1154 = vrot.slane %v645, 3
  %v1155 = vsel %vm309, %v1153, %v1154
  %v1158 = vsel %vm744, %v1155, 0
  %v1160 = vsel %vm744, %v1154, 0
  %v1163 = vsel %vm749, %v1148, 0
  %v1166 = vsel %vm749, %v1149, 0
  %1168 = vmatpush.msra.mxu0 %v1138
  %1169 = vmatpush.msra.mxu0 %v1136
  %1170 = vmatpush.msra.mxu0 %v1134
  %1171 = vmatpush.msra.mxu0 %v1132
  %1172 = vmatpush.msra.mxu0 %v1130
  %1173 = vmatpush.msra.mxu0 %v1128
  %1174 = vmatpush.msra.mxu0 %v1126
  %1175 = vmatpush.msra.mxu0 %v1124
  %1176 = vmatpush.msra.mxu0 %v1122
  %1177 = vmatpush.msra.mxu0 %v1120
  %1178 = vmatpush.msra.mxu0 %v1118
  %1179 = vmatpush.msra.mxu0 %v1116
  %1180 = vmatpush.msra.mxu0 %v1114
  %1181 = vmatpush.msra.mxu0 %v1112
  %1182 = vmatpush.msra.mxu0 %v1110
  %1183 = vmatpush.msra.mxu0 %v1108
  %1184 = vmatmul.f32.gmra.mxu0 %v1152
  %v1185 = vpop.f32.mrf.mxu0
  %v1186 = vadd.f32 0.0, %v1185
  %1187 = vmatmul.f32.gmra.mxu0 %v1151
  %v1188 = vpop.f32.mrf.mxu0
  %v1189 = vadd.f32 0.0, %v1188
  %1190 = vdwg.mxu0
  %1191 = vmatpush.msra.mxu0 0.0
  %1192 = vmatpush.msra.mxu0 0.0
  %1193 = vmatpush.msra.mxu0 0.0
  %1194 = vmatpush.msra.mxu0 0.0
  %1195 = vmatpush.msra.mxu0 0.0
  %1196 = vmatpush.msra.mxu0 0.0
  %1197 = vmatpush.msra.mxu0 0.0
  %1198 = vmatpush.msra.mxu0 0.0
  %1199 = vmatpush.msra.mxu0 0.0
  %1200 = vmatpush.msra.mxu0 0.0
  %1201 = vmatpush.msra.mxu0 0.0
  %1202 = vmatpush.msra.mxu0 %v1163
  %1203 = vmatpush.msra.mxu0 %v1146
  %1204 = vmatpush.msra.mxu0 %v1144
  %1205 = vmatpush.msra.mxu0 %v1142
  %1206 = vmatpush.msra.mxu0 %v1140
  %1207 = vmatmul.f32.gmra.mxu0 %v1158
  %v1208 = vpop.f32.mrf.mxu0
  %v1209 = vadd.f32 %v1186, %v1208
  %1210 = vmatmul.f32.gmra.mxu0 %v1160
  %v1211 = vpop.f32.mrf.mxu0
  %v1212 = vadd.f32 %v1189, %v1211
  %1213 = vdwg.mxu0
  %1214 = vmatpush.msra.mxu0 %v1139
  %1215 = vmatpush.msra.mxu0 %v1137
  %1216 = vmatpush.msra.mxu0 %v1135
  %1217 = vmatpush.msra.mxu0 %v1133
  %1218 = vmatpush.msra.mxu0 %v1131
  %1219 = vmatpush.msra.mxu0 %v1129
  %1220 = vmatpush.msra.mxu0 %v1127
  %1221 = vmatpush.msra.mxu0 %v1125
  %1222 = vmatpush.msra.mxu0 %v1123
  %1223 = vmatpush.msra.mxu0 %v1121
  %1224 = vmatpush.msra.mxu0 %v1119
  %1225 = vmatpush.msra.mxu0 %v1117
  %1226 = vmatpush.msra.mxu0 %v1115
  %1227 = vmatpush.msra.mxu0 %v1113
  %1228 = vmatpush.msra.mxu0 %v1111
  %1229 = vmatpush.msra.mxu0 %v1109
  %1230 = vmatmul.f32.gmra.mxu0 %v1152
  %v1231 = vpop.f32.mrf.mxu0
  %v1232 = vadd.f32 0.0, %v1231
  %1233 = vmatmul.f32.gmra.mxu0 %v1151
  %v1234 = vpop.f32.mrf.mxu0
  %v1235 = vadd.f32 0.0, %v1234
  %1236 = vdwg.mxu0
  %1237 = vmatpush.msra.mxu0 0.0
  %1238 = vmatpush.msra.mxu0 0.0
  %1239 = vmatpush.msra.mxu0 0.0
  %1240 = vmatpush.msra.mxu0 0.0
  %1241 = vmatpush.msra.mxu0 0.0
  %1242 = vmatpush.msra.mxu0 0.0
  %1243 = vmatpush.msra.mxu0 0.0
  %1244 = vmatpush.msra.mxu0 0.0
  %1245 = vmatpush.msra.mxu0 0.0
  %1246 = vmatpush.msra.mxu0 0.0
  %1247 = vmatpush.msra.mxu0 0.0
  %1248 = vmatpush.msra.mxu0 %v1166
  %1249 = vmatpush.msra.mxu0 %v1147
  %1250 = vmatpush.msra.mxu0 %v1145
  %1251 = vmatpush.msra.mxu0 %v1143
  %1252 = vmatpush.msra.mxu0 %v1141
  %1253 = vmatmul.f32.gmra.mxu0 %v1158
  %v1254 = vpop.f32.mrf.mxu0
  %v1255 = vadd.f32 %v1232, %v1254
  %1256 = vmatmul.f32.gmra.mxu0 %v1160
  %v1257 = vpop.f32.mrf.mxu0
  %v1258 = vadd.f32 %v1235, %v1257
  %1259 = vdwg.mxu0
  %v1260 = vadd.f32 %v1103, %v1209
  %v1261 = vadd.f32 %v1104, %v1255
  %v1262 = vadd.f32 %v1105, %v1212
  %v1263 = vadd.f32 %v1106, %v1258
  %s1264 = scalar_lea.vmem %s4, 1344
  %v1265 = vld [vmem:[%s1264] sm:$0xff]
  %v1266 = vld [vmem:[%s1264 + $0x8] sm:$0xff]
  %v1267 = vld [vmem:[%s1264 + $0x10] sm:$0xff]
  %v1268 = vld [vmem:[%s1264 + $0x18] sm:$0xff]
  %v1269 = vld [vmem:[%s1264 + $0x20] sm:$0xff]
  %v1270 = vld [vmem:[%s1264 + $0x28] sm:$0xff]
  %v1271 = vld [vmem:[%s1264 + $0x30] sm:$0xff]
  %v1272 = vld [vmem:[%s1264 + $0x38] sm:$0xff]
  %v1273 = vld [vmem:[%s1264 + $0x40] sm:$0xff]
  %v1274 = vld [vmem:[%s1264 + $0x48] sm:$0xff]
  %v1275 = vld [vmem:[%s1264 + $0x50] sm:$0xff]
  %v1276 = vld [vmem:[%s1264 + $0x58] sm:$0xff]
  %v1277 = vld [vmem:[%s1264 + $0x60] sm:$0xff]
  %v1278 = vld [vmem:[%s1264 + $0x68] sm:$0xff]
  %v1279 = vld [vmem:[%s1264 + $0x70] sm:$0xff]
  %v1280 = vld [vmem:[%s1264 + $0x78] sm:$0xff]
  %v1281 = vld [vmem:[%s1264 + $0x80] sm:$0xff]
  %v1282 = vld [vmem:[%s1264 + $0x88] sm:$0xff]
  %v1283 = vld [vmem:[%s1264 + $0x90] sm:$0xff]
  %v1284 = vld [vmem:[%s1264 + $0x98] sm:$0xff]
  %v1285 = vld [vmem:[%s1264 + $0xa0] sm:$0xff]
  %v1286 = vld [vmem:[%s1264 + $0xa8] sm:$0xff]
  %v1287 = vld [vmem:[%s1264 + $0xb0] sm:$0xff]
  %v1288 = vld [vmem:[%s1264 + $0xb8] sm:$0xff]
  %v1289 = vld [vmem:[%s1264 + $0xc0] sm:$0xff]
  %v1290 = vld [vmem:[%s1264 + $0xc8] sm:$0xff]
  %v1291 = vld [vmem:[%s1264 + $0xd0] sm:$0xff]
  %v1292 = vld [vmem:[%s1264 + $0xd8] sm:$0xff]
  %v1293 = vld [vmem:[%s1264 + $0xe0] sm:$0xff]
  %v1294 = vld [vmem:[%s1264 + $0xe8] sm:$0xff]
  %v1295 = vld [vmem:[%s1264 + $0xf0] sm:$0xff]
  %v1296 = vld [vmem:[%s1264 + $0xf8] sm:$0xff]
  %v1297 = vld [vmem:[%s1264 + $0x100] sm:$0xff]
  %v1298 = vld [vmem:[%s1264 + $0x108] sm:$0xff]
  %v1299 = vld [vmem:[%s1264 + $0x110] sm:$0xff]
  %v1300 = vld [vmem:[%s1264 + $0x118] sm:$0xff]
  %v1301 = vld [vmem:[%s1264 + $0x120] sm:$0xff]
  %v1302 = vld [vmem:[%s1264 + $0x128] sm:$0xff]
  %v1303 = vld [vmem:[%s1264 + $0x130] sm:$0xff]
  %v1304 = vld [vmem:[%s1264 + $0x138] sm:$0xff]
  %v1305 = vld [vmem:[%s1264 + $0x140] sm:$0x3]
  %v1306 = vld [vmem:[%s1264 + $0x148] sm:$0x3]
  %v1307 = vrot.slane %v619, 4
  %v1308 = vrot.slane %v622, 4
  %v1309 = vsel %vm400, %v1307, %v1308
  %v1310 = vrot.slane %v642, 4
  %v1311 = vrot.slane %v645, 4
  %v1312 = vsel %vm400, %v1310, %v1311
  %v1315 = vsel %vm744, %v1312, 0
  %v1317 = vsel %vm744, %v1311, 0
  %v1320 = vsel %vm749, %v1305, 0
  %v1323 = vsel %vm749, %v1306, 0
  %1325 = vmatpush.msra.mxu0 %v1295
  %1326 = vmatpush.msra.mxu0 %v1293
  %1327 = vmatpush.msra.mxu0 %v1291
  %1328 = vmatpush.msra.mxu0 %v1289
  %1329 = vmatpush.msra.mxu0 %v1287
  %1330 = vmatpush.msra.mxu0 %v1285
  %1331 = vmatpush.msra.mxu0 %v1283
  %1332 = vmatpush.msra.mxu0 %v1281
  %1333 = vmatpush.msra.mxu0 %v1279
  %1334 = vmatpush.msra.mxu0 %v1277
  %1335 = vmatpush.msra.mxu0 %v1275
  %1336 = vmatpush.msra.mxu0 %v1273
  %1337 = vmatpush.msra.mxu0 %v1271
  %1338 = vmatpush.msra.mxu0 %v1269
  %1339 = vmatpush.msra.mxu0 %v1267
  %1340 = vmatpush.msra.mxu0 %v1265
  %1341 = vmatmul.f32.gmra.mxu0 %v1309
  %v1342 = vpop.f32.mrf.mxu0
  %v1343 = vadd.f32 0.0, %v1342
  %1344 = vmatmul.f32.gmra.mxu0 %v1308
  %v1345 = vpop.f32.mrf.mxu0
  %v1346 = vadd.f32 0.0, %v1345
  %1347 = vdwg.mxu0
  %1348 = vmatpush.msra.mxu0 0.0
  %1349 = vmatpush.msra.mxu0 0.0
  %1350 = vmatpush.msra.mxu0 0.0
  %1351 = vmatpush.msra.mxu0 0.0
  %1352 = vmatpush.msra.mxu0 0.0
  %1353 = vmatpush.msra.mxu0 0.0
  %1354 = vmatpush.msra.mxu0 0.0
  %1355 = vmatpush.msra.mxu0 0.0
  %1356 = vmatpush.msra.mxu0 0.0
  %1357 = vmatpush.msra.mxu0 0.0
  %1358 = vmatpush.msra.mxu0 0.0
  %1359 = vmatpush.msra.mxu0 %v1320
  %1360 = vmatpush.msra.mxu0 %v1303
  %1361 = vmatpush.msra.mxu0 %v1301
  %1362 = vmatpush.msra.mxu0 %v1299
  %1363 = vmatpush.msra.mxu0 %v1297
  %1364 = vmatmul.f32.gmra.mxu0 %v1315
  %v1365 = vpop.f32.mrf.mxu0
  %v1366 = vadd.f32 %v1343, %v1365
  %1367 = vmatmul.f32.gmra.mxu0 %v1317
  %v1368 = vpop.f32.mrf.mxu0
  %v1369 = vadd.f32 %v1346, %v1368
  %1370 = vdwg.mxu0
  %1371 = vmatpush.msra.mxu0 %v1296
  %1372 = vmatpush.msra.mxu0 %v1294
  %1373 = vmatpush.msra.mxu0 %v1292
  %1374 = vmatpush.msra.mxu0 %v1290
  %1375 = vmatpush.msra.mxu0 %v1288
  %1376 = vmatpush.msra.mxu0 %v1286
  %1377 = vmatpush.msra.mxu0 %v1284
  %1378 = vmatpush.msra.mxu0 %v1282
  %1379 = vmatpush.msra.mxu0 %v1280
  %1380 = vmatpush.msra.mxu0 %v1278
  %1381 = vmatpush.msra.mxu0 %v1276
  %1382 = vmatpush.msra.mxu0 %v1274
  %1383 = vmatpush.msra.mxu0 %v1272
  %1384 = vmatpush.msra.mxu0 %v1270
  %1385 = vmatpush.msra.mxu0 %v1268
  %1386 = vmatpush.msra.mxu0 %v1266
  %1387 = vmatmul.f32.gmra.mxu0 %v1309
  %v1388 = vpop.f32.mrf.mxu0
  %v1389 = vadd.f32 0.0, %v1388
  %1390 = vmatmul.f32.gmra.mxu0 %v1308
  %v1391 = vpop.f32.mrf.mxu0
  %v1392 = vadd.f32 0.0, %v1391
  %1393 = vdwg.mxu0
  %1394 = vmatpush.msra.mxu0 0.0
  %1395 = vmatpush.msra.mxu0 0.0
  %1396 = vmatpush.msra.mxu0 0.0
  %1397 = vmatpush.msra.mxu0 0.0
  %1398 = vmatpush.msra.mxu0 0.0
  %1399 = vmatpush.msra.mxu0 0.0
  %1400 = vmatpush.msra.mxu0 0.0
  %1401 = vmatpush.msra.mxu0 0.0
  %1402 = vmatpush.msra.mxu0 0.0
  %1403 = vmatpush.msra.mxu0 0.0
  %1404 = vmatpush.msra.mxu0 0.0
  %1405 = vmatpush.msra.mxu0 %v1323
  %1406 = vmatpush.msra.mxu0 %v1304
  %1407 = vmatpush.msra.mxu0 %v1302
  %1408 = vmatpush.msra.mxu0 %v1300
  %1409 = vmatpush.msra.mxu0 %v1298
  %1410 = vmatmul.f32.gmra.mxu0 %v1315
  %v1411 = vpop.f32.mrf.mxu0
  %v1412 = vadd.f32 %v1389, %v1411
  %1413 = vmatmul.f32.gmra.mxu0 %v1317
  %v1414 = vpop.f32.mrf.mxu0
  %v1415 = vadd.f32 %v1392, %v1414
  %1416 = vdwg.mxu0
  %v1417 = vadd.f32 %v1260, %v1366
  %v1418 = vadd.f32 %v1261, %v1412
  %v1419 = vadd.f32 %v1262, %v1369
  %v1420 = vadd.f32 %v1263, %v1415
  %v1421 = vld [vmem:[%s5] sm:$0x3]
  %v1423 = vperm.slane %v1421, 0
  %v1424 = vperm.slane %v1421, 1
  %v1427 = vadd.f32 %v1417, %v1423
  %v1428 = vadd.f32 %v1418, %v1424
  %v1429 = vadd.f32 %v1419, %v1423
  %v1430 = vadd.f32 %v1420, %v1424
  %v1431 = vmax.f32 %v1427, 0.0
  %v1432 = vmax.f32 %v1428, 0.0
  %v1433 = vmax.f32 %v1429, 0.0
  %v1434 = vmax.f32 %v1430, 0.0
  %v1439 = vrot.slane %v1431, 1
  %v1440 = vrot.slane %v1433, 1
  %v1441 = vsel %vm68, %v1439, %v1440
  %v1442 = vrot.slane %v1432, 1
  %v1443 = vrot.slane %v1434, 1
  %v1444 = vsel %vm68, %v1442, %v1443
  %v1449 = vmax.f32 %v1431, %v1441
  %v1450 = vmax.f32 %v1432, %v1444
  %v1451 = vmax.f32 %v1433, %v1440
  %v1452 = vmax.f32 %v1434, %v1443
  %1457 = vrot.lane.b32.xlu0 %v1449, 112
  %v1458 = vpop.permute.xlu0 %1457
  %1459 = vrot.lane.b32.xlu0 %v1450, 112
  %v1460 = vpop.permute.xlu0 %1459
  %1461 = vrot.lane.b32.xlu0 %v1451, 112
  %v1462 = vpop.permute.xlu0 %1461
  %1463 = vrot.lane.b32.xlu0 %v1452, 112
  %v1464 = vpop.permute.xlu0 %1463
  %vm1465 = vcmask 916480
  %v1466 = vsel %vm1465, %v1458, %v1460
  %v1467 = vsel %vm1465, %v1462, %v1464
  %v1472 = vmax.f32 %v1449, %v1466
  %v1473 = vmax.f32 %v1450, %v1460
  %v1474 = vmax.f32 %v1451, %v1467
  %v1475 = vmax.f32 %v1452, %v1464
  %v1476 = vld [vmem:[%s7] sm:$0x1]
  %v1477 = vld [vmem:[%s6] sm:$0xff]
  %v1478 = vld [vmem:[%s6 + $0x8] sm:$0xff]
  %v1479 = vld [vmem:[%s6 + $0x10] sm:$0xff]
  %v1480 = vld [vmem:[%s6 + $0x18] sm:$0xff]
  %v1481 = vld [vmem:[%s6 + $0x20] sm:$0xff]
  %v1482 = vld [vmem:[%s6 + $0x28] sm:$0xff]
  %v1483 = vld [vmem:[%s6 + $0x30] sm:$0xff]
  %v1484 = vld [vmem:[%s6 + $0x38] sm:$0xff]
  %v1485 = vld [vmem:[%s6 + $0x40] sm:$0xff]
  %v1486 = vld [vmem:[%s6 + $0x48] sm:$0xff]
  %v1487 = vld [vmem:[%s6 + $0x50] sm:$0xff]
  %v1488 = vld [vmem:[%s6 + $0x58] sm:$0xff]
  %v1489 = vld [vmem:[%s6 + $0x60] sm:$0xff]
  %v1490 = vld [vmem:[%s6 + $0x68] sm:$0xff]
  %v1491 = vld [vmem:[%s6 + $0x70] sm:$0xff]
  %v1492 = vld [vmem:[%s6 + $0x78] sm:$0xff]
  %v1493 = vld [vmem:[%s6 + $0x80] sm:$0xff]
  %v1494 = vld [vmem:[%s6 + $0x88] sm:$0xff]
  %vm1495 = vcmask 130048
  %v1497 = vsel %vm1495, %v1473, 0
  %1499 = vmatpush.msra.mxu0 %v1492
  %1500 = vmatpush.msra.mxu0 %v1491
  %1501 = vmatpush.msra.mxu0 %v1490
  %1502 = vmatpush.msra.mxu0 %v1489
  %1503 = vmatpush.msra.mxu0 %v1488
  %1504 = vmatpush.msra.mxu0 %v1487
  %1505 = vmatpush.msra.mxu0 %v1486
  %1506 = vmatpush.msra.mxu0 %v1485
  %1507 = vmatpush.msra.mxu0 %v1484
  %1508 = vmatpush.msra.mxu0 %v1483
  %1509 = vmatpush.msra.mxu0 %v1482
  %1510 = vmatpush.msra.mxu0 %v1481
  %1511 = vmatpush.msra.mxu0 %v1480
  %1512 = vmatpush.msra.mxu0 %v1479
  %1513 = vmatpush.msra.mxu0 %v1478
  %1514 = vmatpush.msra.mxu0 %v1477
  %1515 = vmatmul.f32.gmra.mxu0 %v1472
  %v1516 = vpop.f32.mrf.mxu0
  %v1517 = vadd.f32 0.0, %v1516
  %1518 = vdwg.mxu0
  %1519 = vmatpush.msra.mxu0 0.0
  %1520 = vmatpush.msra.mxu0 0.0
  %1521 = vmatpush.msra.mxu0 0.0
  %1522 = vmatpush.msra.mxu0 0.0
  %1523 = vmatpush.msra.mxu0 0.0
  %1524 = vmatpush.msra.mxu0 0.0
  %1525 = vmatpush.msra.mxu0 0.0
  %1526 = vmatpush.msra.mxu0 0.0
  %1527 = vmatpush.msra.mxu0 0.0
  %1528 = vmatpush.msra.mxu0 0.0
  %1529 = vmatpush.msra.mxu0 0.0
  %1530 = vmatpush.msra.mxu0 0.0
  %1531 = vmatpush.msra.mxu0 0.0
  %1532 = vmatpush.msra.mxu0 0.0
  %1533 = vmatpush.msra.mxu0 %v1494
  %1534 = vmatpush.msra.mxu0 %v1493
  %1535 = vmatmul.f32.gmra.mxu0 %v1497
  %v1536 = vpop.f32.mrf.mxu0
  %v1537 = vadd.f32 %v1517, %v1536
  %1538 = vdwg.mxu0
  %v1539 = vadd.f32 %v1476, %v1537
  %s1540 = scalar_lea.vmem %s6, 144
  %v1541 = vld [vmem:[%s1540] sm:$0xff]
  %v1542 = vld [vmem:[%s1540 + $0x8] sm:$0xff]
  %v1543 = vld [vmem:[%s1540 + $0x10] sm:$0xff]
  %v1544 = vld [vmem:[%s1540 + $0x18] sm:$0xff]
  %v1545 = vld [vmem:[%s1540 + $0x20] sm:$0xff]
  %v1546 = vld [vmem:[%s1540 + $0x28] sm:$0xff]
  %v1547 = vld [vmem:[%s1540 + $0x30] sm:$0xff]
  %v1548 = vld [vmem:[%s1540 + $0x38] sm:$0xff]
  %v1549 = vld [vmem:[%s1540 + $0x40] sm:$0xff]
  %v1550 = vld [vmem:[%s1540 + $0x48] sm:$0xff]
  %v1551 = vld [vmem:[%s1540 + $0x50] sm:$0xff]
  %v1552 = vld [vmem:[%s1540 + $0x58] sm:$0xff]
  %v1553 = vld [vmem:[%s1540 + $0x60] sm:$0xff]
  %v1554 = vld [vmem:[%s1540 + $0x68] sm:$0xff]
  %v1555 = vld [vmem:[%s1540 + $0x70] sm:$0xff]
  %v1556 = vld [vmem:[%s1540 + $0x78] sm:$0xff]
  %v1557 = vld [vmem:[%s1540 + $0x80] sm:$0xff]
  %v1558 = vld [vmem:[%s1540 + $0x88] sm:$0xff]
  %v1560 = vrot.slane %v1472, 2
  %v1561 = vrot.slane %v1473, 2
  %v1563 = vsel %vm1495, %v1561, 0
  %1565 = vmatpush.msra.mxu0 %v1556
  %1566 = vmatpush.msra.mxu0 %v1555
  %1567 = vmatpush.msra.mxu0 %v1554
  %1568 = vmatpush.msra.mxu0 %v1553
  %1569 = vmatpush.msra.mxu0 %v1552
  %1570 = vmatpush.msra.mxu0 %v1551
  %1571 = vmatpush.msra.mxu0 %v1550
  %1572 = vmatpush.msra.mxu0 %v1549
  %1573 = vmatpush.msra.mxu0 %v1548
  %1574 = vmatpush.msra.mxu0 %v1547
  %1575 = vmatpush.msra.mxu0 %v1546
  %1576 = vmatpush.msra.mxu0 %v1545
  %1577 = vmatpush.msra.mxu0 %v1544
  %1578 = vmatpush.msra.mxu0 %v1543
  %1579 = vmatpush.msra.mxu0 %v1542
  %1580 = vmatpush.msra.mxu0 %v1541
  %1581 = vmatmul.f32.gmra.mxu0 %v1560
  %v1582 = vpop.f32.mrf.mxu0
  %v1583 = vadd.f32 0.0, %v1582
  %1584 = vdwg.mxu0
  %1585 = vmatpush.msra.mxu0 0.0
  %1586 = vmatpush.msra.mxu0 0.0
  %1587 = vmatpush.msra.mxu0 0.0
  %1588 = vmatpush.msra.mxu0 0.0
  %1589 = vmatpush.msra.mxu0 0.0
  %1590 = vmatpush.msra.mxu0 0.0
  %1591 = vmatpush.msra.mxu0 0.0
  %1592 = vmatpush.msra.mxu0 0.0
  %1593 = vmatpush.msra.mxu0 0.0
  %1594 = vmatpush.msra.mxu0 0.0
  %1595 = vmatpush.msra.mxu0 0.0
  %1596 = vmatpush.msra.mxu0 0.0
  %1597 = vmatpush.msra.mxu0 0.0
  %1598 = vmatpush.msra.mxu0 0.0
  %1599 = vmatpush.msra.mxu0 %v1558
  %1600 = vmatpush.msra.mxu0 %v1557
  %1601 = vmatmul.f32.gmra.mxu0 %v1563
  %v1602 = vpop.f32.mrf.mxu0
  %v1603 = vadd.f32 %v1583, %v1602
  %1604 = vdwg.mxu0
  %v1605 = vadd.f32 %v1539, %v1603
  %s1606 = scalar_lea.vmem %s6, 288
  %v1607 = vld [vmem:[%s1606] sm:$0xff]
  %v1608 = vld [vmem:[%s1606 + $0x8] sm:$0xff]
  %v1609 = vld [vmem:[%s1606 + $0x10] sm:$0xff]
  %v1610 = vld [vmem:[%s1606 + $0x18] sm:$0xff]
  %v1611 = vld [vmem:[%s1606 + $0x20] sm:$0xff]
  %v1612 = vld [vmem:[%s1606 + $0x28] sm:$0xff]
  %v1613 = vld [vmem:[%s1606 + $0x30] sm:$0xff]
  %v1614 = vld [vmem:[%s1606 + $0x38] sm:$0xff]
  %v1615 = vld [vmem:[%s1606 + $0x40] sm:$0xff]
  %v1616 = vld [vmem:[%s1606 + $0x48] sm:$0xff]
  %v1617 = vld [vmem:[%s1606 + $0x50] sm:$0xff]
  %v1618 = vld [vmem:[%s1606 + $0x58] sm:$0xff]
  %v1619 = vld [vmem:[%s1606 + $0x60] sm:$0xff]
  %v1620 = vld [vmem:[%s1606 + $0x68] sm:$0xff]
  %v1621 = vld [vmem:[%s1606 + $0x70] sm:$0xff]
  %v1622 = vld [vmem:[%s1606 + $0x78] sm:$0xff]
  %v1623 = vld [vmem:[%s1606 + $0x80] sm:$0xff]
  %v1624 = vld [vmem:[%s1606 + $0x88] sm:$0xff]
  %v1625 = vrot.slane %v1472, 4
  %v1626 = vrot.slane %v1473, 4
  %v1628 = vsel %vm1495, %v1626, 0
  %1630 = vmatpush.msra.mxu0 %v1622
  %1631 = vmatpush.msra.mxu0 %v1621
  %1632 = vmatpush.msra.mxu0 %v1620
  %1633 = vmatpush.msra.mxu0 %v1619
  %1634 = vmatpush.msra.mxu0 %v1618
  %1635 = vmatpush.msra.mxu0 %v1617
  %1636 = vmatpush.msra.mxu0 %v1616
  %1637 = vmatpush.msra.mxu0 %v1615
  %1638 = vmatpush.msra.mxu0 %v1614
  %1639 = vmatpush.msra.mxu0 %v1613
  %1640 = vmatpush.msra.mxu0 %v1612
  %1641 = vmatpush.msra.mxu0 %v1611
  %1642 = vmatpush.msra.mxu0 %v1610
  %1643 = vmatpush.msra.mxu0 %v1609
  %1644 = vmatpush.msra.mxu0 %v1608
  %1645 = vmatpush.msra.mxu0 %v1607
  %1646 = vmatmul.f32.gmra.mxu0 %v1625
  %v1647 = vpop.f32.mrf.mxu0
  %v1648 = vadd.f32 0.0, %v1647
  %1649 = vdwg.mxu0
  %1650 = vmatpush.msra.mxu0 0.0
  %1651 = vmatpush.msra.mxu0 0.0
  %1652 = vmatpush.msra.mxu0 0.0
  %1653 = vmatpush.msra.mxu0 0.0
  %1654 = vmatpush.msra.mxu0 0.0
  %1655 = vmatpush.msra.mxu0 0.0
  %1656 = vmatpush.msra.mxu0 0.0
  %1657 = vmatpush.msra.mxu0 0.0
  %1658 = vmatpush.msra.mxu0 0.0
  %1659 = vmatpush.msra.mxu0 0.0
  %1660 = vmatpush.msra.mxu0 0.0
  %1661 = vmatpush.msra.mxu0 0.0
  %1662 = vmatpush.msra.mxu0 0.0
  %1663 = vmatpush.msra.mxu0 0.0
  %1664 = vmatpush.msra.mxu0 %v1624
  %1665 = vmatpush.msra.mxu0 %v1623
  %1666 = vmatmul.f32.gmra.mxu0 %v1628
  %v1667 = vpop.f32.mrf.mxu0
  %v1668 = vadd.f32 %v1648, %v1667
  %1669 = vdwg.mxu0
  %v1670 = vadd.f32 %v1605, %v1668
  %s1671 = scalar_lea.vmem %s6, 432
  %v1672 = vld [vmem:[%s1671] sm:$0xff]
  %v1673 = vld [vmem:[%s1671 + $0x8] sm:$0xff]
  %v1674 = vld [vmem:[%s1671 + $0x10] sm:$0xff]
  %v1675 = vld [vmem:[%s1671 + $0x18] sm:$0xff]
  %v1676 = vld [vmem:[%s1671 + $0x20] sm:$0xff]
  %v1677 = vld [vmem:[%s1671 + $0x28] sm:$0xff]
  %v1678 = vld [vmem:[%s1671 + $0x30] sm:$0xff]
  %v1679 = vld [vmem:[%s1671 + $0x38] sm:$0xff]
  %v1680 = vld [vmem:[%s1671 + $0x40] sm:$0xff]
  %v1681 = vld [vmem:[%s1671 + $0x48] sm:$0xff]
  %v1682 = vld [vmem:[%s1671 + $0x50] sm:$0xff]
  %v1683 = vld [vmem:[%s1671 + $0x58] sm:$0xff]
  %v1684 = vld [vmem:[%s1671 + $0x60] sm:$0xff]
  %v1685 = vld [vmem:[%s1671 + $0x68] sm:$0xff]
  %v1686 = vld [vmem:[%s1671 + $0x70] sm:$0xff]
  %v1687 = vld [vmem:[%s1671 + $0x78] sm:$0xff]
  %v1688 = vld [vmem:[%s1671 + $0x80] sm:$0xff]
  %v1689 = vld [vmem:[%s1671 + $0x88] sm:$0xff]
  %v1690 = vrot.slane %v1472, 6
  %v1691 = vrot.slane %v1473, 6
  %v1693 = vsel %vm1495, %v1691, 0
  %1695 = vmatpush.msra.mxu0 %v1687
  %1696 = vmatpush.msra.mxu0 %v1686
  %1697 = vmatpush.msra.mxu0 %v1685
  %1698 = vmatpush.msra.mxu0 %v1684
  %1699 = vmatpush.msra.mxu0 %v1683
  %1700 = vmatpush.msra.mxu0 %v1682
  %1701 = vmatpush.msra.mxu0 %v1681
  %1702 = vmatpush.msra.mxu0 %v1680
  %1703 = vmatpush.msra.mxu0 %v1679
  %1704 = vmatpush.msra.mxu0 %v1678
  %1705 = vmatpush.msra.mxu0 %v1677
  %1706 = vmatpush.msra.mxu0 %v1676
  %1707 = vmatpush.msra.mxu0 %v1675
  %1708 = vmatpush.msra.mxu0 %v1674
  %1709 = vmatpush.msra.mxu0 %v1673
  %1710 = vmatpush.msra.mxu0 %v1672
  %1711 = vmatmul.f32.gmra.mxu0 %v1690
  %v1712 = vpop.f32.mrf.mxu0
  %v1713 = vadd.f32 0.0, %v1712
  %1714 = vdwg.mxu0
  %1715 = vmatpush.msra.mxu0 0.0
  %1716 = vmatpush.msra.mxu0 0.0
  %1717 = vmatpush.msra.mxu0 0.0
  %1718 = vmatpush.msra.mxu0 0.0
  %1719 = vmatpush.msra.mxu0 0.0
  %1720 = vmatpush.msra.mxu0 0.0
  %1721 = vmatpush.msra.mxu0 0.0
  %1722 = vmatpush.msra.mxu0 0.0
  %1723 = vmatpush.msra.mxu0 0.0
  %1724 = vmatpush.msra.mxu0 0.0
  %1725 = vmatpush.msra.mxu0 0.0
  %1726 = vmatpush.msra.mxu0 0.0
  %1727 = vmatpush.msra.mxu0 0.0
  %1728 = vmatpush.msra.mxu0 0.0
  %1729 = vmatpush.msra.mxu0 %v1689
  %1730 = vmatpush.msra.mxu0 %v1688
  %1731 = vmatmul.f32.gmra.mxu0 %v1693
  %v1732 = vpop.f32.mrf.mxu0
  %v1733 = vadd.f32 %v1713, %v1732
  %1734 = vdwg.mxu0
  %v1735 = vadd.f32 %v1670, %v1733
  %s1736 = scalar_lea.vmem %s6, 576
  %v1737 = vld [vmem:[%s1736] sm:$0xff]
  %v1738 = vld [vmem:[%s1736 + $0x8] sm:$0xff]
  %v1739 = vld [vmem:[%s1736 + $0x10] sm:$0xff]
  %v1740 = vld [vmem:[%s1736 + $0x18] sm:$0xff]
  %v1741 = vld [vmem:[%s1736 + $0x20] sm:$0xff]
  %v1742 = vld [vmem:[%s1736 + $0x28] sm:$0xff]
  %v1743 = vld [vmem:[%s1736 + $0x30] sm:$0xff]
  %v1744 = vld [vmem:[%s1736 + $0x38] sm:$0xff]
  %v1745 = vld [vmem:[%s1736 + $0x40] sm:$0xff]
  %v1746 = vld [vmem:[%s1736 + $0x48] sm:$0xff]
  %v1747 = vld [vmem:[%s1736 + $0x50] sm:$0xff]
  %v1748 = vld [vmem:[%s1736 + $0x58] sm:$0xff]
  %v1749 = vld [vmem:[%s1736 + $0x60] sm:$0xff]
  %v1750 = vld [vmem:[%s1736 + $0x68] sm:$0xff]
  %v1751 = vld [vmem:[%s1736 + $0x70] sm:$0xff]
  %v1752 = vld [vmem:[%s1736 + $0x78] sm:$0xff]
  %v1753 = vld [vmem:[%s1736 + $0x80] sm:$0xff]
  %v1754 = vld [vmem:[%s1736 + $0x88] sm:$0xff]
  %v1756 = vsel %vm1495, %v1475, 0
  %1758 = vmatpush.msra.mxu0 %v1752
  %1759 = vmatpush.msra.mxu0 %v1751
  %1760 = vmatpush.msra.mxu0 %v1750
  %1761 = vmatpush.msra.mxu0 %v1749
  %1762 = vmatpush.msra.mxu0 %v1748
  %1763 = vmatpush.msra.mxu0 %v1747
  %1764 = vmatpush.msra.mxu0 %v1746
  %1765 = vmatpush.msra.mxu0 %v1745
  %1766 = vmatpush.msra.mxu0 %v1744
  %1767 = vmatpush.msra.mxu0 %v1743
  %1768 = vmatpush.msra.mxu0 %v1742
  %1769 = vmatpush.msra.mxu0 %v1741
  %1770 = vmatpush.msra.mxu0 %v1740
  %1771 = vmatpush.msra.mxu0 %v1739
  %1772 = vmatpush.msra.mxu0 %v1738
  %1773 = vmatpush.msra.mxu0 %v1737
  %1774 = vmatmul.f32.gmra.mxu0 %v1474
  %v1775 = vpop.f32.mrf.mxu0
  %v1776 = vadd.f32 0.0, %v1775
  %1777 = vdwg.mxu0
  %1778 = vmatpush.msra.mxu0 0.0
  %1779 = vmatpush.msra.mxu0 0.0
  %1780 = vmatpush.msra.mxu0 0.0
  %1781 = vmatpush.msra.mxu0 0.0
  %1782 = vmatpush.msra.mxu0 0.0
  %1783 = vmatpush.msra.mxu0 0.0
  %1784 = vmatpush.msra.mxu0 0.0
  %1785 = vmatpush.msra.mxu0 0.0
  %1786 = vmatpush.msra.mxu0 0.0
  %1787 = vmatpush.msra.mxu0 0.0
  %1788 = vmatpush.msra.mxu0 0.0
  %1789 = vmatpush.msra.mxu0 0.0
  %1790 = vmatpush.msra.mxu0 0.0
  %1791 = vmatpush.msra.mxu0 0.0
  %1792 = vmatpush.msra.mxu0 %v1754
  %1793 = vmatpush.msra.mxu0 %v1753
  %1794 = vmatmul.f32.gmra.mxu0 %v1756
  %v1795 = vpop.f32.mrf.mxu0
  %v1796 = vadd.f32 %v1776, %v1795
  %1797 = vdwg.mxu0
  %v1798 = vadd.f32 %v1735, %v1796
  %v1799 = vmax.f32 %v1798, 0.0
  %s1800 = scalar_lea.vmem %s0, 32
  %v1801 = vld [vmem:[%s1800] sm:$0xff]
  %v1802 = vld [vmem:[%s1800 + $0x8] sm:$0xff]
  %v1803 = vld [vmem:[%s1800 + $0x10] sm:$0xff]
  %v1804 = vld [vmem:[%s1800 + $0x18] sm:$0xff]
  %v1809 = vrot.slane %v1801, 1
  %v1810 = vrot.slane %v1802, 1
  %v1811 = vsel %vm68, %v1809, %v1810
  %v1812 = vrot.slane %v1803, 1
  %v1813 = vsel %vm68, %v1810, %v1812
  %v1814 = vrot.slane %v1804, 1
  %v1815 = vsel %vm68, %v1812, %v1814
  %v1816 = vsel %vm76, %v1811, 0
  %v1818 = vsel %vm76, %v1813, 0
  %v1820 = vsel %vm76, %v1815, 0
  %v1822 = vsel %vm76, %v1814, 0
  %1824 = vmatpush.msra.mxu0 0.0
  %1825 = vmatpush.msra.mxu0 0.0
  %1826 = vmatpush.msra.mxu0 0.0
  %1827 = vmatpush.msra.mxu0 0.0
  %1828 = vmatpush.msra.mxu0 0.0
  %1829 = vmatpush.msra.mxu0 0.0
  %1830 = vmatpush.msra.mxu0 0.0
  %1831 = vmatpush.msra.mxu0 0.0
  %1832 = vmatpush.msra.mxu0 0.0
  %1833 = vmatpush.msra.mxu0 0.0
  %1834 = vmatpush.msra.mxu0 0.0
  %1835 = vmatpush.msra.mxu0 0.0
  %1836 = vmatpush.msra.mxu0 %v62
  %1837 = vmatpush.msra.mxu0 %v60
  %1838 = vmatpush.msra.mxu0 %v58
  %1839 = vmatpush.msra.mxu0 %v56
  %1840 = vmatmul.f32.gmra.mxu0 %v1816
  %v1841 = vpop.f32.mrf.mxu0
  %v1842 = vadd.f32 0.0, %v1841
  %1843 = vmatmul.f32.gmra.mxu0 %v1818
  %v1844 = vpop.f32.mrf.mxu0
  %v1845 = vadd.f32 0.0, %v1844
  %1846 = vmatmul.f32.gmra.mxu0 %v1820
  %v1847 = vpop.f32.mrf.mxu0
  %v1848 = vadd.f32 0.0, %v1847
  %1849 = vmatmul.f32.gmra.mxu0 %v1822
  %v1850 = vpop.f32.mrf.mxu0
  %v1851 = vadd.f32 0.0, %v1850
  %1852 = vdwg.mxu0
  %1853 = vmatpush.msra.mxu0 0.0
  %1854 = vmatpush.msra.mxu0 0.0
  %1855 = vmatpush.msra.mxu0 0.0
  %1856 = vmatpush.msra.mxu0 0.0
  %1857 = vmatpush.msra.mxu0 0.0
  %1858 = vmatpush.msra.mxu0 0.0
  %1859 = vmatpush.msra.mxu0 0.0
  %1860 = vmatpush.msra.mxu0 0.0
  %1861 = vmatpush.msra.mxu0 0.0
  %1862 = vmatpush.msra.mxu0 0.0
  %1863 = vmatpush.msra.mxu0 0.0
  %1864 = vmatpush.msra.mxu0 0.0
  %1865 = vmatpush.msra.mxu0 %v63
  %1866 = vmatpush.msra.mxu0 %v61
  %1867 = vmatpush.msra.mxu0 %v59
  %1868 = vmatpush.msra.mxu0 %v57
  %1869 = vmatmul.f32.gmra.mxu0 %v1816
  %v1870 = vpop.f32.mrf.mxu0
  %v1871 = vadd.f32 0.0, %v1870
  %1872 = vmatmul.f32.gmra.mxu0 %v1818
  %v1873 = vpop.f32.mrf.mxu0
  %v1874 = vadd.f32 0.0, %v1873
  %1875 = vmatmul.f32.gmra.mxu0 %v1820
  %v1876 = vpop.f32.mrf.mxu0
  %v1877 = vadd.f32 0.0, %v1876
  %1878 = vmatmul.f32.gmra.mxu0 %v1822
  %v1879 = vpop.f32.mrf.mxu0
  %v1880 = vadd.f32 0.0, %v1879
  %1881 = vdwg.mxu0
  %v1882 = vsel %vm76, %v1801, 0
  %v1884 = vsel %vm76, %v1802, 0
  %v1886 = vsel %vm76, %v1803, 0
  %v1888 = vsel %vm76, %v1804, 0
  %1890 = vmatpush.msra.mxu0 0.0
  %1891 = vmatpush.msra.mxu0 0.0
  %1892 = vmatpush.msra.mxu0 0.0
  %1893 = vmatpush.msra.mxu0 0.0
  %1894 = vmatpush.msra.mxu0 0.0
  %1895 = vmatpush.msra.mxu0 0.0
  %1896 = vmatpush.msra.mxu0 0.0
  %1897 = vmatpush.msra.mxu0 0.0
  %1898 = vmatpush.msra.mxu0 0.0
  %1899 = vmatpush.msra.mxu0 0.0
  %1900 = vmatpush.msra.mxu0 0.0
  %1901 = vmatpush.msra.mxu0 0.0
  %1902 = vmatpush.msra.mxu0 %v53
  %1903 = vmatpush.msra.mxu0 %v51
  %1904 = vmatpush.msra.mxu0 %v49
  %1905 = vmatpush.msra.mxu0 %v47
  %1906 = vmatmul.f32.gmra.mxu0 %v1882
  %v1907 = vpop.f32.mrf.mxu0
  %v1908 = vadd.f32 %v1842, %v1907
  %1909 = vmatmul.f32.gmra.mxu0 %v1884
  %v1910 = vpop.f32.mrf.mxu0
  %v1911 = vadd.f32 %v1845, %v1910
  %1912 = vmatmul.f32.gmra.mxu0 %v1886
  %v1913 = vpop.f32.mrf.mxu0
  %v1914 = vadd.f32 %v1848, %v1913
  %1915 = vmatmul.f32.gmra.mxu0 %v1888
  %v1916 = vpop.f32.mrf.mxu0
  %v1917 = vadd.f32 %v1851, %v1916
  %1918 = vdwg.mxu0
  %1919 = vmatpush.msra.mxu0 0.0
  %1920 = vmatpush.msra.mxu0 0.0
  %1921 = vmatpush.msra.mxu0 0.0
  %1922 = vmatpush.msra.mxu0 0.0
  %1923 = vmatpush.msra.mxu0 0.0
  %1924 = vmatpush.msra.mxu0 0.0
  %1925 = vmatpush.msra.mxu0 0.0
  %1926 = vmatpush.msra.mxu0 0.0
  %1927 = vmatpush.msra.mxu0 0.0
  %1928 = vmatpush.msra.mxu0 0.0
  %1929 = vmatpush.msra.mxu0 0.0
  %1930 = vmatpush.msra.mxu0 0.0
  %1931 = vmatpush.msra.mxu0 %v54
  %1932 = vmatpush.msra.mxu0 %v52
  %1933 = vmatpush.msra.mxu0 %v50
  %1934 = vmatpush.msra.mxu0 %v48
  %1935 = vmatmul.f32.gmra.mxu0 %v1882
  %v1936 = vpop.f32.mrf.mxu0
  %v1937 = vadd.f32 %v1871, %v1936
  %1938 = vmatmul.f32.gmra.mxu0 %v1884
  %v1939 = vpop.f32.mrf.mxu0
  %v1940 = vadd.f32 %v1874, %v1939
  %1941 = vmatmul.f32.gmra.mxu0 %v1886
  %v1942 = vpop.f32.mrf.mxu0
  %v1943 = vadd.f32 %v1877, %v1942
  %1944 = vmatmul.f32.gmra.mxu0 %v1888
  %v1945 = vpop.f32.mrf.mxu0
  %v1946 = vadd.f32 %v1880, %v1945
  %1947 = vdwg.mxu0
  %v1948 = vrot.slane %v1801, 2
  %v1949 = vrot.slane %v1802, 2
  %v1950 = vsel %vm218, %v1948, %v1949
  %v1951 = vrot.slane %v1803, 2
  %v1952 = vsel %vm218, %v1949, %v1951
  %v1953 = vrot.slane %v1804, 2
  %v1954 = vsel %vm218, %v1951, %v1953
  %v1955 = vsel %vm76, %v1950, 0
  %v1957 = vsel %vm76, %v1952, 0
  %v1959 = vsel %vm76, %v1954, 0
  %v1961 = vsel %vm76, %v1953, 0
  %1963 = vmatpush.msra.mxu0 0.0
  %1964 = vmatpush.msra.mxu0 0.0
  %1965 = vmatpush.msra.mxu0 0.0
  %1966 = vmatpush.msra.mxu0 0.0
  %1967 = vmatpush.msra.mxu0 0.0
  %1968 = vmatpush.msra.mxu0 0.0
  %1969 = vmatpush.msra.mxu0 0.0
  %1970 = vmatpush.msra.mxu0 0.0
  %1971 = vmatpush.msra.mxu0 0.0
  %1972 = vmatpush.msra.mxu0 0.0
  %1973 = vmatpush.msra.mxu0 0.0
  %1974 = vmatpush.msra.mxu0 0.0
  %1975 = vmatpush.msra.mxu0 %v216
  %1976 = vmatpush.msra.mxu0 %v214
  %1977 = vmatpush.msra.mxu0 %v212
  %1978 = vmatpush.msra.mxu0 %v210
  %1979 = vmatmul.f32.gmra.mxu0 %v1955
  %v1980 = vpop.f32.mrf.mxu0
  %v1981 = vadd.f32 0.0, %v1980
  %1982 = vmatmul.f32.gmra.mxu0 %v1957
  %v1983 = vpop.f32.mrf.mxu0
  %v1984 = vadd.f32 0.0, %v1983
  %1985 = vmatmul.f32.gmra.mxu0 %v1959
  %v1986 = vpop.f32.mrf.mxu0
  %v1987 = vadd.f32 0.0, %v1986
  %1988 = vmatmul.f32.gmra.mxu0 %v1961
  %v1989 = vpop.f32.mrf.mxu0
  %v1990 = vadd.f32 0.0, %v1989
  %1991 = vdwg.mxu0
  %1992 = vmatpush.msra.mxu0 0.0
  %1993 = vmatpush.msra.mxu0 0.0
  %1994 = vmatpush.msra.mxu0 0.0
  %1995 = vmatpush.msra.mxu0 0.0
  %1996 = vmatpush.msra.mxu0 0.0
  %1997 = vmatpush.msra.mxu0 0.0
  %1998 = vmatpush.msra.mxu0 0.0
  %1999 = vmatpush.msra.mxu0 0.0
  %2000 = vmatpush.msra.mxu0 0.0
  %2001 = vmatpush.msra.mxu0 0.0
  %2002 = vmatpush.msra.mxu0 0.0
  %2003 = vmatpush.msra.mxu0 0.0
  %2004 = vmatpush.msra.mxu0 %v217
  %2005 = vmatpush.msra.mxu0 %v215
  %2006 = vmatpush.msra.mxu0 %v213
  %2007 = vmatpush.msra.mxu0 %v211
  %2008 = vmatmul.f32.gmra.mxu0 %v1955
  %v2009 = vpop.f32.mrf.mxu0
  %v2010 = vadd.f32 0.0, %v2009
  %2011 = vmatmul.f32.gmra.mxu0 %v1957
  %v2012 = vpop.f32.mrf.mxu0
  %v2013 = vadd.f32 0.0, %v2012
  %2014 = vmatmul.f32.gmra.mxu0 %v1959
  %v2015 = vpop.f32.mrf.mxu0
  %v2016 = vadd.f32 0.0, %v2015
  %2017 = vmatmul.f32.gmra.mxu0 %v1961
  %v2018 = vpop.f32.mrf.mxu0
  %v2019 = vadd.f32 0.0, %v2018
  %2020 = vdwg.mxu0
  %v2021 = vadd.f32 %v1908, %v1981
  %v2022 = vadd.f32 %v1937, %v2010
  %v2023 = vadd.f32 %v1911, %v1984
  %v2024 = vadd.f32 %v1940, %v2013
  %v2025 = vadd.f32 %v1914, %v1987
  %v2026 = vadd.f32 %v1943, %v2016
  %v2027 = vadd.f32 %v1917, %v1990
  %v2028 = vadd.f32 %v1946, %v2019
  %v2029 = vrot.slane %v1801, 3
  %v2030 = vrot.slane %v1802, 3
  %v2031 = vsel %vm309, %v2029, %v2030
  %v2032 = vrot.slane %v1803, 3
  %v2033 = vsel %vm309, %v2030, %v2032
  %v2034 = vrot.slane %v1804, 3
  %v2035 = vsel %vm309, %v2032, %v2034
  %v2036 = vsel %vm76, %v2031, 0
  %v2038 = vsel %vm76, %v2033, 0
  %v2040 = vsel %vm76, %v2035, 0
  %v2042 = vsel %vm76, %v2034, 0
  %2044 = vmatpush.msra.mxu0 0.0
  %2045 = vmatpush.msra.mxu0 0.0
  %2046 = vmatpush.msra.mxu0 0.0
  %2047 = vmatpush.msra.mxu0 0.0
  %2048 = vmatpush.msra.mxu0 0.0
  %2049 = vmatpush.msra.mxu0 0.0
  %2050 = vmatpush.msra.mxu0 0.0
  %2051 = vmatpush.msra.mxu0 0.0
  %2052 = vmatpush.msra.mxu0 0.0
  %2053 = vmatpush.msra.mxu0 0.0
  %2054 = vmatpush.msra.mxu0 0.0
  %2055 = vmatpush.msra.mxu0 0.0
  %2056 = vmatpush.msra.mxu0 %v307
  %2057 = vmatpush.msra.mxu0 %v305
  %2058 = vmatpush.msra.mxu0 %v303
  %2059 = vmatpush.msra.mxu0 %v301
  %2060 = vmatmul.f32.gmra.mxu0 %v2036
  %v2061 = vpop.f32.mrf.mxu0
  %v2062 = vadd.f32 0.0, %v2061
  %2063 = vmatmul.f32.gmra.mxu0 %v2038
  %v2064 = vpop.f32.mrf.mxu0
  %v2065 = vadd.f32 0.0, %v2064
  %2066 = vmatmul.f32.gmra.mxu0 %v2040
  %v2067 = vpop.f32.mrf.mxu0
  %v2068 = vadd.f32 0.0, %v2067
  %2069 = vmatmul.f32.gmra.mxu0 %v2042
  %v2070 = vpop.f32.mrf.mxu0
  %v2071 = vadd.f32 0.0, %v2070
  %2072 = vdwg.mxu0
  %2073 = vmatpush.msra.mxu0 0.0
  %2074 = vmatpush.msra.mxu0 0.0
  %2075 = vmatpush.msra.mxu0 0.0
  %2076 = vmatpush.msra.mxu0 0.0
  %2077 = vmatpush.msra.mxu0 0.0
  %2078 = vmatpush.msra.mxu0 0.0
  %2079 = vmatpush.msra.mxu0 0.0
  %2080 = vmatpush.msra.mxu0 0.0
  %2081 = vmatpush.msra.mxu0 0.0
  %2082 = vmatpush.msra.mxu0 0.0
  %2083 = vmatpush.msra.mxu0 0.0
  %2084 = vmatpush.msra.mxu0 0.0
  %2085 = vmatpush.msra.mxu0 %v308
  %2086 = vmatpush.msra.mxu0 %v306
  %2087 = vmatpush.msra.mxu0 %v304
  %2088 = vmatpush.msra.mxu0 %v302
  %2089 = vmatmul.f32.gmra.mxu0 %v2036
  %v2090 = vpop.f32.mrf.mxu0
  %v2091 = vadd.f32 0.0, %v2090
  %2092 = vmatmul.f32.gmra.mxu0 %v2038
  %v2093 = vpop.f32.mrf.mxu0
  %v2094 = vadd.f32 0.0, %v2093
  %2095 = vmatmul.f32.gmra.mxu0 %v2040
  %v2096 = vpop.f32.mrf.mxu0
  %v2097 = vadd.f32 0.0, %v2096
  %2098 = vmatmul.f32.gmra.mxu0 %v2042
  %v2099 = vpop.f32.mrf.mxu0
  %v2100 = vadd.f32 0.0, %v2099
  %2101 = vdwg.mxu0
  %v2102 = vadd.f32 %v2021, %v2062
  %v2103 = vadd.f32 %v2022, %v2091
  %v2104 = vadd.f32 %v2023, %v2065
  %v2105 = vadd.f32 %v2024, %v2094
  %v2106 = vadd.f32 %v2025, %v2068
  %v2107 = vadd.f32 %v2026, %v2097
  %v2108 = vadd.f32 %v2027, %v2071
  %v2109 = vadd.f32 %v2028, %v2100
  %v2110 = vrot.slane %v1801, 4
  %v2111 = vrot.slane %v1802, 4
  %v2112 = vsel %vm400, %v2110, %v2111
  %v2113 = vrot.slane %v1803, 4
  %v2114 = vsel %vm400, %v2111, %v2113
  %v2115 = vrot.slane %v1804, 4
  %v2116 = vsel %vm400, %v2113, %v2115
  %v2117 = vsel %vm76, %v2112, 0
  %v2119 = vsel %vm76, %v2114, 0
  %v2121 = vsel %vm76, %v2116, 0
  %v2123 = vsel %vm76, %v2115, 0
  %2125 = vmatpush.msra.mxu0 0.0
  %2126 = vmatpush.msra.mxu0 0.0
  %2127 = vmatpush.msra.mxu0 0.0
  %2128 = vmatpush.msra.mxu0 0.0
  %2129 = vmatpush.msra.mxu0 0.0
  %2130 = vmatpush.msra.mxu0 0.0
  %2131 = vmatpush.msra.mxu0 0.0
  %2132 = vmatpush.msra.mxu0 0.0
  %2133 = vmatpush.msra.mxu0 0.0
  %2134 = vmatpush.msra.mxu0 0.0
  %2135 = vmatpush.msra.mxu0 0.0
  %2136 = vmatpush.msra.mxu0 0.0
  %2137 = vmatpush.msra.mxu0 %v398
  %2138 = vmatpush.msra.mxu0 %v396
  %2139 = vmatpush.msra.mxu0 %v394
  %2140 = vmatpush.msra.mxu0 %v392
  %2141 = vmatmul.f32.gmra.mxu0 %v2117
  %v2142 = vpop.f32.mrf.mxu0
  %v2143 = vadd.f32 0.0, %v2142
  %2144 = vmatmul.f32.gmra.mxu0 %v2119
  %v2145 = vpop.f32.mrf.mxu0
  %v2146 = vadd.f32 0.0, %v2145
  %2147 = vmatmul.f32.gmra.mxu0 %v2121
  %v2148 = vpop.f32.mrf.mxu0
  %v2149 = vadd.f32 0.0, %v2148
  %2150 = vmatmul.f32.gmra.mxu0 %v2123
  %v2151 = vpop.f32.mrf.mxu0
  %v2152 = vadd.f32 0.0, %v2151
  %2153 = vdwg.mxu0
  %2154 = vmatpush.msra.mxu0 0.0
  %2155 = vmatpush.msra.mxu0 0.0
  %2156 = vmatpush.msra.mxu0 0.0
  %2157 = vmatpush.msra.mxu0 0.0
  %2158 = vmatpush.msra.mxu0 0.0
  %2159 = vmatpush.msra.mxu0 0.0
  %2160 = vmatpush.msra.mxu0 0.0
  %2161 = vmatpush.msra.mxu0 0.0
  %2162 = vmatpush.msra.mxu0 0.0
  %2163 = vmatpush.msra.mxu0 0.0
  %2164 = vmatpush.msra.mxu0 0.0
  %2165 = vmatpush.msra.mxu0 0.0
  %2166 = vmatpush.msra.mxu0 %v399
  %2167 = vmatpush.msra.mxu0 %v397
  %2168 = vmatpush.msra.mxu0 %v395
  %2169 = vmatpush.msra.mxu0 %v393
  %2170 = vmatmul.f32.gmra.mxu0 %v2117
  %v2171 = vpop.f32.mrf.mxu0
  %v2172 = vadd.f32 0.0, %v2171
  %2173 = vmatmul.f32.gmra.mxu0 %v2119
  %v2174 = vpop.f32.mrf.mxu0
  %v2175 = vadd.f32 0.0, %v2174
  %2176 = vmatmul.f32.gmra.mxu0 %v2121
  %v2177 = vpop.f32.mrf.mxu0
  %v2178 = vadd.f32 0.0, %v2177
  %2179 = vmatmul.f32.gmra.mxu0 %v2123
  %v2180 = vpop.f32.mrf.mxu0
  %v2181 = vadd.f32 0.0, %v2180
  %2182 = vdwg.mxu0
  %v2183 = vadd.f32 %v2102, %v2143
  %v2184 = vadd.f32 %v2103, %v2172
  %v2185 = vadd.f32 %v2104, %v2146
  %v2186 = vadd.f32 %v2105, %v2175
  %v2187 = vadd.f32 %v2106, %v2149
  %v2188 = vadd.f32 %v2107, %v2178
  %v2189 = vadd.f32 %v2108, %v2152
  %v2190 = vadd.f32 %v2109, %v2181
  %v2191 = vadd.f32 %v2183, %v484
  %v2192 = vadd.f32 %v2184, %v485
  %v2193 = vadd.f32 %v2185, %v484
  %v2194 = vadd.f32 %v2186, %v485
  %v2195 = vadd.f32 %v2187, %v484
  %v2196 = vadd.f32 %v2188, %v485
  %v2197 = vadd.f32 %v2189, %v484
  %v2198 = vadd.f32 %v2190, %v485
  %v2199 = vmax.f32 %v2191, 0.0
  %v2200 = vmax.f32 %v2192, 0.0
  %v2201 = vmax.f32 %v2193, 0.0
  %v2202 = vmax.f32 %v2194, 0.0
  %v2203 = vmax.f32 %v2195, 0.0
  %v2204 = vmax.f32 %v2196, 0.0
  %v2205 = vmax.f32 %v2197, 0.0
  %v2206 = vmax.f32 %v2198, 0.0
  %v2215 = vrot.slane %v2199, 1
  %v2216 = vrot.slane %v2201, 1
  %v2217 = vsel %vm68, %v2215, %v2216
  %v2218 = vrot.slane %v2200, 1
  %v2219 = vrot.slane %v2202, 1
  %v2220 = vsel %vm68, %v2218, %v2219
  %v2221 = vrot.slane %v2203, 1
  %v2222 = vsel %vm68, %v2216, %v2221
  %v2223 = vrot.slane %v2204, 1
  %v2224 = vsel %vm68, %v2219, %v2223
  %v2225 = vrot.slane %v2205, 1
  %v2226 = vsel %vm68, %v2221, %v2225
  %v2227 = vrot.slane %v2206, 1
  %v2228 = vsel %vm68, %v2223, %v2227
  %v2237 = vmax.f32 %v2199, %v2217
  %v2238 = vmax.f32 %v2200, %v2220
  %v2239 = vmax.f32 %v2201, %v2222
  %v2240 = vmax.f32 %v2202, %v2224
  %v2241 = vmax.f32 %v2203, %v2226
  %v2242 = vmax.f32 %v2204, %v2228
  %v2243 = vmax.f32 %v2205, %v2225
  %v2244 = vmax.f32 %v2206, %v2227
  %2253 = vrot.lane.b32.xlu0 %v2237, 122
  %v2254 = vpop.permute.xlu0 %2253
  %2255 = vrot.lane.b32.xlu0 %v2238, 122
  %v2256 = vpop.permute.xlu0 %2255
  %2257 = vrot.lane.b32.xlu0 %v2239, 122
  %v2258 = vpop.permute.xlu0 %2257
  %2259 = vrot.lane.b32.xlu0 %v2240, 122
  %v2260 = vpop.permute.xlu0 %2259
  %2261 = vrot.lane.b32.xlu0 %v2241, 122
  %v2262 = vpop.permute.xlu0 %2261
  %2263 = vrot.lane.b32.xlu0 %v2242, 122
  %v2264 = vpop.permute.xlu0 %2263
  %2265 = vrot.lane.b32.xlu0 %v2243, 122
  %v2266 = vpop.permute.xlu0 %2265
  %2267 = vrot.lane.b32.xlu0 %v2244, 122
  %v2268 = vpop.permute.xlu0 %2267
  %v2269 = vsel %vm566, %v2254, %v2256
  %v2270 = vsel %vm566, %v2258, %v2260
  %v2271 = vsel %vm566, %v2262, %v2264
  %v2272 = vsel %vm566, %v2266, %v2268
  %v2281 = vmax.f32 %v2237, %v2269
  %v2282 = vmax.f32 %v2238, %v2256
  %v2283 = vmax.f32 %v2239, %v2270
  %v2284 = vmax.f32 %v2240, %v2260
  %v2285 = vmax.f32 %v2241, %v2271
  %v2286 = vmax.f32 %v2242, %v2264
  %v2287 = vmax.f32 %v2243, %v2272
  %v2288 = vmax.f32 %v2244, %v2268
  %v2290 = vsel %vm594, %v2287, 0
  %v2293 = vsel %vm594, %v2288, 0
  %2295 = vmatpush.msra.mxu0 0.0
  %2296 = vmatpush.msra.mxu0 0.0
  %2297 = vmatpush.msra.mxu0 0.0
  %2298 = vmatpush.msra.mxu0 0.0
  %2299 = vmatpush.msra.mxu0 0.0
  %2300 = vmatpush.msra.mxu0 0.0
  %2301 = vmatpush.msra.mxu0 0.0
  %2302 = vmatpush.msra.mxu0 0.0
  %2303 = vmatpush.msra.mxu0 0.0
  %2304 = vmatpush.msra.mxu0 0.0
  %2305 = vmatpush.msra.mxu0 0.0
  %2306 = vmatpush.msra.mxu0 0.0
  %2307 = vmatpush.msra.mxu0 %v2290
  %2308 = vmatpush.msra.mxu0 %v2285
  %2309 = vmatpush.msra.mxu0 %v2283
  %2310 = vmatpush.msra.mxu0 %v2281
  %2311 = vmatmul.f32.gmra.mxu0 %v589
  %v2312 = vpop.f32.mrf.mxu0
  %v2313 = vadd.f32 0.0, %v2312
  %2314 = vmatmul.f32.gmra.mxu0 %v592
  %v2315 = vpop.f32.mrf.mxu0
  %v2316 = vadd.f32 0.0, %v2315
  %2317 = vdwg.mxu0
  %2318 = vmatpush.msra.mxu0 0.0
  %2319 = vmatpush.msra.mxu0 0.0
  %2320 = vmatpush.msra.mxu0 0.0
  %2321 = vmatpush.msra.mxu0 0.0
  %2322 = vmatpush.msra.mxu0 0.0
  %2323 = vmatpush.msra.mxu0 0.0
  %2324 = vmatpush.msra.mxu0 0.0
  %2325 = vmatpush.msra.mxu0 0.0
  %2326 = vmatpush.msra.mxu0 0.0
  %2327 = vmatpush.msra.mxu0 0.0
  %2328 = vmatpush.msra.mxu0 0.0
  %2329 = vmatpush.msra.mxu0 0.0
  %2330 = vmatpush.msra.mxu0 %v2293
  %2331 = vmatpush.msra.mxu0 %v2286
  %2332 = vmatpush.msra.mxu0 %v2284
  %2333 = vmatpush.msra.mxu0 %v2282
  %2334 = vmatmul.f32.gmra.mxu0 %v589
  %v2335 = vpop.f32.mrf.mxu0
  %v2336 = vadd.f32 0.0, %v2335
  %2337 = vmatmul.f32.gmra.mxu0 %v592
  %v2338 = vpop.f32.mrf.mxu0
  %v2339 = vadd.f32 0.0, %v2338
  %2340 = vdwg.mxu0
  %v2345 = vrot.slane %v2313, 1
  %v2346 = vrot.slane %v2316, 1
  %v2347 = vsel %vm68, %v2345, %v2346
  %v2348 = vrot.slane %v2336, 1
  %v2349 = vrot.slane %v2339, 1
  %v2350 = vsel %vm68, %v2348, %v2349
  %v2353 = vsel %vm744, %v2350, 0
  %v2355 = vsel %vm744, %v2349, 0
  %2357 = vmatpush.msra.mxu0 %v720
  %2358 = vmatpush.msra.mxu0 %v718
  %2359 = vmatpush.msra.mxu0 %v716
  %2360 = vmatpush.msra.mxu0 %v714
  %2361 = vmatpush.msra.mxu0 %v712
  %2362 = vmatpush.msra.mxu0 %v710
  %2363 = vmatpush.msra.mxu0 %v708
  %2364 = vmatpush.msra.mxu0 %v706
  %2365 = vmatpush.msra.mxu0 %v704
  %2366 = vmatpush.msra.mxu0 %v702
  %2367 = vmatpush.msra.mxu0 %v700
  %2368 = vmatpush.msra.mxu0 %v698
  %2369 = vmatpush.msra.mxu0 %v696
  %2370 = vmatpush.msra.mxu0 %v694
  %2371 = vmatpush.msra.mxu0 %v692
  %2372 = vmatpush.msra.mxu0 %v690
  %2373 = vmatmul.f32.gmra.mxu0 %v2347
  %v2374 = vpop.f32.mrf.mxu0
  %v2375 = vadd.f32 0.0, %v2374
  %2376 = vmatmul.f32.gmra.mxu0 %v2346
  %v2377 = vpop.f32.mrf.mxu0
  %v2378 = vadd.f32 0.0, %v2377
  %2379 = vdwg.mxu0
  %2380 = vmatpush.msra.mxu0 0.0
  %2381 = vmatpush.msra.mxu0 0.0
  %2382 = vmatpush.msra.mxu0 0.0
  %2383 = vmatpush.msra.mxu0 0.0
  %2384 = vmatpush.msra.mxu0 0.0
  %2385 = vmatpush.msra.mxu0 0.0
  %2386 = vmatpush.msra.mxu0 0.0
  %2387 = vmatpush.msra.mxu0 0.0
  %2388 = vmatpush.msra.mxu0 0.0
  %2389 = vmatpush.msra.mxu0 0.0
  %2390 = vmatpush.msra.mxu0 0.0
  %2391 = vmatpush.msra.mxu0 %v751
  %2392 = vmatpush.msra.mxu0 %v728
  %2393 = vmatpush.msra.mxu0 %v726
  %2394 = vmatpush.msra.mxu0 %v724
  %2395 = vmatpush.msra.mxu0 %v722
  %2396 = vmatmul.f32.gmra.mxu0 %v2353
  %v2397 = vpop.f32.mrf.mxu0
  %v2398 = vadd.f32 %v2375, %v2397
  %2399 = vmatmul.f32.gmra.mxu0 %v2355
  %v2400 = vpop.f32.mrf.mxu0
  %v2401 = vadd.f32 %v2378, %v2400
  %2402 = vdwg.mxu0
  %2403 = vmatpush.msra.mxu0 %v721
  %2404 = vmatpush.msra.mxu0 %v719
  %2405 = vmatpush.msra.mxu0 %v717
  %2406 = vmatpush.msra.mxu0 %v715
  %2407 = vmatpush.msra.mxu0 %v713
  %2408 = vmatpush.msra.mxu0 %v711
  %2409 = vmatpush.msra.mxu0 %v709
  %2410 = vmatpush.msra.mxu0 %v707
  %2411 = vmatpush.msra.mxu0 %v705
  %2412 = vmatpush.msra.mxu0 %v703
  %2413 = vmatpush.msra.mxu0 %v701
  %2414 = vmatpush.msra.mxu0 %v699
  %2415 = vmatpush.msra.mxu0 %v697
  %2416 = vmatpush.msra.mxu0 %v695
  %2417 = vmatpush.msra.mxu0 %v693
  %2418 = vmatpush.msra.mxu0 %v691
  %2419 = vmatmul.f32.gmra.mxu0 %v2347
  %v2420 = vpop.f32.mrf.mxu0
  %v2421 = vadd.f32 0.0, %v2420
  %2422 = vmatmul.f32.gmra.mxu0 %v2346
  %v2423 = vpop.f32.mrf.mxu0
  %v2424 = vadd.f32 0.0, %v2423
  %2425 = vdwg.mxu0
  %2426 = vmatpush.msra.mxu0 0.0
  %2427 = vmatpush.msra.mxu0 0.0
  %2428 = vmatpush.msra.mxu0 0.0
  %2429 = vmatpush.msra.mxu0 0.0
  %2430 = vmatpush.msra.mxu0 0.0
  %2431 = vmatpush.msra.mxu0 0.0
  %2432 = vmatpush.msra.mxu0 0.0
  %2433 = vmatpush.msra.mxu0 0.0
  %2434 = vmatpush.msra.mxu0 0.0
  %2435 = vmatpush.msra.mxu0 0.0
  %2436 = vmatpush.msra.mxu0 0.0
  %2437 = vmatpush.msra.mxu0 %v754
  %2438 = vmatpush.msra.mxu0 %v729
  %2439 = vmatpush.msra.mxu0 %v727
  %2440 = vmatpush.msra.mxu0 %v725
  %2441 = vmatpush.msra.mxu0 %v723
  %2442 = vmatmul.f32.gmra.mxu0 %v2353
  %v2443 = vpop.f32.mrf.mxu0
  %v2444 = vadd.f32 %v2421, %v2443
  %2445 = vmatmul.f32.gmra.mxu0 %v2355
  %v2446 = vpop.f32.mrf.mxu0
  %v2447 = vadd.f32 %v2424, %v2446
  %2448 = vdwg.mxu0
  %v2449 = vsel %vm744, %v2336, 0
  %v2451 = vsel %vm744, %v2339, 0
  %2453 = vmatpush.msra.mxu0 %v677
  %2454 = vmatpush.msra.mxu0 %v675
  %2455 = vmatpush.msra.mxu0 %v673
  %2456 = vmatpush.msra.mxu0 %v671
  %2457 = vmatpush.msra.mxu0 %v669
  %2458 = vmatpush.msra.mxu0 %v667
  %2459 = vmatpush.msra.mxu0 %v665
  %2460 = vmatpush.msra.mxu0 %v663
  %2461 = vmatpush.msra.mxu0 %v661
  %2462 = vmatpush.msra.mxu0 %v659
  %2463 = vmatpush.msra.mxu0 %v657
  %2464 = vmatpush.msra.mxu0 %v655
  %2465 = vmatpush.msra.mxu0 %v653
  %2466 = vmatpush.msra.mxu0 %v651
  %2467 = vmatpush.msra.mxu0 %v649
  %2468 = vmatpush.msra.mxu0 %v647
  %2469 = vmatmul.f32.gmra.mxu0 %v2313
  %v2470 = vpop.f32.mrf.mxu0
  %v2471 = vadd.f32 %v2398, %v2470
  %2472 = vmatmul.f32.gmra.mxu0 %v2316
  %v2473 = vpop.f32.mrf.mxu0
  %v2474 = vadd.f32 %v2401, %v2473
  %2475 = vdwg.mxu0
  %2476 = vmatpush.msra.mxu0 0.0
  %2477 = vmatpush.msra.mxu0 0.0
  %2478 = vmatpush.msra.mxu0 0.0
  %2479 = vmatpush.msra.mxu0 0.0
  %2480 = vmatpush.msra.mxu0 0.0
  %2481 = vmatpush.msra.mxu0 0.0
  %2482 = vmatpush.msra.mxu0 0.0
  %2483 = vmatpush.msra.mxu0 0.0
  %2484 = vmatpush.msra.mxu0 0.0
  %2485 = vmatpush.msra.mxu0 0.0
  %2486 = vmatpush.msra.mxu0 0.0
  %2487 = vmatpush.msra.mxu0 %v853
  %2488 = vmatpush.msra.mxu0 %v685
  %2489 = vmatpush.msra.mxu0 %v683
  %2490 = vmatpush.msra.mxu0 %v681
  %2491 = vmatpush.msra.mxu0 %v679
  %2492 = vmatmul.f32.gmra.mxu0 %v2449
  %v2493 = vpop.f32.mrf.mxu0
  %v2494 = vadd.f32 %v2471, %v2493
  %2495 = vmatmul.f32.gmra.mxu0 %v2451
  %v2496 = vpop.f32.mrf.mxu0
  %v2497 = vadd.f32 %v2474, %v2496
  %2498 = vdwg.mxu0
  %2499 = vmatpush.msra.mxu0 %v678
  %2500 = vmatpush.msra.mxu0 %v676
  %2501 = vmatpush.msra.mxu0 %v674
  %2502 = vmatpush.msra.mxu0 %v672
  %2503 = vmatpush.msra.mxu0 %v670
  %2504 = vmatpush.msra.mxu0 %v668
  %2505 = vmatpush.msra.mxu0 %v666
  %2506 = vmatpush.msra.mxu0 %v664
  %2507 = vmatpush.msra.mxu0 %v662
  %2508 = vmatpush.msra.mxu0 %v660
  %2509 = vmatpush.msra.mxu0 %v658
  %2510 = vmatpush.msra.mxu0 %v656
  %2511 = vmatpush.msra.mxu0 %v654
  %2512 = vmatpush.msra.mxu0 %v652
  %2513 = vmatpush.msra.mxu0 %v650
  %2514 = vmatpush.msra.mxu0 %v648
  %2515 = vmatmul.f32.gmra.mxu0 %v2313
  %v2516 = vpop.f32.mrf.mxu0
  %v2517 = vadd.f32 %v2444, %v2516
  %2518 = vmatmul.f32.gmra.mxu0 %v2316
  %v2519 = vpop.f32.mrf.mxu0
  %v2520 = vadd.f32 %v2447, %v2519
  %2521 = vdwg.mxu0
  %2522 = vmatpush.msra.mxu0 0.0
  %2523 = vmatpush.msra.mxu0 0.0
  %2524 = vmatpush.msra.mxu0 0.0
  %2525 = vmatpush.msra.mxu0 0.0
  %2526 = vmatpush.msra.mxu0 0.0
  %2527 = vmatpush.msra.mxu0 0.0
  %2528 = vmatpush.msra.mxu0 0.0
  %2529 = vmatpush.msra.mxu0 0.0
  %2530 = vmatpush.msra.mxu0 0.0
  %2531 = vmatpush.msra.mxu0 0.0
  %2532 = vmatpush.msra.mxu0 0.0
  %2533 = vmatpush.msra.mxu0 %v856
  %2534 = vmatpush.msra.mxu0 %v686
  %2535 = vmatpush.msra.mxu0 %v684
  %2536 = vmatpush.msra.mxu0 %v682
  %2537 = vmatpush.msra.mxu0 %v680
  %2538 = vmatmul.f32.gmra.mxu0 %v2449
  %v2539 = vpop.f32.mrf.mxu0
  %v2540 = vadd.f32 %v2517, %v2539
  %2541 = vmatmul.f32.gmra.mxu0 %v2451
  %v2542 = vpop.f32.mrf.mxu0
  %v2543 = vadd.f32 %v2520, %v2542
  %2544 = vdwg.mxu0
  %v2545 = vrot.slane %v2313, 2
  %v2546 = vrot.slane %v2316, 2
  %v2547 = vsel %vm218, %v2545, %v2546
  %v2548 = vrot.slane %v2336, 2
  %v2549 = vrot.slane %v2339, 2
  %v2550 = vsel %vm218, %v2548, %v2549
  %v2553 = vsel %vm744, %v2550, 0
  %v2555 = vsel %vm744, %v2549, 0
  %2557 = vmatpush.msra.mxu0 %v981
  %2558 = vmatpush.msra.mxu0 %v979
  %2559 = vmatpush.msra.mxu0 %v977
  %2560 = vmatpush.msra.mxu0 %v975
  %2561 = vmatpush.msra.mxu0 %v973
  %2562 = vmatpush.msra.mxu0 %v971
  %2563 = vmatpush.msra.mxu0 %v969
  %2564 = vmatpush.msra.mxu0 %v967
  %2565 = vmatpush.msra.mxu0 %v965
  %2566 = vmatpush.msra.mxu0 %v963
  %2567 = vmatpush.msra.mxu0 %v961
  %2568 = vmatpush.msra.mxu0 %v959
  %2569 = vmatpush.msra.mxu0 %v957
  %2570 = vmatpush.msra.mxu0 %v955
  %2571 = vmatpush.msra.mxu0 %v953
  %2572 = vmatpush.msra.mxu0 %v951
  %2573 = vmatmul.f32.gmra.mxu0 %v2547
  %v2574 = vpop.f32.mrf.mxu0
  %v2575 = vadd.f32 0.0, %v2574
  %2576 = vmatmul.f32.gmra.mxu0 %v2546
  %v2577 = vpop.f32.mrf.mxu0
  %v2578 = vadd.f32 0.0, %v2577
  %2579 = vdwg.mxu0
  %2580 = vmatpush.msra.mxu0 0.0
  %2581 = vmatpush.msra.mxu0 0.0
  %2582 = vmatpush.msra.mxu0 0.0
  %2583 = vmatpush.msra.mxu0 0.0
  %2584 = vmatpush.msra.mxu0 0.0
  %2585 = vmatpush.msra.mxu0 0.0
  %2586 = vmatpush.msra.mxu0 0.0
  %2587 = vmatpush.msra.mxu0 0.0
  %2588 = vmatpush.msra.mxu0 0.0
  %2589 = vmatpush.msra.mxu0 0.0
  %2590 = vmatpush.msra.mxu0 0.0
  %2591 = vmatpush.msra.mxu0 %v1006
  %2592 = vmatpush.msra.mxu0 %v989
  %2593 = vmatpush.msra.mxu0 %v987
  %2594 = vmatpush.msra.mxu0 %v985
  %2595 = vmatpush.msra.mxu0 %v983
  %2596 = vmatmul.f32.gmra.mxu0 %v2553
  %v2597 = vpop.f32.mrf.mxu0
  %v2598 = vadd.f32 %v2575, %v2597
  %2599 = vmatmul.f32.gmra.mxu0 %v2555
  %v2600 = vpop.f32.mrf.mxu0
  %v2601 = vadd.f32 %v2578, %v2600
  %2602 = vdwg.mxu0
  %2603 = vmatpush.msra.mxu0 %v982
  %2604 = vmatpush.msra.mxu0 %v980
  %2605 = vmatpush.msra.mxu0 %v978
  %2606 = vmatpush.msra.mxu0 %v976
  %2607 = vmatpush.msra.mxu0 %v974
  %2608 = vmatpush.msra.mxu0 %v972
  %2609 = vmatpush.msra.mxu0 %v970
  %2610 = vmatpush.msra.mxu0 %v968
  %2611 = vmatpush.msra.mxu0 %v966
  %2612 = vmatpush.msra.mxu0 %v964
  %2613 = vmatpush.msra.mxu0 %v962
  %2614 = vmatpush.msra.mxu0 %v960
  %2615 = vmatpush.msra.mxu0 %v958
  %2616 = vmatpush.msra.mxu0 %v956
  %2617 = vmatpush.msra.mxu0 %v954
  %2618 = vmatpush.msra.mxu0 %v952
  %2619 = vmatmul.f32.gmra.mxu0 %v2547
  %v2620 = vpop.f32.mrf.mxu0
  %v2621 = vadd.f32 0.0, %v2620
  %2622 = vmatmul.f32.gmra.mxu0 %v2546
  %v2623 = vpop.f32.mrf.mxu0
  %v2624 = vadd.f32 0.0, %v2623
  %2625 = vdwg.mxu0
  %2626 = vmatpush.msra.mxu0 0.0
  %2627 = vmatpush.msra.mxu0 0.0
  %2628 = vmatpush.msra.mxu0 0.0
  %2629 = vmatpush.msra.mxu0 0.0
  %2630 = vmatpush.msra.mxu0 0.0
  %2631 = vmatpush.msra.mxu0 0.0
  %2632 = vmatpush.msra.mxu0 0.0
  %2633 = vmatpush.msra.mxu0 0.0
  %2634 = vmatpush.msra.mxu0 0.0
  %2635 = vmatpush.msra.mxu0 0.0
  %2636 = vmatpush.msra.mxu0 0.0
  %2637 = vmatpush.msra.mxu0 %v1009
  %2638 = vmatpush.msra.mxu0 %v990
  %2639 = vmatpush.msra.mxu0 %v988
  %2640 = vmatpush.msra.mxu0 %v986
  %2641 = vmatpush.msra.mxu0 %v984
  %2642 = vmatmul.f32.gmra.mxu0 %v2553
  %v2643 = vpop.f32.mrf.mxu0
  %v2644 = vadd.f32 %v2621, %v2643
  %2645 = vmatmul.f32.gmra.mxu0 %v2555
  %v2646 = vpop.f32.mrf.mxu0
  %v2647 = vadd.f32 %v2624, %v2646
  %2648 = vdwg.mxu0
  %v2649 = vadd.f32 %v2494, %v2598
  %v2650 = vadd.f32 %v2540, %v2644
  %v2651 = vadd.f32 %v2497, %v2601
  %v2652 = vadd.f32 %v2543, %v2647
  %v2653 = vrot.slane %v2313, 3
  %v2654 = vrot.slane %v2316, 3
  %v2655 = vsel %vm309, %v2653, %v2654
  %v2656 = vrot.slane %v2336, 3
  %v2657 = vrot.slane %v2339, 3
  %v2658 = vsel %vm309, %v2656, %v2657
  %v2661 = vsel %vm744, %v2658, 0
  %v2663 = vsel %vm744, %v2657, 0
  %2665 = vmatpush.msra.mxu0 %v1138
  %2666 = vmatpush.msra.mxu0 %v1136
  %2667 = vmatpush.msra.mxu0 %v1134
  %2668 = vmatpush.msra.mxu0 %v1132
  %2669 = vmatpush.msra.mxu0 %v1130
  %2670 = vmatpush.msra.mxu0 %v1128
  %2671 = vmatpush.msra.mxu0 %v1126
  %2672 = vmatpush.msra.mxu0 %v1124
  %2673 = vmatpush.msra.mxu0 %v1122
  %2674 = vmatpush.msra.mxu0 %v1120
  %2675 = vmatpush.msra.mxu0 %v1118
  %2676 = vmatpush.msra.mxu0 %v1116
  %2677 = vmatpush.msra.mxu0 %v1114
  %2678 = vmatpush.msra.mxu0 %v1112
  %2679 = vmatpush.msra.mxu0 %v1110
  %2680 = vmatpush.msra.mxu0 %v1108
  %2681 = vmatmul.f32.gmra.mxu0 %v2655
  %v2682 = vpop.f32.mrf.mxu0
  %v2683 = vadd.f32 0.0, %v2682
  %2684 = vmatmul.f32.gmra.mxu0 %v2654
  %v2685 = vpop.f32.mrf.mxu0
  %v2686 = vadd.f32 0.0, %v2685
  %2687 = vdwg.mxu0
  %2688 = vmatpush.msra.mxu0 0.0
  %2689 = vmatpush.msra.mxu0 0.0
  %2690 = vmatpush.msra.mxu0 0.0
  %2691 = vmatpush.msra.mxu0 0.0
  %2692 = vmatpush.msra.mxu0 0.0
  %2693 = vmatpush.msra.mxu0 0.0
  %2694 = vmatpush.msra.mxu0 0.0
  %2695 = vmatpush.msra.mxu0 0.0
  %2696 = vmatpush.msra.mxu0 0.0
  %2697 = vmatpush.msra.mxu0 0.0
  %2698 = vmatpush.msra.mxu0 0.0
  %2699 = vmatpush.msra.mxu0 %v1163
  %2700 = vmatpush.msra.mxu0 %v1146
  %2701 = vmatpush.msra.mxu0 %v1144
  %2702 = vmatpush.msra.mxu0 %v1142
  %2703 = vmatpush.msra.mxu0 %v1140
  %2704 = vmatmul.f32.gmra.mxu0 %v2661
  %v2705 = vpop.f32.mrf.mxu0
  %v2706 = vadd.f32 %v2683, %v2705
  %2707 = vmatmul.f32.gmra.mxu0 %v2663
  %v2708 = vpop.f32.mrf.mxu0
  %v2709 = vadd.f32 %v2686, %v2708
  %2710 = vdwg.mxu0
  %2711 = vmatpush.msra.mxu0 %v1139
  %2712 = vmatpush.msra.mxu0 %v1137
  %2713 = vmatpush.msra.mxu0 %v1135
  %2714 = vmatpush.msra.mxu0 %v1133
  %2715 = vmatpush.msra.mxu0 %v1131
  %2716 = vmatpush.msra.mxu0 %v1129
  %2717 = vmatpush.msra.mxu0 %v1127
  %2718 = vmatpush.msra.mxu0 %v1125
  %2719 = vmatpush.msra.mxu0 %v1123
  %2720 = vmatpush.msra.mxu0 %v1121
  %2721 = vmatpush.msra.mxu0 %v1119
  %2722 = vmatpush.msra.mxu0 %v1117
  %2723 = vmatpush.msra.mxu0 %v1115
  %2724 = vmatpush.msra.mxu0 %v1113
  %2725 = vmatpush.msra.mxu0 %v1111
  %2726 = vmatpush.msra.mxu0 %v1109
  %2727 = vmatmul.f32.gmra.mxu0 %v2655
  %v2728 = vpop.f32.mrf.mxu0
  %v2729 = vadd.f32 0.0, %v2728
  %2730 = vmatmul.f32.gmra.mxu0 %v2654
  %v2731 = vpop.f32.mrf.mxu0
  %v2732 = vadd.f32 0.0, %v2731
  %2733 = vdwg.mxu0
  %2734 = vmatpush.msra.mxu0 0.0
  %2735 = vmatpush.msra.mxu0 0.0
  %2736 = vmatpush.msra.mxu0 0.0
  %2737 = vmatpush.msra.mxu0 0.0
  %2738 = vmatpush.msra.mxu0 0.0
  %2739 = vmatpush.msra.mxu0 0.0
  %2740 = vmatpush.msra.mxu0 0.0
  %2741 = vmatpush.msra.mxu0 0.0
  %2742 = vmatpush.msra.mxu0 0.0
  %2743 = vmatpush.msra.mxu0 0.0
  %2744 = vmatpush.msra.mxu0 0.0
  %2745 = vmatpush.msra.mxu0 %v1166
  %2746 = vmatpush.msra.mxu0 %v1147
  %2747 = vmatpush.msra.mxu0 %v1145
  %2748 = vmatpush.msra.mxu0 %v1143
  %2749 = vmatpush.msra.mxu0 %v1141
  %2750 = vmatmul.f32.gmra.mxu0 %v2661
  %v2751 = vpop.f32.mrf.mxu0
  %v2752 = vadd.f32 %v2729, %v2751
  %2753 = vmatmul.f32.gmra.mxu0 %v2663
  %v2754 = vpop.f32.mrf.mxu0
  %v2755 = vadd.f32 %v2732, %v2754
  %2756 = vdwg.mxu0
  %v2757 = vadd.f32 %v2649, %v2706
  %v2758 = vadd.f32 %v2650, %v2752
  %v2759 = vadd.f32 %v2651, %v2709
  %v2760 = vadd.f32 %v2652, %v2755
  %v2761 = vrot.slane %v2313, 4
  %v2762 = vrot.slane %v2316, 4
  %v2763 = vsel %vm400, %v2761, %v2762
  %v2764 = vrot.slane %v2336, 4
  %v2765 = vrot.slane %v2339, 4
  %v2766 = vsel %vm400, %v2764, %v2765
  %v2769 = vsel %vm744, %v2766, 0
  %v2771 = vsel %vm744, %v2765, 0
  %2773 = vmatpush.msra.mxu0 %v1295
  %2774 = vmatpush.msra.mxu0 %v1293
  %2775 = vmatpush.msra.mxu0 %v1291
  %2776 = vmatpush.msra.mxu0 %v1289
  %2777 = vmatpush.msra.mxu0 %v1287
  %2778 = vmatpush.msra.mxu0 %v1285
  %2779 = vmatpush.msra.mxu0 %v1283
  %2780 = vmatpush.msra.mxu0 %v1281
  %2781 = vmatpush.msra.mxu0 %v1279
  %2782 = vmatpush.msra.mxu0 %v1277
  %2783 = vmatpush.msra.mxu0 %v1275
  %2784 = vmatpush.msra.mxu0 %v1273
  %2785 = vmatpush.msra.mxu0 %v1271
  %2786 = vmatpush.msra.mxu0 %v1269
  %2787 = vmatpush.msra.mxu0 %v1267
  %2788 = vmatpush.msra.mxu0 %v1265
  %2789 = vmatmul.f32.gmra.mxu0 %v2763
  %v2790 = vpop.f32.mrf.mxu0
  %v2791 = vadd.f32 0.0, %v2790
  %2792 = vmatmul.f32.gmra.mxu0 %v2762
  %v2793 = vpop.f32.mrf.mxu0
  %v2794 = vadd.f32 0.0, %v2793
  %2795 = vdwg.mxu0
  %2796 = vmatpush.msra.mxu0 0.0
  %2797 = vmatpush.msra.mxu0 0.0
  %2798 = vmatpush.msra.mxu0 0.0
  %2799 = vmatpush.msra.mxu0 0.0
  %2800 = vmatpush.msra.mxu0 0.0
  %2801 = vmatpush.msra.mxu0 0.0
  %2802 = vmatpush.msra.mxu0 0.0
  %2803 = vmatpush.msra.mxu0 0.0
  %2804 = vmatpush.msra.mxu0 0.0
  %2805 = vmatpush.msra.mxu0 0.0
  %2806 = vmatpush.msra.mxu0 0.0
  %2807 = vmatpush.msra.mxu0 %v1320
  %2808 = vmatpush.msra.mxu0 %v1303
  %2809 = vmatpush.msra.mxu0 %v1301
  %2810 = vmatpush.msra.mxu0 %v1299
  %2811 = vmatpush.msra.mxu0 %v1297
  %2812 = vmatmul.f32.gmra.mxu0 %v2769
  %v2813 = vpop.f32.mrf.mxu0
  %v2814 = vadd.f32 %v2791, %v2813
  %2815 = vmatmul.f32.gmra.mxu0 %v2771
  %v2816 = vpop.f32.mrf.mxu0
  %v2817 = vadd.f32 %v2794, %v2816
  %2818 = vdwg.mxu0
  %2819 = vmatpush.msra.mxu0 %v1296
  %2820 = vmatpush.msra.mxu0 %v1294
  %2821 = vmatpush.msra.mxu0 %v1292
  %2822 = vmatpush.msra.mxu0 %v1290
  %2823 = vmatpush.msra.mxu0 %v1288
  %2824 = vmatpush.msra.mxu0 %v1286
  %2825 = vmatpush.msra.mxu0 %v1284
  %2826 = vmatpush.msra.mxu0 %v1282
  %2827 = vmatpush.msra.mxu0 %v1280
  %2828 = vmatpush.msra.mxu0 %v1278
  %2829 = vmatpush.msra.mxu0 %v1276
  %2830 = vmatpush.msra.mxu0 %v1274
  %2831 = vmatpush.msra.mxu0 %v1272
  %2832 = vmatpush.msra.mxu0 %v1270
  %2833 = vmatpush.msra.mxu0 %v1268
  %2834 = vmatpush.msra.mxu0 %v1266
  %2835 = vmatmul.f32.gmra.mxu0 %v2763
  %v2836 = vpop.f32.mrf.mxu0
  %v2837 = vadd.f32 0.0, %v2836
  %2838 = vmatmul.f32.gmra.mxu0 %v2762
  %v2839 = vpop.f32.mrf.mxu0
  %v2840 = vadd.f32 0.0, %v2839
  %2841 = vdwg.mxu0
  %2842 = vmatpush.msra.mxu0 0.0
  %2843 = vmatpush.msra.mxu0 0.0
  %2844 = vmatpush.msra.mxu0 0.0
  %2845 = vmatpush.msra.mxu0 0.0
  %2846 = vmatpush.msra.mxu0 0.0
  %2847 = vmatpush.msra.mxu0 0.0
  %2848 = vmatpush.msra.mxu0 0.0
  %2849 = vmatpush.msra.mxu0 0.0
  %2850 = vmatpush.msra.mxu0 0.0
  %2851 = vmatpush.msra.mxu0 0.0
  %2852 = vmatpush.msra.mxu0 0.0
  %2853 = vmatpush.msra.mxu0 %v1323
  %2854 = vmatpush.msra.mxu0 %v1304
  %2855 = vmatpush.msra.mxu0 %v1302
  %2856 = vmatpush.msra.mxu0 %v1300
  %2857 = vmatpush.msra.mxu0 %v1298
  %2858 = vmatmul.f32.gmra.mxu0 %v2769
  %v2859 = vpop.f32.mrf.mxu0
  %v2860 = vadd.f32 %v2837, %v2859
  %2861 = vmatmul.f32.gmra.mxu0 %v2771
  %v2862 = vpop.f32.mrf.mxu0
  %v2863 = vadd.f32 %v2840, %v2862
  %2864 = vdwg.mxu0
  %v2865 = vadd.f32 %v2757, %v2814
  %v2866 = vadd.f32 %v2758, %v2860
  %v2867 = vadd.f32 %v2759, %v2817
  %v2868 = vadd.f32 %v2760, %v2863
  %v2869 = vadd.f32 %v2865, %v1423
  %v2870 = vadd.f32 %v2866, %v1424
  %v2871 = vadd.f32 %v2867, %v1423
  %v2872 = vadd.f32 %v2868, %v1424
  %v2873 = vmax.f32 %v2869, 0.0
  %v2874 = vmax.f32 %v2870, 0.0
  %v2875 = vmax.f32 %v2871, 0.0
  %v2876 = vmax.f32 %v2872, 0.0
  %v2881 = vrot.slane %v2873, 1
  %v2882 = vrot.slane %v2875, 1
  %v2883 = vsel %vm68, %v2881, %v2882
  %v2884 = vrot.slane %v2874, 1
  %v2885 = vrot.slane %v2876, 1
  %v2886 = vsel %vm68, %v2884, %v2885
  %v2891 = vmax.f32 %v2873, %v2883
  %v2892 = vmax.f32 %v2874, %v2886
  %v2893 = vmax.f32 %v2875, %v2882
  %v2894 = vmax.f32 %v2876, %v2885
  %2899 = vrot.lane.b32.xlu0 %v2891, 112
  %v2900 = vpop.permute.xlu0 %2899
  %2901 = vrot.lane.b32.xlu0 %v2892, 112
  %v2902 = vpop.permute.xlu0 %2901
  %2903 = vrot.lane.b32.xlu0 %v2893, 112
  %v2904 = vpop.permute.xlu0 %2903
  %2905 = vrot.lane.b32.xlu0 %v2894, 112
  %v2906 = vpop.permute.xlu0 %2905
  %v2907 = vsel %vm1465, %v2900, %v2902
  %v2908 = vsel %vm1465, %v2904, %v2906
  %v2913 = vmax.f32 %v2891, %v2907
  %v2914 = vmax.f32 %v2892, %v2902
  %v2915 = vmax.f32 %v2893, %v2908
  %v2916 = vmax.f32 %v2894, %v2906
  %v2918 = vsel %vm1495, %v2914, 0
  %2920 = vmatpush.msra.mxu0 %v1492
  %2921 = vmatpush.msra.mxu0 %v1491
  %2922 = vmatpush.msra.mxu0 %v1490
  %2923 = vmatpush.msra.mxu0 %v1489
  %2924 = vmatpush.msra.mxu0 %v1488
  %2925 = vmatpush.msra.mxu0 %v1487
  %2926 = vmatpush.msra.mxu0 %v1486
  %2927 = vmatpush.msra.mxu0 %v1485
  %2928 = vmatpush.msra.mxu0 %v1484
  %2929 = vmatpush.msra.mxu0 %v1483
  %2930 = vmatpush.msra.mxu0 %v1482
  %2931 = vmatpush.msra.mxu0 %v1481
  %2932 = vmatpush.msra.mxu0 %v1480
  %2933 = vmatpush.msra.mxu0 %v1479
  %2934 = vmatpush.msra.mxu0 %v1478
  %2935 = vmatpush.msra.mxu0 %v1477
  %2936 = vmatmul.f32.gmra.mxu0 %v2913
  %v2937 = vpop.f32.mrf.mxu0
  %v2938 = vadd.f32 0.0, %v2937
  %2939 = vdwg.mxu0
  %2940 = vmatpush.msra.mxu0 0.0
  %2941 = vmatpush.msra.mxu0 0.0
  %2942 = vmatpush.msra.mxu0 0.0
  %2943 = vmatpush.msra.mxu0 0.0
  %2944 = vmatpush.msra.mxu0 0.0
  %2945 = vmatpush.msra.mxu0 0.0
  %2946 = vmatpush.msra.mxu0 0.0
  %2947 = vmatpush.msra.mxu0 0.0
  %2948 = vmatpush.msra.mxu0 0.0
  %2949 = vmatpush.msra.mxu0 0.0
  %2950 = vmatpush.msra.mxu0 0.0
  %2951 = vmatpush.msra.mxu0 0.0
  %2952 = vmatpush.msra.mxu0 0.0
  %2953 = vmatpush.msra.mxu0 0.0
  %2954 = vmatpush.msra.mxu0 %v1494
  %2955 = vmatpush.msra.mxu0 %v1493
  %2956 = vmatmul.f32.gmra.mxu0 %v2918
  %v2957 = vpop.f32.mrf.mxu0
  %v2958 = vadd.f32 %v2938, %v2957
  %2959 = vdwg.mxu0
  %v2960 = vadd.f32 %v1476, %v2958
  %v2962 = vrot.slane %v2913, 2
  %v2963 = vrot.slane %v2914, 2
  %v2965 = vsel %vm1495, %v2963, 0
  %2967 = vmatpush.msra.mxu0 %v1556
  %2968 = vmatpush.msra.mxu0 %v1555
  %2969 = vmatpush.msra.mxu0 %v1554
  %2970 = vmatpush.msra.mxu0 %v1553
  %2971 = vmatpush.msra.mxu0 %v1552
  %2972 = vmatpush.msra.mxu0 %v1551
  %2973 = vmatpush.msra.mxu0 %v1550
  %2974 = vmatpush.msra.mxu0 %v1549
  %2975 = vmatpush.msra.mxu0 %v1548
  %2976 = vmatpush.msra.mxu0 %v1547
  %2977 = vmatpush.msra.mxu0 %v1546
  %2978 = vmatpush.msra.mxu0 %v1545
  %2979 = vmatpush.msra.mxu0 %v1544
  %2980 = vmatpush.msra.mxu0 %v1543
  %2981 = vmatpush.msra.mxu0 %v1542
  %2982 = vmatpush.msra.mxu0 %v1541
  %2983 = vmatmul.f32.gmra.mxu0 %v2962
  %v2984 = vpop.f32.mrf.mxu0
  %v2985 = vadd.f32 0.0, %v2984
  %2986 = vdwg.mxu0
  %2987 = vmatpush.msra.mxu0 0.0
  %2988 = vmatpush.msra.mxu0 0.0
  %2989 = vmatpush.msra.mxu0 0.0
  %2990 = vmatpush.msra.mxu0 0.0
  %2991 = vmatpush.msra.mxu0 0.0
  %2992 = vmatpush.msra.mxu0 0.0
  %2993 = vmatpush.msra.mxu0 0.0
  %2994 = vmatpush.msra.mxu0 0.0
  %2995 = vmatpush.msra.mxu0 0.0
  %2996 = vmatpush.msra.mxu0 0.0
  %2997 = vmatpush.msra.mxu0 0.0
  %2998 = vmatpush.msra.mxu0 0.0
  %2999 = vmatpush.msra.mxu0 0.0
  %3000 = vmatpush.msra.mxu0 0.0
  %3001 = vmatpush.msra.mxu0 %v1558
  %3002 = vmatpush.msra.mxu0 %v1557
  %3003 = vmatmul.f32.gmra.mxu0 %v2965
  %v3004 = vpop.f32.mrf.mxu0
  %v3005 = vadd.f32 %v2985, %v3004
  %3006 = vdwg.mxu0
  %v3007 = vadd.f32 %v2960, %v3005
  %v3008 = vrot.slane %v2913, 4
  %v3009 = vrot.slane %v2914, 4
  %v3011 = vsel %vm1495, %v3009, 0
  %3013 = vmatpush.msra.mxu0 %v1622
  %3014 = vmatpush.msra.mxu0 %v1621
  %3015 = vmatpush.msra.mxu0 %v1620
  %3016 = vmatpush.msra.mxu0 %v1619
  %3017 = vmatpush.msra.mxu0 %v1618
  %3018 = vmatpush.msra.mxu0 %v1617
  %3019 = vmatpush.msra.mxu0 %v1616
  %3020 = vmatpush.msra.mxu0 %v1615
  %3021 = vmatpush.msra.mxu0 %v1614
  %3022 = vmatpush.msra.mxu0 %v1613
  %3023 = vmatpush.msra.mxu0 %v1612
  %3024 = vmatpush.msra.mxu0 %v1611
  %3025 = vmatpush.msra.mxu0 %v1610
  %3026 = vmatpush.msra.mxu0 %v1609
  %3027 = vmatpush.msra.mxu0 %v1608
  %3028 = vmatpush.msra.mxu0 %v1607
  %3029 = vmatmul.f32.gmra.mxu0 %v3008
  %v3030 = vpop.f32.mrf.mxu0
  %v3031 = vadd.f32 0.0, %v3030
  %3032 = vdwg.mxu0
  %3033 = vmatpush.msra.mxu0 0.0
  %3034 = vmatpush.msra.mxu0 0.0
  %3035 = vmatpush.msra.mxu0 0.0
  %3036 = vmatpush.msra.mxu0 0.0
  %3037 = vmatpush.msra.mxu0 0.0
  %3038 = vmatpush.msra.mxu0 0.0
  %3039 = vmatpush.msra.mxu0 0.0
  %3040 = vmatpush.msra.mxu0 0.0
  %3041 = vmatpush.msra.mxu0 0.0
  %3042 = vmatpush.msra.mxu0 0.0
  %3043 = vmatpush.msra.mxu0 0.0
  %3044 = vmatpush.msra.mxu0 0.0
  %3045 = vmatpush.msra.mxu0 0.0
  %3046 = vmatpush.msra.mxu0 0.0
  %3047 = vmatpush.msra.mxu0 %v1624
  %3048 = vmatpush.msra.mxu0 %v1623
  %3049 = vmatmul.f32.gmra.mxu0 %v3011
  %v3050 = vpop.f32.mrf.mxu0
  %v3051 = vadd.f32 %v3031, %v3050
  %3052 = vdwg.mxu0
  %v3053 = vadd.f32 %v3007, %v3051
  %v3054 = vrot.slane %v2913, 6
  %v3055 = vrot.slane %v2914, 6
  %v3057 = vsel %vm1495, %v3055, 0
  %3059 = vmatpush.msra.mxu0 %v1687
  %3060 = vmatpush.msra.mxu0 %v1686
  %3061 = vmatpush.msra.mxu0 %v1685
  %3062 = vmatpush.msra.mxu0 %v1684
  %3063 = vmatpush.msra.mxu0 %v1683
  %3064 = vmatpush.msra.mxu0 %v1682
  %3065 = vmatpush.msra.mxu0 %v1681
  %3066 = vmatpush.msra.mxu0 %v1680
  %3067 = vmatpush.msra.mxu0 %v1679
  %3068 = vmatpush.msra.mxu0 %v1678
  %3069 = vmatpush.msra.mxu0 %v1677
  %3070 = vmatpush.msra.mxu0 %v1676
  %3071 = vmatpush.msra.mxu0 %v1675
  %3072 = vmatpush.msra.mxu0 %v1674
  %3073 = vmatpush.msra.mxu0 %v1673
  %3074 = vmatpush.msra.mxu0 %v1672
  %3075 = vmatmul.f32.gmra.mxu0 %v3054
  %v3076 = vpop.f32.mrf.mxu0
  %v3077 = vadd.f32 0.0, %v3076
  %3078 = vdwg.mxu0
  %3079 = vmatpush.msra.mxu0 0.0
  %3080 = vmatpush.msra.mxu0 0.0
  %3081 = vmatpush.msra.mxu0 0.0
  %3082 = vmatpush.msra.mxu0 0.0
  %3083 = vmatpush.msra.mxu0 0.0
  %3084 = vmatpush.msra.mxu0 0.0
  %3085 = vmatpush.msra.mxu0 0.0
  %3086 = vmatpush.msra.mxu0 0.0
  %3087 = vmatpush.msra.mxu0 0.0
  %3088 = vmatpush.msra.mxu0 0.0
  %3089 = vmatpush.msra.mxu0 0.0
  %3090 = vmatpush.msra.mxu0 0.0
  %3091 = vmatpush.msra.mxu0 0.0
  %3092 = vmatpush.msra.mxu0 0.0
  %3093 = vmatpush.msra.mxu0 %v1689
  %3094 = vmatpush.msra.mxu0 %v1688
  %3095 = vmatmul.f32.gmra.mxu0 %v3057
  %v3096 = vpop.f32.mrf.mxu0
  %v3097 = vadd.f32 %v3077, %v3096
  %3098 = vdwg.mxu0
  %v3099 = vadd.f32 %v3053, %v3097
  %v3101 = vsel %vm1495, %v2916, 0
  %3103 = vmatpush.msra.mxu0 %v1752
  %3104 = vmatpush.msra.mxu0 %v1751
  %3105 = vmatpush.msra.mxu0 %v1750
  %3106 = vmatpush.msra.mxu0 %v1749
  %3107 = vmatpush.msra.mxu0 %v1748
  %3108 = vmatpush.msra.mxu0 %v1747
  %3109 = vmatpush.msra.mxu0 %v1746
  %3110 = vmatpush.msra.mxu0 %v1745
  %3111 = vmatpush.msra.mxu0 %v1744
  %3112 = vmatpush.msra.mxu0 %v1743
  %3113 = vmatpush.msra.mxu0 %v1742
  %3114 = vmatpush.msra.mxu0 %v1741
  %3115 = vmatpush.msra.mxu0 %v1740
  %3116 = vmatpush.msra.mxu0 %v1739
  %3117 = vmatpush.msra.mxu0 %v1738
  %3118 = vmatpush.msra.mxu0 %v1737
  %3119 = vmatmul.f32.gmra.mxu0 %v2915
  %v3120 = vpop.f32.mrf.mxu0
  %v3121 = vadd.f32 0.0, %v3120
  %3122 = vdwg.mxu0
  %3123 = vmatpush.msra.mxu0 0.0
  %3124 = vmatpush.msra.mxu0 0.0
  %3125 = vmatpush.msra.mxu0 0.0
  %3126 = vmatpush.msra.mxu0 0.0
  %3127 = vmatpush.msra.mxu0 0.0
  %3128 = vmatpush.msra.mxu0 0.0
  %3129 = vmatpush.msra.mxu0 0.0
  %3130 = vmatpush.msra.mxu0 0.0
  %3131 = vmatpush.msra.mxu0 0.0
  %3132 = vmatpush.msra.mxu0 0.0
  %3133 = vmatpush.msra.mxu0 0.0
  %3134 = vmatpush.msra.mxu0 0.0
  %3135 = vmatpush.msra.mxu0 0.0
  %3136 = vmatpush.msra.mxu0 0.0
  %3137 = vmatpush.msra.mxu0 %v1754
  %3138 = vmatpush.msra.mxu0 %v1753
  %3139 = vmatmul.f32.gmra.mxu0 %v3101
  %v3140 = vpop.f32.mrf.mxu0
  %v3141 = vadd.f32 %v3121, %v3140
  %3142 = vdwg.mxu0
  %v3143 = vadd.f32 %v3099, %v3141
  %v3144 = vmax.f32 %v3143, 0.0
  %v3145 = vlaneseq
  %v3146 = vshrl.u32 %v3145, 7
  %vm3147 = vcmp.eq.s32.totalorder %v3146, 0
  %v3149 = vperm.slane %v1799, 0
  %v3151 = vsel %vm3147, %v3149, 0.0
  %vm3152 = vcmp.eq.s32.totalorder %v3146, 1
  %v3154 = vperm.slane %v3144, 0
  %v3156 = vsel %vm3152, %v3154, %v3151
  %v3157 = vld [vmem:[%s8] sm:$0xff]
  %v3158 = vld [vmem:[%s8 + $0x8] sm:$0xff]
  %v3159 = vld [vmem:[%s8 + $0x10] sm:$0xff]
  %v3160 = vld [vmem:[%s8 + $0x18] sm:$0xff]
  %v3161 = vld [vmem:[%s8 + $0x20] sm:$0xff]
  %v3162 = vld [vmem:[%s8 + $0x28] sm:$0xff]
  %v3163 = vld [vmem:[%s8 + $0x30] sm:$0xff]
  %v3164 = vld [vmem:[%s8 + $0x38] sm:$0xff]
  %v3165 = vld [vmem:[%s8 + $0x40] sm:$0xff]
  %v3166 = vld [vmem:[%s8 + $0x48] sm:$0xff]
  %v3167 = vld [vmem:[%s8 + $0x50] sm:$0xff]
  %v3168 = vld [vmem:[%s8 + $0x58] sm:$0xff]
  %v3169 = vld [vmem:[%s8 + $0x60] sm:$0xff]
  %v3170 = vld [vmem:[%s8 + $0x68] sm:$0xff]
  %v3171 = vld [vmem:[%s8 + $0x70] sm:$0xff]
  %v3172 = vld [vmem:[%s8 + $0x78] sm:$0xff]
  %v3173 = vld [vmem:[%s9] sm:$0x1]
  %v3175 = vperm.slane %v3173, 0
  %3177 = vmatpush.msra.mxu0 %v3172
  %3178 = vmatpush.msra.mxu0 %v3171
  %3179 = vmatpush.msra.mxu0 %v3170
  %3180 = vmatpush.msra.mxu0 %v3169
  %3181 = vmatpush.msra.mxu0 %v3168
  %3182 = vmatpush.msra.mxu0 %v3167
  %3183 = vmatpush.msra.mxu0 %v3166
  %3184 = vmatpush.msra.mxu0 %v3165
  %3185 = vmatpush.msra.mxu0 %v3164
  %3186 = vmatpush.msra.mxu0 %v3163
  %3187 = vmatpush.msra.mxu0 %v3162
  %3188 = vmatpush.msra.mxu0 %v3161
  %3189 = vmatpush.msra.mxu0 %v3160
  %3190 = vmatpush.msra.mxu0 %v3159
  %3191 = vmatpush.msra.mxu0 %v3158
  %3192 = vmatpush.msra.mxu0 %v3157
  %3193 = vmatmul.f32.gmra.mxu0 %v3156
  %v3194 = vpop.f32.mrf.mxu0
  %v3195 = vadd.f32 %v3175, %v3194
  %3196 = vdwg.mxu0
  %v3197 = vmax.f32 %v3195, 0.0
  %v3198 = vld [vmem:[%s10] sm:$0xff]
  %v3199 = vld [vmem:[%s10 + $0x8] sm:$0xff]
  %v3200 = vld [vmem:[%s10 + $0x10] sm:$0xff]
  %v3201 = vld [vmem:[%s10 + $0x18] sm:$0xff]
  %v3202 = vld [vmem:[%s10 + $0x20] sm:$0xff]
  %v3203 = vld [vmem:[%s10 + $0x28] sm:$0xff]
  %v3204 = vld [vmem:[%s10 + $0x30] sm:$0xff]
  %v3205 = vld [vmem:[%s10 + $0x38] sm:$0xff]
  %v3206 = vld [vmem:[%s10 + $0x40] sm:$0xff]
  %v3207 = vld [vmem:[%s10 + $0x48] sm:$0xff]
  %v3208 = vld [vmem:[%s10 + $0x50] sm:$0xff]
  %v3209 = vld [vmem:[%s10 + $0x58] sm:$0xff]
  %v3210 = vld [vmem:[%s10 + $0x60] sm:$0xff]
  %v3211 = vld [vmem:[%s10 + $0x68] sm:$0xff]
  %v3212 = vld [vmem:[%s10 + $0x70] sm:$0xff]
  %v3213 = vld [vmem:[%s10 + $0x78] sm:$0xff]
  %v3214 = vld [vmem:[%s11] sm:$0x1]
  %v3216 = vperm.slane %v3214, 0
  %3218 = vmatpush.msra.mxu0 %v3213
  %3219 = vmatpush.msra.mxu0 %v3212
  %3220 = vmatpush.msra.mxu0 %v3211
  %3221 = vmatpush.msra.mxu0 %v3210
  %3222 = vmatpush.msra.mxu0 %v3209
  %3223 = vmatpush.msra.mxu0 %v3208
  %3224 = vmatpush.msra.mxu0 %v3207
  %3225 = vmatpush.msra.mxu0 %v3206
  %3226 = vmatpush.msra.mxu0 %v3205
  %3227 = vmatpush.msra.mxu0 %v3204
  %3228 = vmatpush.msra.mxu0 %v3203
  %3229 = vmatpush.msra.mxu0 %v3202
  %3230 = vmatpush.msra.mxu0 %v3201
  %3231 = vmatpush.msra.mxu0 %v3200
  %3232 = vmatpush.msra.mxu0 %v3199
  %3233 = vmatpush.msra.mxu0 %v3198
  %3234 = vmatmul.f32.gmra.mxu0 %v3197
  %v3235 = vpop.f32.mrf.mxu0
  %v3236 = vadd.f32 %v3216, %v3235
  %3237 = vdwg.mxu0
  %3238 = vst [vmem:[%s12] sm:$0xff] %v3236
  // Predicated region
  $region50: #{net_forward.1} parent=0 // pred_check
    _
  $region51: #{net_forward.1} parent=0 // pred_check_branch
    %3240 = sbr.rel (0) target = $region53
  $region52: #{net_forward.1} parent=0 // pred_region
    _
  $region53: #{net_forward.1} parent=0 // pred_fallthru
    _
  // Predicated region
  $region54: #{net_forward.1} parent=0 // pred_check
    _
  $region55: #{net_forward.1} parent=0 // pred_check_branch
    %3242 = sbr.rel (0) target = $region57
  $region56: #{net_forward.1} parent=0 // pred_region
    _
  $region57: #{net_forward.1} parent=0 // pred_fallthru
    _

</llo_original>
